<compile_context>
chip_gen: v6e
topology: v6e:2x2x1
jax: 0.10.0
libtpu: 0.0.40
codegen_flags: <defaults>
</compile_context>

<pallas_src>
import math
from functools import partial

import jax
import jax.numpy as jnp
from jax import lax
from jax.experimental import pallas as pl
from jax.experimental.pallas import tpu as pltpu


# -----------------------------------------------------------------------------
# Fused kernel
# -----------------------------------------------------------------------------
def _fused_mha_lstm_kernel(
    x1_ref,       # (B*G, E)            f32 VMEM  h_node_in flattened
    in2_ref,      # (Hp*B*G, G)         f32 VMEM  pos_compatibility, (head,batch,row)-major
    in3_ref,      # (Hp*B*G, G)         f32 VMEM  best_pos_compatibility
    wqkv_ref,     # (E, (2*Hh+Hv)*Kd)   f32 VMEM  [Wq | Wk | Wv] packed, lane-dense
    wout_ref,     # (Hv*Kd, E)          f32 VMEM  W_out.view(-1, E)
    wih_ref,      # (nh+2, 4*nh)        f32 VMEM  LSTM W_ih^T
    whh_ref,      # (nh,   4*nh)        f32 VMEM  LSTM W_hh^T
    bias_ref,     # (1, 4*nh)           f32 VMEM  b_ih + b_hh
    h0_ref,       # (B, nh)             f32 VMEM
    c0_ref,       # (B, nh)             f32 VMEM
    rew_ref,      # (B,)                f32 SMEM  cost
    brew_ref,     # (B,)                f32 SMEM  best_cost
    out_ref,      # (B, G, E)           f32 VMEM
    ht_ref,       # (B, nh)             f32 VMEM
    ct_ref,       # (B, nh)             f32 VMEM
    compat_ref,   # (G*G, G)            f32 VMEM scratch: cat(node,pos,best) flattened
    hseq_ref,     # (G*G, G)            f32 VMEM scratch: LSTM hidden sequence flattened
    *gx_refs,     # B x (G*G, 4*nh)     f32 VMEM scratch: hoisted x@W_ih gates per slot
    n_heads, n_qk, n_pos, kdim, gsz, bsz, edim, norm, unroll):
  H = n_heads
  S = gsz * gsz

  # ---- 1. fused Q|K|V projection: one lane-dense MXU pass --------------------
  proj = jnp.dot(x1_ref[...], wqkv_ref[...], preferred_element_type=jnp.float32)
  # column blocks: Q_h -> [h*Kd,(h+1)*Kd), K_h -> [(n_qk+h)*Kd,..), V_h -> [(2*n_qk+h)*Kd,..)

  # ---- 2. node compatibility, written straight into the flattened
  #         (head, batch, row)-major layout that the torch raw-reshape implies ---
  for h in range(n_qk):
    for bb in range(bsz):
      q = proj[bb * gsz:(bb + 1) * gsz, h * kdim:(h + 1) * kdim]
      k = proj[bb * gsz:(bb + 1) * gsz, (n_qk + h) * kdim:(n_qk + h + 1) * kdim]
      r0 = (h * bsz + bb) * gsz
      compat_ref[r0:r0 + gsz, :] = norm * lax.dot_general(
          q, k, (((1,), (1,)), ((), ())), preferred_element_type=jnp.float32)

  # ---- 3. pos / best_pos compatibilities (already (head,batch,row)-major) ----
  r_pos = n_qk * bsz * gsz
  r_best = (n_qk + n_pos) * bsz * gsz
  compat_ref[r_pos:r_best, :] = in2_ref[...]
  compat_ref[r_best:(n_qk + 2 * n_pos) * bsz * gsz, :] = in3_ref[...]

  # ---- 4. hoisted LSTM input path: gates_x = x_seq @ W_ih^T + b, one matmul
  #         per LSTM batch slot (cost / best_cost enter as SMEM scalars) --------
  comp = compat_ref[...]                                   # (S, B*nh)
  wih = wih_ref[...]                                       # (nh+2, 4*nh)
  bias = bias_ref[...]                                     # (1, 4*nh)
  for bb in range(bsz):
    const = (rew_ref[bb] * wih[H:H + 1, :]
             + brew_ref[bb] * wih[H + 1:H + 2, :] + bias)  # (1, 4H)
    gx_refs[bb][...] = jnp.dot(
        comp[:, bb * H:(bb + 1) * H], wih[0:H, :],
        preferred_element_type=jnp.float32) + const        # (S, 4H)

  # ---- 5. LSTM recurrence: h-path only, VPU FMAs, tanh-based sigmoid,
  #         unrolled x `unroll` inside an outer fori_loop ----------------------
  whh = whh_ref[...]                                       # (H, 4H)
  whh_rows = [whh[k:k + 1, :] for k in range(H)]

  def lstm_chunk(ci, carry):
    hs = list(carry[:bsz])
    cs = list(carry[bsz:])
    for u in range(unroll):
      s = ci * unroll + u
      for bb in range(bsz):                                # independent chains per slot
        gates = gx_refs[bb][pl.ds(s, 1), :]                # (1, 4H)
        h_prev = hs[bb]
        for kk in range(H):                                # h @ W_hh^T as broadcast FMAs
          gates = gates + h_prev[:, kk:kk + 1] * whh_rows[kk]
        sig = 0.5 * jnp.tanh(0.5 * gates) + 0.5            # sigmoid of i|f|g|o in one pass
        g_gate = jnp.tanh(gates[:, 2 * H:3 * H])
        c_new = sig[:, H:2 * H] * cs[bb] + sig[:, 0:H] * g_gate
        h_new = sig[:, 3 * H:4 * H] * jnp.tanh(c_new)
        hseq_ref[pl.ds(s, 1), bb * H:(bb + 1) * H] = h_new
        hs[bb] = h_new
        cs[bb] = c_new
    return tuple(hs) + tuple(cs)

  init = (tuple(h0_ref[bb:bb + 1, :] for bb in range(bsz))
          + tuple(c0_ref[bb:bb + 1, :] for bb in range(bsz)))
  fin = lax.fori_loop(0, S // unroll, lstm_chunk, init)
  for bb in range(bsz):
    ht_ref[bb:bb + 1, :] = fin[bb]
    ct_ref[bb:bb + 1, :] = fin[bsz + bb]

  # ---- 6. softmax attention + output projection + residual + 'layer' norm ----
  wout = wout_ref[...]                                     # (Hv*Kd, E)
  v_col0 = 2 * n_qk * kdim
  n_elem = gsz * edim
  for bb in range(bsz):
    acc = jnp.zeros((gsz, edim), jnp.float32)
    for h2 in range(n_heads):
      r0 = (h2 * bsz + bb) * gsz
      sc = hseq_ref[r0:r0 + gsz, :]                        # (G, G) score block
      m = jnp.max(sc, axis=-1, keepdims=True)
      ex = jnp.exp(sc - m)
      p = ex / jnp.sum(ex, axis=-1, keepdims=True)
      v = proj[bb * gsz:(bb + 1) * gsz,
               v_col0 + h2 * kdim:v_col0 + (h2 + 1) * kdim]
      head = jnp.dot(p, v, preferred_element_type=jnp.float32)           # (G, Kd)
      acc = acc + jnp.dot(head, wout[h2 * kdim:(h2 + 1) * kdim, :],
                          preferred_element_type=jnp.float32)            # (G, E)
    y = acc + x1_ref[bb * gsz:(bb + 1) * gsz, :]           # residual
    mean = jnp.mean(y)
    var = jnp.sum((y - mean) ** 2) / (n_elem - 1)          # unbiased, like torch.var
    out_ref[bb] = (y - mean) * lax.rsqrt(var + 1e-5)


# -----------------------------------------------------------------------------
# Wrapper
# -----------------------------------------------------------------------------
def mha_lstm_sublayer_forward(params, input1, input2, input3, rew, best_rew, h_x, c_x):
  """Forward of MultiHeadAttentionsubLayer_LSTM (mask=None). Returns (out, h_t, c_t)."""
  B, G, E = input1.shape
  nh = h_x.shape[-1]
  hh = nh // 2
  hp = input2.shape[0]
  kd = E // hh
  if hh + 2 * hp != nh:
    raise ValueError("need n_heads//2 + 2*Hp == n_heads")
  if hh * kd != E:
    raise ValueError("embed_dim must be divisible by n_heads//2")
  if G != B * nh:
    # TODO(synk): general shapes need the torch raw reshape as XLA glue between kernels.
    raise ValueError("fused kernel requires graph_size == batch_size * n_heads")
  S = G * G
  unroll = next(u for u in (8, 4, 2, 1) if S % u == 0)
  norm = 1.0 / math.sqrt(kd)

  x1 = input1.reshape(B * G, E)                 # contiguous views, no data movement
  in2 = input2.reshape(hp * B * G, G)
  in3 = input3.reshape(hp * B * G, G)

  vmem = lambda: pl.BlockSpec(memory_space=pltpu.MemorySpace.VMEM)
  smem = lambda: pl.BlockSpec(memory_space=pltpu.MemorySpace.SMEM)

  kernel = partial(_fused_mha_lstm_kernel,
                   n_heads=nh, n_qk=hh, n_pos=hp, kdim=kd,
                   gsz=G, bsz=B, edim=E, norm=norm, unroll=unroll)

  out, h_t, c_t = pl.pallas_call(
      kernel,
      out_shape=(jax.ShapeDtypeStruct((B, G, E), jnp.float32),
                 jax.ShapeDtypeStruct((B, nh), jnp.float32),
                 jax.ShapeDtypeStruct((B, nh), jnp.float32)),
      in_specs=[vmem()] * 10 + [smem(), smem()],
      out_specs=(vmem(), vmem(), vmem()),
      scratch_shapes=([pltpu.VMEM((S, G), jnp.float32),        # compat, (head,batch,row)-major
                       pltpu.VMEM((S, G), jnp.float32)]        # LSTM hidden sequence
                      + [pltpu.VMEM((S, 4 * nh), jnp.float32)  # hoisted x@W_ih gates per slot
                         for _ in range(B)]),
  )(x1, in2, in3,
    params['w_qkv'], params['w_out_flat'],
    params['lstm_wih_t'], params['lstm_whh_t'], params['lstm_b'],
    h_x[0], c_x[0], rew, best_rew)
  return out, h_t[None], c_t[None]


# -----------------------------------------------------------------------------
# Parameter init (same shapes / per-parameter stdv = 1/sqrt(size(-1)) as the module)
# -----------------------------------------------------------------------------
def init_params(key, n_heads, embed_dim):
  hh = n_heads // 2
  hv = n_heads
  kd = embed_dim // hh
  lstm_in = n_heads + 2
  lstm_h = n_heads
  ks = jax.random.split(key, 8)

  def u(k, shape, stdv):
    return jax.random.uniform(k, shape, jnp.float32, -stdv, stdv)

  wq = u(ks[0], (hh, embed_dim, kd), 1.0 / math.sqrt(kd))
  wk = u(ks[1], (hh, embed_dim, kd), 1.0 / math.sqrt(kd))
  wv = u(ks[2], (hv, embed_dim, kd), 1.0 / math.sqrt(kd))
  wout = u(ks[3], (hv, kd, embed_dim), 1.0 / math.sqrt(embed_dim))
  # LSTM params as re-initialised by the module's init_parameters(): stdv = 1/sqrt(size(-1))
  wih = u(ks[4], (4 * lstm_h, lstm_in), 1.0 / math.sqrt(lstm_in))     # weight_ih_l0
  whh = u(ks[5], (4 * lstm_h, lstm_h), 1.0 / math.sqrt(lstm_h))       # weight_hh_l0
  b_ih = u(ks[6], (4 * lstm_h,), 1.0 / math.sqrt(4 * lstm_h))
  b_hh = u(ks[7], (4 * lstm_h,), 1.0 / math.sqrt(4 * lstm_h))

  # pre-pack weights once (perf review): lane-dense [Wq | Wk | Wv] and flat W_out
  w_qkv = jnp.concatenate(
      [jnp.moveaxis(wq, 0, 1).reshape(embed_dim, hh * kd),
       jnp.moveaxis(wk, 0, 1).reshape(embed_dim, hh * kd),
       jnp.moveaxis(wv, 0, 1).reshape(embed_dim, hv * kd)], axis=1)    # (E, (2*hh+hv)*kd)
  return dict(
      w_qkv=w_qkv,
      w_out_flat=wout.reshape(hv * kd, embed_dim),                     # == W_out.view(-1, E)
      lstm_wih_t=jnp.transpose(wih),                                   # (I, 4H)
      lstm_whh_t=jnp.transpose(whh),                                   # (H, 4H)
      lstm_b=(b_ih + b_hh)[None, :],                                   # (1, 4H)
  )


# -----------------------------------------------------------------------------
if __name__ == "__main__":
  n_heads = 4
  embed_dim = 32
  B, G = 2, 8                       # note: G == B * n_heads (see TODO above)
  Hp = n_heads // 4                 # heads in pos / best_pos compatibility

  root = jax.random.PRNGKey(0)
  kp, k1, k2, k3, k4, k5, k6, k7 = jax.random.split(root, 8)

  params = init_params(kp, n_heads, embed_dim)
  input1 = jax.random.normal(k1, (B, G, embed_dim), jnp.float32)
  input2 = jax.random.normal(k2, (Hp, B, G, G), jnp.float32)
  input3 = jax.random.normal(k3, (Hp, B, G, G), jnp.float32)
  rew = jax.random.normal(k4, (B,), jnp.float32)
  best_rew = jax.random.normal(k5, (B,), jnp.float32)
  h_x = jax.random.normal(k6, (1, B, n_heads), jnp.float32)
  c_x = jax.random.normal(k7, (1, B, n_heads), jnp.float32)

  fwd = jax.jit(mha_lstm_sublayer_forward)
  out, h_t, c_t = fwd(params, input1, input2, input3, rew, best_rew, h_x, c_x)
  jax.block_until_ready((out, h_t, c_t))
  print("KERNEL_OK")
</pallas_src>

<mosaic_0001>
module attributes {stable_mosaic.version = 11 : i64} {
  func.func @_fused_mha_lstm_kernel(%arg0: memref<16x32xf32, #tpu.memory_space<vmem>>, %arg1: memref<16x8xf32, #tpu.memory_space<vmem>>, %arg2: memref<16x8xf32, #tpu.memory_space<vmem>>, %arg3: memref<32x128xf32, #tpu.memory_space<vmem>>, %arg4: memref<64x32xf32, #tpu.memory_space<vmem>>, %arg5: memref<6x16xf32, #tpu.memory_space<vmem>>, %arg6: memref<4x16xf32, #tpu.memory_space<vmem>>, %arg7: memref<1x16xf32, #tpu.memory_space<vmem>>, %arg8: memref<2x4xf32, #tpu.memory_space<vmem>>, %arg9: memref<2x4xf32, #tpu.memory_space<vmem>>, %arg10: memref<2xf32, #tpu.memory_space<smem>>, %arg11: memref<2xf32, #tpu.memory_space<smem>>, %arg12: memref<2x8x32xf32, #tpu.memory_space<vmem>>, %arg13: memref<2x4xf32, #tpu.memory_space<vmem>>, %arg14: memref<2x4xf32, #tpu.memory_space<vmem>>, %arg15: memref<64x8xf32, #tpu.memory_space<vmem>>, %arg16: memref<64x8xf32, #tpu.memory_space<vmem>>, %arg17: memref<64x16xf32, #tpu.memory_space<vmem>>, %arg18: memref<64x16xf32, #tpu.memory_space<vmem>>) attributes {dimension_semantics = [], scalar_prefetch = 0 : i64, scratch_operands = 4 : i64, tpu.core_type = #tpu.core_type<tc>} {
    %c0 = arith.constant 0 : index
    %c0_0 = arith.constant 0 : index
    %0 = vector.load %arg0[%c0, %c0_0] : memref<16x32xf32, #tpu.memory_space<vmem>>, vector<16x32xf32>
    %c0_1 = arith.constant 0 : index
    %c0_2 = arith.constant 0 : index
    %1 = vector.load %arg3[%c0_1, %c0_2] : memref<32x128xf32, #tpu.memory_space<vmem>>, vector<32x128xf32>
    %cst = arith.constant dense<0.000000e+00> : vector<16x128xf32>
    %2 = tpu.matmul %0, %1, %cst {dimension_numbers = #tpu.dot_dimension_numbers<[1], [0], [0], [1], [0, 0, 1, 1], [], []>} : vector<16x32xf32>, vector<32x128xf32>, vector<16x128xf32> -> vector<16x128xf32>
    %3 = vector.extract_strided_slice %2 {offsets = [0, 0], sizes = [8, 16], strides = [1, 1]} : vector<16x128xf32> to vector<8x16xf32>
    %4 = vector.extract_strided_slice %2 {offsets = [0, 32], sizes = [8, 16], strides = [1, 1]} : vector<16x128xf32> to vector<8x16xf32>
    %cst_3 = arith.constant dense<0.000000e+00> : vector<8x8xf32>
    %5 = tpu.matmul %3, %4, %cst_3 {dimension_numbers = #tpu.dot_dimension_numbers<[1], [1], [0], [0], [0, 0, 1, 0], [], []>} : vector<8x16xf32>, vector<8x16xf32>, vector<8x8xf32> -> vector<8x8xf32>
    %cst_4 = arith.constant 2.500000e-01 : f32
    %6 = vector.broadcast %cst_4 : f32 to vector<8x8xf32>
    %7 = arith.mulf %6, %5 : vector<8x8xf32>
    %c0_5 = arith.constant 0 : index
    %c0_6 = arith.constant 0 : index
    %8 = vector.load %arg15[%c0_5, %c0_6] : memref<64x8xf32, #tpu.memory_space<vmem>>, vector<8x8xf32>
    tpu.vector_store %arg15[%c0_5, %c0_6], %7 {strides = array<i32>} : memref<64x8xf32, #tpu.memory_space<vmem>>, vector<8x8xf32>,
    %9 = vector.extract_strided_slice %2 {offsets = [8, 0], sizes = [8, 16], strides = [1, 1]} : vector<16x128xf32> to vector<8x16xf32>
    %10 = vector.extract_strided_slice %2 {offsets = [8, 32], sizes = [8, 16], strides = [1, 1]} : vector<16x128xf32> to vector<8x16xf32>
    %cst_7 = arith.constant dense<0.000000e+00> : vector<8x8xf32>
    %11 = tpu.matmul %9, %10, %cst_7 {dimension_numbers = #tpu.dot_dimension_numbers<[1], [1], [0], [0], [0, 0, 1, 0], [], []>} : vector<8x16xf32>, vector<8x16xf32>, vector<8x8xf32> -> vector<8x8xf32>
    %cst_8 = arith.constant 2.500000e-01 : f32
    %12 = vector.broadcast %cst_8 : f32 to vector<8x8xf32>
    %13 = arith.mulf %12, %11 : vector<8x8xf32>
    %c8 = arith.constant 8 : index
    %c0_9 = arith.constant 0 : index
    %14 = vector.load %arg15[%c8, %c0_9] : memref<64x8xf32, #tpu.memory_space<vmem>>, vector<8x8xf32>
    tpu.vector_store %arg15[%c8, %c0_9], %13 {strides = array<i32>} : memref<64x8xf32, #tpu.memory_space<vmem>>, vector<8x8xf32>,
    %15 = vector.extract_strided_slice %2 {offsets = [0, 16], sizes = [8, 16], strides = [1, 1]} : vector<16x128xf32> to vector<8x16xf32>
    %16 = vector.extract_strided_slice %2 {offsets = [0, 48], sizes = [8, 16], strides = [1, 1]} : vector<16x128xf32> to vector<8x16xf32>
    %cst_10 = arith.constant dense<0.000000e+00> : vector<8x8xf32>
    %17 = tpu.matmul %15, %16, %cst_10 {dimension_numbers = #tpu.dot_dimension_numbers<[1], [1], [0], [0], [0, 0, 1, 0], [], []>} : vector<8x16xf32>, vector<8x16xf32>, vector<8x8xf32> -> vector<8x8xf32>
    %cst_11 = arith.constant 2.500000e-01 : f32
    %18 = vector.broadcast %cst_11 : f32 to vector<8x8xf32>
    %19 = arith.mulf %18, %17 : vector<8x8xf32>
    %c16 = arith.constant 16 : index
    %c0_12 = arith.constant 0 : index
    %20 = vector.load %arg15[%c16, %c0_12] : memref<64x8xf32, #tpu.memory_space<vmem>>, vector<8x8xf32>
    tpu.vector_store %arg15[%c16, %c0_12], %19 {strides = array<i32>} : memref<64x8xf32, #tpu.memory_space<vmem>>, vector<8x8xf32>,
    %21 = vector.extract_strided_slice %2 {offsets = [8, 16], sizes = [8, 16], strides = [1, 1]} : vector<16x128xf32> to vector<8x16xf32>
    %22 = vector.extract_strided_slice %2 {offsets = [8, 48], sizes = [8, 16], strides = [1, 1]} : vector<16x128xf32> to vector<8x16xf32>
    %cst_13 = arith.constant dense<0.000000e+00> : vector<8x8xf32>
    %23 = tpu.matmul %21, %22, %cst_13 {dimension_numbers = #tpu.dot_dimension_numbers<[1], [1], [0], [0], [0, 0, 1, 0], [], []>} : vector<8x16xf32>, vector<8x16xf32>, vector<8x8xf32> -> vector<8x8xf32>
    %cst_14 = arith.constant 2.500000e-01 : f32
    %24 = vector.broadcast %cst_14 : f32 to vector<8x8xf32>
    %25 = arith.mulf %24, %23 : vector<8x8xf32>
    %c24 = arith.constant 24 : index
    %c0_15 = arith.constant 0 : index
    %26 = vector.load %arg15[%c24, %c0_15] : memref<64x8xf32, #tpu.memory_space<vmem>>, vector<8x8xf32>
    tpu.vector_store %arg15[%c24, %c0_15], %25 {strides = array<i32>} : memref<64x8xf32, #tpu.memory_space<vmem>>, vector<8x8xf32>,
    %c0_16 = arith.constant 0 : index
    %c0_17 = arith.constant 0 : index
    %27 = vector.load %arg1[%c0_16, %c0_17] : memref<16x8xf32, #tpu.memory_space<vmem>>, vector<16x8xf32>
    %c32 = arith.constant 32 : index
    %c0_18 = arith.constant 0 : index
    %28 = vector.load %arg15[%c32, %c0_18] : memref<64x8xf32, #tpu.memory_space<vmem>>, vector<16x8xf32>
    tpu.vector_store %arg15[%c32, %c0_18], %27 {strides = array<i32>} : memref<64x8xf32, #tpu.memory_space<vmem>>, vector<16x8xf32>,
    %c0_19 = arith.constant 0 : index
    %c0_20 = arith.constant 0 : index
    %29 = vector.load %arg2[%c0_19, %c0_20] : memref<16x8xf32, #tpu.memory_space<vmem>>, vector<16x8xf32>
    %c48 = arith.constant 48 : index
    %c0_21 = arith.constant 0 : index
    %30 = vector.load %arg15[%c48, %c0_21] : memref<64x8xf32, #tpu.memory_space<vmem>>, vector<16x8xf32>
    tpu.vector_store %arg15[%c48, %c0_21], %29 {strides = array<i32>} : memref<64x8xf32, #tpu.memory_space<vmem>>, vector<16x8xf32>,
    %c0_22 = arith.constant 0 : index
    %c0_23 = arith.constant 0 : index
    %31 = vector.load %arg15[%c0_22, %c0_23] : memref<64x8xf32, #tpu.memory_space<vmem>>, vector<64x8xf32>
    %c0_24 = arith.constant 0 : index
    %c0_25 = arith.constant 0 : index
    %32 = vector.load %arg5[%c0_24, %c0_25] : memref<6x16xf32, #tpu.memory_space<vmem>>, vector<6x16xf32>
    %c0_26 = arith.constant 0 : index
    %c0_27 = arith.constant 0 : index
    %33 = vector.load %arg7[%c0_26, %c0_27] : memref<1x16xf32, #tpu.memory_space<vmem>>, vector<1x16xf32>
    %c0_28 = arith.constant 0 : index
    %34 = memref.load %arg10[%c0_28] : memref<2xf32, #tpu.memory_space<smem>>
    %35 = vector.extract_strided_slice %32 {offsets = [4, 0], sizes = [1, 16], strides = [1, 1]} : vector<6x16xf32> to vector<1x16xf32>
    %36 = vector.broadcast %34 : f32 to vector<1x16xf32>
    %37 = arith.mulf %36, %35 : vector<1x16xf32>
    %c0_29 = arith.constant 0 : index
    %38 = memref.load %arg11[%c0_29] : memref<2xf32, #tpu.memory_space<smem>>
    %39 = vector.extract_strided_slice %32 {offsets = [5, 0], sizes = [1, 16], strides = [1, 1]} : vector<6x16xf32> to vector<1x16xf32>
    %40 = vector.broadcast %38 : f32 to vector<1x16xf32>
    %41 = arith.mulf %40, %39 : vector<1x16xf32>
    %42 = arith.addf %37, %41 : vector<1x16xf32>
    %43 = arith.addf %42, %33 : vector<1x16xf32>
    %44 = vector.extract_strided_slice %31 {offsets = [0, 0], sizes = [64, 4], strides = [1, 1]} : vector<64x8xf32> to vector<64x4xf32>
    %45 = vector.extract_strided_slice %32 {offsets = [0, 0], sizes = [4, 16], strides = [1, 1]} : vector<6x16xf32> to vector<4x16xf32>
    %cst_30 = arith.constant dense<0.000000e+00> : vector<64x16xf32>
    %46 = tpu.matmul %44, %45, %cst_30 {dimension_numbers = #tpu.dot_dimension_numbers<[1], [0], [0], [1], [0, 0, 1, 1], [], []>} : vector<64x4xf32>, vector<4x16xf32>, vector<64x16xf32> -> vector<64x16xf32>
    %47 = vector.broadcast %43 : vector<1x16xf32> to vector<64x16xf32>
    %48 = arith.addf %46, %47 : vector<64x16xf32>
    %c0_31 = arith.constant 0 : index
    %c0_32 = arith.constant 0 : index
    %49 = vector.load %arg17[%c0_31, %c0_32] : memref<64x16xf32, #tpu.memory_space<vmem>>, vector<64x16xf32>
    tpu.vector_store %arg17[%c0_31, %c0_32], %48 {strides = array<i32>} : memref<64x16xf32, #tpu.memory_space<vmem>>, vector<64x16xf32>,
    %c1 = arith.constant 1 : index
    %50 = memref.load %arg10[%c1] : memref<2xf32, #tpu.memory_space<smem>>
    %51 = vector.extract_strided_slice %32 {offsets = [4, 0], sizes = [1, 16], strides = [1, 1]} : vector<6x16xf32> to vector<1x16xf32>
    %52 = vector.broadcast %50 : f32 to vector<1x16xf32>
    %53 = arith.mulf %52, %51 : vector<1x16xf32>
    %c1_33 = arith.constant 1 : index
    %54 = memref.load %arg11[%c1_33] : memref<2xf32, #tpu.memory_space<smem>>
    %55 = vector.extract_strided_slice %32 {offsets = [5, 0], sizes = [1, 16], strides = [1, 1]} : vector<6x16xf32> to vector<1x16xf32>
    %56 = vector.broadcast %54 : f32 to vector<1x16xf32>
    %57 = arith.mulf %56, %55 : vector<1x16xf32>
    %58 = arith.addf %53, %57 : vector<1x16xf32>
    %59 = arith.addf %58, %33 : vector<1x16xf32>
    %60 = vector.extract_strided_slice %31 {offsets = [0, 4], sizes = [64, 4], strides = [1, 1]} : vector<64x8xf32> to vector<64x4xf32>
    %61 = vector.extract_strided_slice %32 {offsets = [0, 0], sizes = [4, 16], strides = [1, 1]} : vector<6x16xf32> to vector<4x16xf32>
    %cst_34 = arith.constant dense<0.000000e+00> : vector<64x16xf32>
    %62 = tpu.matmul %60, %61, %cst_34 {dimension_numbers = #tpu.dot_dimension_numbers<[1], [0], [0], [1], [0, 0, 1, 1], [], []>} : vector<64x4xf32>, vector<4x16xf32>, vector<64x16xf32> -> vector<64x16xf32>
    %63 = vector.broadcast %59 : vector<1x16xf32> to vector<64x16xf32>
    %64 = arith.addf %62, %63 : vector<64x16xf32>
    %c0_35 = arith.constant 0 : index
    %c0_36 = arith.constant 0 : index
    %65 = vector.load %arg18[%c0_35, %c0_36] : memref<64x16xf32, #tpu.memory_space<vmem>>, vector<64x16xf32>
    tpu.vector_store %arg18[%c0_35, %c0_36], %64 {strides = array<i32>} : memref<64x16xf32, #tpu.memory_space<vmem>>, vector<64x16xf32>,
    %c0_37 = arith.constant 0 : index
    %c0_38 = arith.constant 0 : index
    %66 = vector.load %arg6[%c0_37, %c0_38] : memref<4x16xf32, #tpu.memory_space<vmem>>, vector<4x16xf32>
    %67 = vector.extract_strided_slice %66 {offsets = [0, 0], sizes = [1, 16], strides = [1, 1]} : vector<4x16xf32> to vector<1x16xf32>
    %68 = vector.extract_strided_slice %66 {offsets = [1, 0], sizes = [1, 16], strides = [1, 1]} : vector<4x16xf32> to vector<1x16xf32>
    %69 = vector.extract_strided_slice %66 {offsets = [2, 0], sizes = [1, 16], strides = [1, 1]} : vector<4x16xf32> to vector<1x16xf32>
    %70 = vector.extract_strided_slice %66 {offsets = [3, 0], sizes = [1, 16], strides = [1, 1]} : vector<4x16xf32> to vector<1x16xf32>
    %c0_39 = arith.constant 0 : index
    %c0_40 = arith.constant 0 : index
    %71 = vector.load %arg8[%c0_39, %c0_40] : memref<2x4xf32, #tpu.memory_space<vmem>>, vector<1x4xf32>
    %c1_41 = arith.constant 1 : index
    %c0_42 = arith.constant 0 : index
    %72 = vector.load %arg8[%c1_41, %c0_42] : memref<2x4xf32, #tpu.memory_space<vmem>>, vector<1x4xf32>
    %c0_43 = arith.constant 0 : index
    %c0_44 = arith.constant 0 : index
    %73 = vector.load %arg9[%c0_43, %c0_44] : memref<2x4xf32, #tpu.memory_space<vmem>>, vector<1x4xf32>
    %c1_45 = arith.constant 1 : index
    %c0_46 = arith.constant 0 : index
    %74 = vector.load %arg9[%c1_45, %c0_46] : memref<2x4xf32, #tpu.memory_space<vmem>>, vector<1x4xf32>
    %c0_i32 = arith.constant 0 : i32
    %c8_i32 = arith.constant 8 : i32
    %75 = arith.addi %c0_i32, %c8_i32 : i32
    %c1_i32 = arith.constant 1 : i32
    %76:4 = scf.for %arg19 = %c0_i32 to %75 step %c1_i32 iter_args(%arg20 = %71, %arg21 = %72, %arg22 = %73, %arg23 = %74) -> (vector<1x4xf32>, vector<1x4xf32>, vector<1x4xf32>, vector<1x4xf32>)  : i32 {
      %c8_i32_126 = arith.constant 8 : i32
      %252 = arith.muli %arg19, %c8_i32_126 : i32
      %c0_i32_127 = arith.constant 0 : i32
      %253 = arith.addi %252, %c0_i32_127 : i32
      %254 = arith.index_cast %253 : i32 to index
      %c0_128 = arith.constant 0 : index
      %255 = vector.load %arg17[%254, %c0_128] : memref<64x16xf32, #tpu.memory_space<vmem>>, vector<1x16xf32>
      %256 = vector.extract_strided_slice %arg20 {offsets = [0, 0], sizes = [1, 1], strides = [1, 1]} : vector<1x4xf32> to vector<1x1xf32>
      %257 = vector.broadcast %256 : vector<1x1xf32> to vector<1x16xf32>
      %258 = arith.mulf %257, %67 : vector<1x16xf32>
      %259 = arith.addf %255, %258 : vector<1x16xf32>
      %260 = vector.extract_strided_slice %arg20 {offsets = [0, 1], sizes = [1, 1], strides = [1, 1]} : vector<1x4xf32> to vector<1x1xf32>
      %261 = vector.broadcast %260 : vector<1x1xf32> to vector<1x16xf32>
      %262 = arith.mulf %261, %68 : vector<1x16xf32>
      %263 = arith.addf %259, %262 : vector<1x16xf32>
      %264 = vector.extract_strided_slice %arg20 {offsets = [0, 2], sizes = [1, 1], strides = [1, 1]} : vector<1x4xf32> to vector<1x1xf32>
      %265 = vector.broadcast %264 : vector<1x1xf32> to vector<1x16xf32>
      %266 = arith.mulf %265, %69 : vector<1x16xf32>
      %267 = arith.addf %263, %266 : vector<1x16xf32>
      %268 = vector.extract_strided_slice %arg20 {offsets = [0, 3], sizes = [1, 1], strides = [1, 1]} : vector<1x4xf32> to vector<1x1xf32>
      %269 = vector.broadcast %268 : vector<1x1xf32> to vector<1x16xf32>
      %270 = arith.mulf %269, %70 : vector<1x16xf32>
      %271 = arith.addf %267, %270 : vector<1x16xf32>
      %cst_129 = arith.constant 5.000000e-01 : f32
      %272 = vector.broadcast %cst_129 : f32 to vector<1x16xf32>
      %273 = arith.mulf %272, %271 : vector<1x16xf32>
      %274 = math.tanh %273 : vector<1x16xf32>
      %cst_130 = arith.constant 5.000000e-01 : f32
      %275 = vector.broadcast %cst_130 : f32 to vector<1x16xf32>
      %276 = arith.mulf %275, %274 : vector<1x16xf32>
      %cst_131 = arith.constant 5.000000e-01 : f32
      %277 = vector.broadcast %cst_131 : f32 to vector<1x16xf32>
      %278 = arith.addf %276, %277 : vector<1x16xf32>
      %279 = vector.extract_strided_slice %271 {offsets = [0, 8], sizes = [1, 4], strides = [1, 1]} : vector<1x16xf32> to vector<1x4xf32>
      %280 = math.tanh %279 : vector<1x4xf32>
      %281 = vector.extract_strided_slice %278 {offsets = [0, 4], sizes = [1, 4], strides = [1, 1]} : vector<1x16xf32> to vector<1x4xf32>
      %282 = arith.mulf %281, %arg22 : vector<1x4xf32>
      %283 = vector.extract_strided_slice %278 {offsets = [0, 0], sizes = [1, 4], strides = [1, 1]} : vector<1x16xf32> to vector<1x4xf32>
      %284 = arith.mulf %283, %280 : vector<1x4xf32>
      %285 = arith.addf %282, %284 : vector<1x4xf32>
      %286 = vector.extract_strided_slice %278 {offsets = [0, 12], sizes = [1, 4], strides = [1, 1]} : vector<1x16xf32> to vector<1x4xf32>
      %287 = math.tanh %285 : vector<1x4xf32>
      %288 = arith.mulf %286, %287 : vector<1x4xf32>
      %289 = arith.index_cast %253 : i32 to index
      %c0_132 = arith.constant 0 : index
      %290 = vector.load %arg16[%289, %c0_132] : memref<64x8xf32, #tpu.memory_space<vmem>>, vector<1x4xf32>
      tpu.vector_store %arg16[%289, %c0_132], %288 {strides = array<i32>} : memref<64x8xf32, #tpu.memory_space<vmem>>, vector<1x4xf32>,
      %291 = arith.index_cast %253 : i32 to index
      %c0_133 = arith.constant 0 : index
      %292 = vector.load %arg18[%291, %c0_133] : memref<64x16xf32, #tpu.memory_space<vmem>>, vector<1x16xf32>
      %293 = vector.extract_strided_slice %arg21 {offsets = [0, 0], sizes = [1, 1], strides = [1, 1]} : vector<1x4xf32> to vector<1x1xf32>
      %294 = vector.broadcast %293 : vector<1x1xf32> to vector<1x16xf32>
      %295 = arith.mulf %294, %67 : vector<1x16xf32>
      %296 = arith.addf %292, %295 : vector<1x16xf32>
      %297 = vector.extract_strided_slice %arg21 {offsets = [0, 1], sizes = [1, 1], strides = [1, 1]} : vector<1x4xf32> to vector<1x1xf32>
      %298 = vector.broadcast %297 : vector<1x1xf32> to vector<1x16xf32>
      %299 = arith.mulf %298, %68 : vector<1x16xf32>
      %300 = arith.addf %296, %299 : vector<1x16xf32>
      %301 = vector.extract_strided_slice %arg21 {offsets = [0, 2], sizes = [1, 1], strides = [1, 1]} : vector<1x4xf32> to vector<1x1xf32>
      %302 = vector.broadcast %301 : vector<1x1xf32> to vector<1x16xf32>
      %303 = arith.mulf %302, %69 : vector<1x16xf32>
      %304 = arith.addf %300, %303 : vector<1x16xf32>
      %305 = vector.extract_strided_slice %arg21 {offsets = [0, 3], sizes = [1, 1], strides = [1, 1]} : vector<1x4xf32> to vector<1x1xf32>
      %306 = vector.broadcast %305 : vector<1x1xf32> to vector<1x16xf32>
      %307 = arith.mulf %306, %70 : vector<1x16xf32>
      %308 = arith.addf %304, %307 : vector<1x16xf32>
      %cst_134 = arith.constant 5.000000e-01 : f32
      %309 = vector.broadcast %cst_134 : f32 to vector<1x16xf32>
      %310 = arith.mulf %309, %308 : vector<1x16xf32>
      %311 = math.tanh %310 : vector<1x16xf32>
      %cst_135 = arith.constant 5.000000e-01 : f32
      %312 = vector.broadcast %cst_135 : f32 to vector<1x16xf32>
      %313 = arith.mulf %312, %311 : vector<1x16xf32>
      %cst_136 = arith.constant 5.000000e-01 : f32
      %314 = vector.broadcast %cst_136 : f32 to vector<1x16xf32>
      %315 = arith.addf %313, %314 : vector<1x16xf32>
      %316 = vector.extract_strided_slice %308 {offsets = [0, 8], sizes = [1, 4], strides = [1, 1]} : vector<1x16xf32> to vector<1x4xf32>
      %317 = math.tanh %316 : vector<1x4xf32>
      %318 = vector.extract_strided_slice %315 {offsets = [0, 4], sizes = [1, 4], strides = [1, 1]} : vector<1x16xf32> to vector<1x4xf32>
      %319 = arith.mulf %318, %arg23 : vector<1x4xf32>
      %320 = vector.extract_strided_slice %315 {offsets = [0, 0], sizes = [1, 4], strides = [1, 1]} : vector<1x16xf32> to vector<1x4xf32>
      %321 = arith.mulf %320, %317 : vector<1x4xf32>
      %322 = arith.addf %319, %321 : vector<1x4xf32>
      %323 = vector.extract_strided_slice %315 {offsets = [0, 12], sizes = [1, 4], strides = [1, 1]} : vector<1x16xf32> to vector<1x4xf32>
      %324 = math.tanh %322 : vector<1x4xf32>
      %325 = arith.mulf %323, %324 : vector<1x4xf32>
      %326 = arith.index_cast %253 : i32 to index
      %c4 = arith.constant 4 : index
      %327 = vector.load %arg16[%326, %c4] : memref<64x8xf32, #tpu.memory_space<vmem>>, vector<1x4xf32>
      tpu.vector_store %arg16[%326, %c4], %325 {strides = array<i32>} : memref<64x8xf32, #tpu.memory_space<vmem>>, vector<1x4xf32>,
      %c8_i32_137 = arith.constant 8 : i32
      %328 = arith.muli %arg19, %c8_i32_137 : i32
      %c1_i32_138 = arith.constant 1 : i32
      %329 = arith.addi %328, %c1_i32_138 : i32
      %330 = arith.index_cast %329 : i32 to index
      %c0_139 = arith.constant 0 : index
      %331 = vector.load %arg17[%330, %c0_139] : memref<64x16xf32, #tpu.memory_space<vmem>>, vector<1x16xf32>
      %332 = vector.extract_strided_slice %288 {offsets = [0, 0], sizes = [1, 1], strides = [1, 1]} : vector<1x4xf32> to vector<1x1xf32>
      %333 = vector.broadcast %332 : vector<1x1xf32> to vector<1x16xf32>
      %334 = arith.mulf %333, %67 : vector<1x16xf32>
      %335 = arith.addf %331, %334 : vector<1x16xf32>
      %336 = vector.extract_strided_slice %288 {offsets = [0, 1], sizes = [1, 1], strides = [1, 1]} : vector<1x4xf32> to vector<1x1xf32>
      %337 = vector.broadcast %336 : vector<1x1xf32> to vector<1x16xf32>
      %338 = arith.mulf %337, %68 : vector<1x16xf32>
      %339 = arith.addf %335, %338 : vector<1x16xf32>
      %340 = vector.extract_strided_slice %288 {offsets = [0, 2], sizes = [1, 1], strides = [1, 1]} : vector<1x4xf32> to vector<1x1xf32>
      %341 = vector.broadcast %340 : vector<1x1xf32> to vector<1x16xf32>
      %342 = arith.mulf %341, %69 : vector<1x16xf32>
      %343 = arith.addf %339, %342 : vector<1x16xf32>
      %344 = vector.extract_strided_slice %288 {offsets = [0, 3], sizes = [1, 1], strides = [1, 1]} : vector<1x4xf32> to vector<1x1xf32>
      %345 = vector.broadcast %344 : vector<1x1xf32> to vector<1x16xf32>
      %346 = arith.mulf %345, %70 : vector<1x16xf32>
      %347 = arith.addf %343, %346 : vector<1x16xf32>
      %cst_140 = arith.constant 5.000000e-01 : f32
      %348 = vector.broadcast %cst_140 : f32 to vector<1x16xf32>
      %349 = arith.mulf %348, %347 : vector<1x16xf32>
      %350 = math.tanh %349 : vector<1x16xf32>
      %cst_141 = arith.constant 5.000000e-01 : f32
      %351 = vector.broadcast %cst_141 : f32 to vector<1x16xf32>
      %352 = arith.mulf %351, %350 : vector<1x16xf32>
      %cst_142 = arith.constant 5.000000e-01 : f32
      %353 = vector.broadcast %cst_142 : f32 to vector<1x16xf32>
      %354 = arith.addf %352, %353 : vector<1x16xf32>
      %355 = vector.extract_strided_slice %347 {offsets = [0, 8], sizes = [1, 4], strides = [1, 1]} : vector<1x16xf32> to vector<1x4xf32>
      %356 = math.tanh %355 : vector<1x4xf32>
      %357 = vector.extract_strided_slice %354 {offsets = [0, 4], sizes = [1, 4], strides = [1, 1]} : vector<1x16xf32> to vector<1x4xf32>
      %358 = arith.mulf %357, %285 : vector<1x4xf32>
      %359 = vector.extract_strided_slice %354 {offsets = [0, 0], sizes = [1, 4], strides = [1, 1]} : vector<1x16xf32> to vector<1x4xf32>
      %360 = arith.mulf %359, %356 : vector<1x4xf32>
      %361 = arith.addf %358, %360 : vector<1x4xf32>
      %362 = vector.extract_strided_slice %354 {offsets = [0, 12], sizes = [1, 4], strides = [1, 1]} : vector<1x16xf32> to vector<1x4xf32>
      %363 = math.tanh %361 : vector<1x4xf32>
      %364 = arith.mulf %362, %363 : vector<1x4xf32>
      %365 = arith.index_cast %329 : i32 to index
      %c0_143 = arith.constant 0 : index
      %366 = vector.load %arg16[%365, %c0_143] : memref<64x8xf32, #tpu.memory_space<vmem>>, vector<1x4xf32>
      tpu.vector_store %arg16[%365, %c0_143], %364 {strides = array<i32>} : memref<64x8xf32, #tpu.memory_space<vmem>>, vector<1x4xf32>,
      %367 = arith.index_cast %329 : i32 to index
      %c0_144 = arith.constant 0 : index
      %368 = vector.load %arg18[%367, %c0_144] : memref<64x16xf32, #tpu.memory_space<vmem>>, vector<1x16xf32>
      %369 = vector.extract_strided_slice %325 {offsets = [0, 0], sizes = [1, 1], strides = [1, 1]} : vector<1x4xf32> to vector<1x1xf32>
      %370 = vector.broadcast %369 : vector<1x1xf32> to vector<1x16xf32>
      %371 = arith.mulf %370, %67 : vector<1x16xf32>
      %372 = arith.addf %368, %371 : vector<1x16xf32>
      %373 = vector.extract_strided_slice %325 {offsets = [0, 1], sizes = [1, 1], strides = [1, 1]} : vector<1x4xf32> to vector<1x1xf32>
      %374 = vector.broadcast %373 : vector<1x1xf32> to vector<1x16xf32>
      %375 = arith.mulf %374, %68 : vector<1x16xf32>
      %376 = arith.addf %372, %375 : vector<1x16xf32>
      %377 = vector.extract_strided_slice %325 {offsets = [0, 2], sizes = [1, 1], strides = [1, 1]} : vector<1x4xf32> to vector<1x1xf32>
      %378 = vector.broadcast %377 : vector<1x1xf32> to vector<1x16xf32>
      %379 = arith.mulf %378, %69 : vector<1x16xf32>
      %380 = arith.addf %376, %379 : vector<1x16xf32>
      %381 = vector.extract_strided_slice %325 {offsets = [0, 3], sizes = [1, 1], strides = [1, 1]} : vector<1x4xf32> to vector<1x1xf32>
      %382 = vector.broadcast %381 : vector<1x1xf32> to vector<1x16xf32>
      %383 = arith.mulf %382, %70 : vector<1x16xf32>
      %384 = arith.addf %380, %383 : vector<1x16xf32>
      %cst_145 = arith.constant 5.000000e-01 : f32
      %385 = vector.broadcast %cst_145 : f32 to vector<1x16xf32>
      %386 = arith.mulf %385, %384 : vector<1x16xf32>
      %387 = math.tanh %386 : vector<1x16xf32>
      %cst_146 = arith.constant 5.000000e-01 : f32
      %388 = vector.broadcast %cst_146 : f32 to vector<1x16xf32>
      %389 = arith.mulf %388, %387 : vector<1x16xf32>
      %cst_147 = arith.constant 5.000000e-01 : f32
      %390 = vector.broadcast %cst_147 : f32 to vector<1x16xf32>
      %391 = arith.addf %389, %390 : vector<1x16xf32>
      %392 = vector.extract_strided_slice %384 {offsets = [0, 8], sizes = [1, 4], strides = [1, 1]} : vector<1x16xf32> to vector<1x4xf32>
      %393 = math.tanh %392 : vector<1x4xf32>
      %394 = vector.extract_strided_slice %391 {offsets = [0, 4], sizes = [1, 4], strides = [1, 1]} : vector<1x16xf32> to vector<1x4xf32>
      %395 = arith.mulf %394, %322 : vector<1x4xf32>
      %396 = vector.extract_strided_slice %391 {offsets = [0, 0], sizes = [1, 4], strides = [1, 1]} : vector<1x16xf32> to vector<1x4xf32>
      %397 = arith.mulf %396, %393 : vector<1x4xf32>
      %398 = arith.addf %395, %397 : vector<1x4xf32>
      %399 = vector.extract_strided_slice %391 {offsets = [0, 12], sizes = [1, 4], strides = [1, 1]} : vector<1x16xf32> to vector<1x4xf32>
      %400 = math.tanh %398 : vector<1x4xf32>
      %401 = arith.mulf %399, %400 : vector<1x4xf32>
      %402 = arith.index_cast %329 : i32 to index
      %c4_148 = arith.constant 4 : index
      %403 = vector.load %arg16[%402, %c4_148] : memref<64x8xf32, #tpu.memory_space<vmem>>, vector<1x4xf32>
      tpu.vector_store %arg16[%402, %c4_148], %401 {strides = array<i32>} : memref<64x8xf32, #tpu.memory_space<vmem>>, vector<1x4xf32>,
      %c8_i32_149 = arith.constant 8 : i32
      %404 = arith.muli %arg19, %c8_i32_149 : i32
      %c2_i32 = arith.constant 2 : i32
      %405 = arith.addi %404, %c2_i32 : i32
      %406 = arith.index_cast %405 : i32 to index
      %c0_150 = arith.constant 0 : index
      %407 = vector.load %arg17[%406, %c0_150] : memref<64x16xf32, #tpu.memory_space<vmem>>, vector<1x16xf32>
      %408 = vector.extract_strided_slice %364 {offsets = [0, 0], sizes = [1, 1], strides = [1, 1]} : vector<1x4xf32> to vector<1x1xf32>
      %409 = vector.broadcast %408 : vector<1x1xf32> to vector<1x16xf32>
      %410 = arith.mulf %409, %67 : vector<1x16xf32>
      %411 = arith.addf %407, %410 : vector<1x16xf32>
      %412 = vector.extract_strided_slice %364 {offsets = [0, 1], sizes = [1, 1], strides = [1, 1]} : vector<1x4xf32> to vector<1x1xf32>
      %413 = vector.broadcast %412 : vector<1x1xf32> to vector<1x16xf32>
      %414 = arith.mulf %413, %68 : vector<1x16xf32>
      %415 = arith.addf %411, %414 : vector<1x16xf32>
      %416 = vector.extract_strided_slice %364 {offsets = [0, 2], sizes = [1, 1], strides = [1, 1]} : vector<1x4xf32> to vector<1x1xf32>
      %417 = vector.broadcast %416 : vector<1x1xf32> to vector<1x16xf32>
      %418 = arith.mulf %417, %69 : vector<1x16xf32>
      %419 = arith.addf %415, %418 : vector<1x16xf32>
      %420 = vector.extract_strided_slice %364 {offsets = [0, 3], sizes = [1, 1], strides = [1, 1]} : vector<1x4xf32> to vector<1x1xf32>
      %421 = vector.broadcast %420 : vector<1x1xf32> to vector<1x16xf32>
      %422 = arith.mulf %421, %70 : vector<1x16xf32>
      %423 = arith.addf %419, %422 : vector<1x16xf32>
      %cst_151 = arith.constant 5.000000e-01 : f32
      %424 = vector.broadcast %cst_151 : f32 to vector<1x16xf32>
      %425 = arith.mulf %424, %423 : vector<1x16xf32>
      %426 = math.tanh %425 : vector<1x16xf32>
      %cst_152 = arith.constant 5.000000e-01 : f32
      %427 = vector.broadcast %cst_152 : f32 to vector<1x16xf32>
      %428 = arith.mulf %427, %426 : vector<1x16xf32>
      %cst_153 = arith.constant 5.000000e-01 : f32
      %429 = vector.broadcast %cst_153 : f32 to vector<1x16xf32>
      %430 = arith.addf %428, %429 : vector<1x16xf32>
      %431 = vector.extract_strided_slice %423 {offsets = [0, 8], sizes = [1, 4], strides = [1, 1]} : vector<1x16xf32> to vector<1x4xf32>
      %432 = math.tanh %431 : vector<1x4xf32>
      %433 = vector.extract_strided_slice %430 {offsets = [0, 4], sizes = [1, 4], strides = [1, 1]} : vector<1x16xf32> to vector<1x4xf32>
      %434 = arith.mulf %433, %361 : vector<1x4xf32>
      %435 = vector.extract_strided_slice %430 {offsets = [0, 0], sizes = [1, 4], strides = [1, 1]} : vector<1x16xf32> to vector<1x4xf32>
      %436 = arith.mulf %435, %432 : vector<1x4xf32>
      %437 = arith.addf %434, %436 : vector<1x4xf32>
      %438 = vector.extract_strided_slice %430 {offsets = [0, 12], sizes = [1, 4], strides = [1, 1]} : vector<1x16xf32> to vector<1x4xf32>
      %439 = math.tanh %437 : vector<1x4xf32>
      %440 = arith.mulf %438, %439 : vector<1x4xf32>
      %441 = arith.index_cast %405 : i32 to index
      %c0_154 = arith.constant 0 : index
      %442 = vector.load %arg16[%441, %c0_154] : memref<64x8xf32, #tpu.memory_space<vmem>>, vector<1x4xf32>
      tpu.vector_store %arg16[%441, %c0_154], %440 {strides = array<i32>} : memref<64x8xf32, #tpu.memory_space<vmem>>, vector<1x4xf32>,
      %443 = arith.index_cast %405 : i32 to index
      %c0_155 = arith.constant 0 : index
      %444 = vector.load %arg18[%443, %c0_155] : memref<64x16xf32, #tpu.memory_space<vmem>>, vector<1x16xf32>
      %445 = vector.extract_strided_slice %401 {offsets = [0, 0], sizes = [1, 1], strides = [1, 1]} : vector<1x4xf32> to vector<1x1xf32>
      %446 = vector.broadcast %445 : vector<1x1xf32> to vector<1x16xf32>
      %447 = arith.mulf %446, %67 : vector<1x16xf32>
      %448 = arith.addf %444, %447 : vector<1x16xf32>
      %449 = vector.extract_strided_slice %401 {offsets = [0, 1], sizes = [1, 1], strides = [1, 1]} : vector<1x4xf32> to vector<1x1xf32>
      %450 = vector.broadcast %449 : vector<1x1xf32> to vector<1x16xf32>
      %451 = arith.mulf %450, %68 : vector<1x16xf32>
      %452 = arith.addf %448, %451 : vector<1x16xf32>
      %453 = vector.extract_strided_slice %401 {offsets = [0, 2], sizes = [1, 1], strides = [1, 1]} : vector<1x4xf32> to vector<1x1xf32>
      %454 = vector.broadcast %453 : vector<1x1xf32> to vector<1x16xf32>
      %455 = arith.mulf %454, %69 : vector<1x16xf32>
      %456 = arith.addf %452, %455 : vector<1x16xf32>
      %457 = vector.extract_strided_slice %401 {offsets = [0, 3], sizes = [1, 1], strides = [1, 1]} : vector<1x4xf32> to vector<1x1xf32>
      %458 = vector.broadcast %457 : vector<1x1xf32> to vector<1x16xf32>
      %459 = arith.mulf %458, %70 : vector<1x16xf32>
      %460 = arith.addf %456, %459 : vector<1x16xf32>
      %cst_156 = arith.constant 5.000000e-01 : f32
      %461 = vector.broadcast %cst_156 : f32 to vector<1x16xf32>
      %462 = arith.mulf %461, %460 : vector<1x16xf32>
      %463 = math.tanh %462 : vector<1x16xf32>
      %cst_157 = arith.constant 5.000000e-01 : f32
      %464 = vector.broadcast %cst_157 : f32 to vector<1x16xf32>
      %465 = arith.mulf %464, %463 : vector<1x16xf32>
      %cst_158 = arith.constant 5.000000e-01 : f32
      %466 = vector.broadcast %cst_158 : f32 to vector<1x16xf32>
      %467 = arith.addf %465, %466 : vector<1x16xf32>
      %468 = vector.extract_strided_slice %460 {offsets = [0, 8], sizes = [1, 4], strides = [1, 1]} : vector<1x16xf32> to vector<1x4xf32>
      %469 = math.tanh %468 : vector<1x4xf32>
      %470 = vector.extract_strided_slice %467 {offsets = [0, 4], sizes = [1, 4], strides = [1, 1]} : vector<1x16xf32> to vector<1x4xf32>
      %471 = arith.mulf %470, %398 : vector<1x4xf32>
      %472 = vector.extract_strided_slice %467 {offsets = [0, 0], sizes = [1, 4], strides = [1, 1]} : vector<1x16xf32> to vector<1x4xf32>
      %473 = arith.mulf %472, %469 : vector<1x4xf32>
      %474 = arith.addf %471, %473 : vector<1x4xf32>
      %475 = vector.extract_strided_slice %467 {offsets = [0, 12], sizes = [1, 4], strides = [1, 1]} : vector<1x16xf32> to vector<1x4xf32>
      %476 = math.tanh %474 : vector<1x4xf32>
      %477 = arith.mulf %475, %476 : vector<1x4xf32>
      %478 = arith.index_cast %405 : i32 to index
      %c4_159 = arith.constant 4 : index
      %479 = vector.load %arg16[%478, %c4_159] : memref<64x8xf32, #tpu.memory_space<vmem>>, vector<1x4xf32>
      tpu.vector_store %arg16[%478, %c4_159], %477 {strides = array<i32>} : memref<64x8xf32, #tpu.memory_space<vmem>>, vector<1x4xf32>,
      %c8_i32_160 = arith.constant 8 : i32
      %480 = arith.muli %arg19, %c8_i32_160 : i32
      %c3_i32 = arith.constant 3 : i32
      %481 = arith.addi %480, %c3_i32 : i32
      %482 = arith.index_cast %481 : i32 to index
      %c0_161 = arith.constant 0 : index
      %483 = vector.load %arg17[%482, %c0_161] : memref<64x16xf32, #tpu.memory_space<vmem>>, vector<1x16xf32>
      %484 = vector.extract_strided_slice %440 {offsets = [0, 0], sizes = [1, 1], strides = [1, 1]} : vector<1x4xf32> to vector<1x1xf32>
      %485 = vector.broadcast %484 : vector<1x1xf32> to vector<1x16xf32>
      %486 = arith.mulf %485, %67 : vector<1x16xf32>
      %487 = arith.addf %483, %486 : vector<1x16xf32>
      %488 = vector.extract_strided_slice %440 {offsets = [0, 1], sizes = [1, 1], strides = [1, 1]} : vector<1x4xf32> to vector<1x1xf32>
      %489 = vector.broadcast %488 : vector<1x1xf32> to vector<1x16xf32>
      %490 = arith.mulf %489, %68 : vector<1x16xf32>
      %491 = arith.addf %487, %490 : vector<1x16xf32>
      %492 = vector.extract_strided_slice %440 {offsets = [0, 2], sizes = [1, 1], strides = [1, 1]} : vector<1x4xf32> to vector<1x1xf32>
      %493 = vector.broadcast %492 : vector<1x1xf32> to vector<1x16xf32>
      %494 = arith.mulf %493, %69 : vector<1x16xf32>
      %495 = arith.addf %491, %494 : vector<1x16xf32>
      %496 = vector.extract_strided_slice %440 {offsets = [0, 3], sizes = [1, 1], strides = [1, 1]} : vector<1x4xf32> to vector<1x1xf32>
      %497 = vector.broadcast %496 : vector<1x1xf32> to vector<1x16xf32>
      %498 = arith.mulf %497, %70 : vector<1x16xf32>
      %499 = arith.addf %495, %498 : vector<1x16xf32>
      %cst_162 = arith.constant 5.000000e-01 : f32
      %500 = vector.broadcast %cst_162 : f32 to vector<1x16xf32>
      %501 = arith.mulf %500, %499 : vector<1x16xf32>
      %502 = math.tanh %501 : vector<1x16xf32>
      %cst_163 = arith.constant 5.000000e-01 : f32
      %503 = vector.broadcast %cst_163 : f32 to vector<1x16xf32>
      %504 = arith.mulf %503, %502 : vector<1x16xf32>
      %cst_164 = arith.constant 5.000000e-01 : f32
      %505 = vector.broadcast %cst_164 : f32 to vector<1x16xf32>
      %506 = arith.addf %504, %505 : vector<1x16xf32>
      %507 = vector.extract_strided_slice %499 {offsets = [0, 8], sizes = [1, 4], strides = [1, 1]} : vector<1x16xf32> to vector<1x4xf32>
      %508 = math.tanh %507 : vector<1x4xf32>
      %509 = vector.extract_strided_slice %506 {offsets = [0, 4], sizes = [1, 4], strides = [1, 1]} : vector<1x16xf32> to vector<1x4xf32>
      %510 = arith.mulf %509, %437 : vector<1x4xf32>
      %511 = vector.extract_strided_slice %506 {offsets = [0, 0], sizes = [1, 4], strides = [1, 1]} : vector<1x16xf32> to vector<1x4xf32>
      %512 = arith.mulf %511, %508 : vector<1x4xf32>
      %513 = arith.addf %510, %512 : vector<1x4xf32>
      %514 = vector.extract_strided_slice %506 {offsets = [0, 12], sizes = [1, 4], strides = [1, 1]} : vector<1x16xf32> to vector<1x4xf32>
      %515 = math.tanh %513 : vector<1x4xf32>
      %516 = arith.mulf %514, %515 : vector<1x4xf32>
      %517 = arith.index_cast %481 : i32 to index
      %c0_165 = arith.constant 0 : index
      %518 = vector.load %arg16[%517, %c0_165] : memref<64x8xf32, #tpu.memory_space<vmem>>, vector<1x4xf32>
      tpu.vector_store %arg16[%517, %c0_165], %516 {strides = array<i32>} : memref<64x8xf32, #tpu.memory_space<vmem>>, vector<1x4xf32>,
      %519 = arith.index_cast %481 : i32 to index
      %c0_166 = arith.constant 0 : index
      %520 = vector.load %arg18[%519, %c0_166] : memref<64x16xf32, #tpu.memory_space<vmem>>, vector<1x16xf32>
      %521 = vector.extract_strided_slice %477 {offsets = [0, 0], sizes = [1, 1], strides = [1, 1]} : vector<1x4xf32> to vector<1x1xf32>
      %522 = vector.broadcast %521 : vector<1x1xf32> to vector<1x16xf32>
      %523 = arith.mulf %522, %67 : vector<1x16xf32>
      %524 = arith.addf %520, %523 : vector<1x16xf32>
      %525 = vector.extract_strided_slice %477 {offsets = [0, 1], sizes = [1, 1], strides = [1, 1]} : vector<1x4xf32> to vector<1x1xf32>
      %526 = vector.broadcast %525 : vector<1x1xf32> to vector<1x16xf32>
      %527 = arith.mulf %526, %68 : vector<1x16xf32>
      %528 = arith.addf %524, %527 : vector<1x16xf32>
      %529 = vector.extract_strided_slice %477 {offsets = [0, 2], sizes = [1, 1], strides = [1, 1]} : vector<1x4xf32> to vector<1x1xf32>
      %530 = vector.broadcast %529 : vector<1x1xf32> to vector<1x16xf32>
      %531 = arith.mulf %530, %69 : vector<1x16xf32>
      %532 = arith.addf %528, %531 : vector<1x16xf32>
      %533 = vector.extract_strided_slice %477 {offsets = [0, 3], sizes = [1, 1], strides = [1, 1]} : vector<1x4xf32> to vector<1x1xf32>
      %534 = vector.broadcast %533 : vector<1x1xf32> to vector<1x16xf32>
      %535 = arith.mulf %534, %70 : vector<1x16xf32>
      %536 = arith.addf %532, %535 : vector<1x16xf32>
      %cst_167 = arith.constant 5.000000e-01 : f32
      %537 = vector.broadcast %cst_167 : f32 to vector<1x16xf32>
      %538 = arith.mulf %537, %536 : vector<1x16xf32>
      %539 = math.tanh %538 : vector<1x16xf32>
      %cst_168 = arith.constant 5.000000e-01 : f32
      %540 = vector.broadcast %cst_168 : f32 to vector<1x16xf32>
      %541 = arith.mulf %540, %539 : vector<1x16xf32>
      %cst_169 = arith.constant 5.000000e-01 : f32
      %542 = vector.broadcast %cst_169 : f32 to vector<1x16xf32>
      %543 = arith.addf %541, %542 : vector<1x16xf32>
      %544 = vector.extract_strided_slice %536 {offsets = [0, 8], sizes = [1, 4], strides = [1, 1]} : vector<1x16xf32> to vector<1x4xf32>
      %545 = math.tanh %544 : vector<1x4xf32>
      %546 = vector.extract_strided_slice %543 {offsets = [0, 4], sizes = [1, 4], strides = [1, 1]} : vector<1x16xf32> to vector<1x4xf32>
      %547 = arith.mulf %546, %474 : vector<1x4xf32>
      %548 = vector.extract_strided_slice %543 {offsets = [0, 0], sizes = [1, 4], strides = [1, 1]} : vector<1x16xf32> to vector<1x4xf32>
      %549 = arith.mulf %548, %545 : vector<1x4xf32>
      %550 = arith.addf %547, %549 : vector<1x4xf32>
      %551 = vector.extract_strided_slice %543 {offsets = [0, 12], sizes = [1, 4], strides = [1, 1]} : vector<1x16xf32> to vector<1x4xf32>
      %552 = math.tanh %550 : vector<1x4xf32>
      %553 = arith.mulf %551, %552 : vector<1x4xf32>
      %554 = arith.index_cast %481 : i32 to index
      %c4_170 = arith.constant 4 : index
      %555 = vector.load %arg16[%554, %c4_170] : memref<64x8xf32, #tpu.memory_space<vmem>>, vector<1x4xf32>
      tpu.vector_store %arg16[%554, %c4_170], %553 {strides = array<i32>} : memref<64x8xf32, #tpu.memory_space<vmem>>, vector<1x4xf32>,
      %c8_i32_171 = arith.constant 8 : i32
      %556 = arith.muli %arg19, %c8_i32_171 : i32
      %c4_i32 = arith.constant 4 : i32
      %557 = arith.addi %556, %c4_i32 : i32
      %558 = arith.index_cast %557 : i32 to index
      %c0_172 = arith.constant 0 : index
      %559 = vector.load %arg17[%558, %c0_172] : memref<64x16xf32, #tpu.memory_space<vmem>>, vector<1x16xf32>
      %560 = vector.extract_strided_slice %516 {offsets = [0, 0], sizes = [1, 1], strides = [1, 1]} : vector<1x4xf32> to vector<1x1xf32>
      %561 = vector.broadcast %560 : vector<1x1xf32> to vector<1x16xf32>
      %562 = arith.mulf %561, %67 : vector<1x16xf32>
      %563 = arith.addf %559, %562 : vector<1x16xf32>
      %564 = vector.extract_strided_slice %516 {offsets = [0, 1], sizes = [1, 1], strides = [1, 1]} : vector<1x4xf32> to vector<1x1xf32>
      %565 = vector.broadcast %564 : vector<1x1xf32> to vector<1x16xf32>
      %566 = arith.mulf %565, %68 : vector<1x16xf32>
      %567 = arith.addf %563, %566 : vector<1x16xf32>
      %568 = vector.extract_strided_slice %516 {offsets = [0, 2], sizes = [1, 1], strides = [1, 1]} : vector<1x4xf32> to vector<1x1xf32>
      %569 = vector.broadcast %568 : vector<1x1xf32> to vector<1x16xf32>
      %570 = arith.mulf %569, %69 : vector<1x16xf32>
      %571 = arith.addf %567, %570 : vector<1x16xf32>
      %572 = vector.extract_strided_slice %516 {offsets = [0, 3], sizes = [1, 1], strides = [1, 1]} : vector<1x4xf32> to vector<1x1xf32>
      %573 = vector.broadcast %572 : vector<1x1xf32> to vector<1x16xf32>
      %574 = arith.mulf %573, %70 : vector<1x16xf32>
      %575 = arith.addf %571, %574 : vector<1x16xf32>
      %cst_173 = arith.constant 5.000000e-01 : f32
      %576 = vector.broadcast %cst_173 : f32 to vector<1x16xf32>
      %577 = arith.mulf %576, %575 : vector<1x16xf32>
      %578 = math.tanh %577 : vector<1x16xf32>
      %cst_174 = arith.constant 5.000000e-01 : f32
      %579 = vector.broadcast %cst_174 : f32 to vector<1x16xf32>
      %580 = arith.mulf %579, %578 : vector<1x16xf32>
      %cst_175 = arith.constant 5.000000e-01 : f32
      %581 = vector.broadcast %cst_175 : f32 to vector<1x16xf32>
      %582 = arith.addf %580, %581 : vector<1x16xf32>
      %583 = vector.extract_strided_slice %575 {offsets = [0, 8], sizes = [1, 4], strides = [1, 1]} : vector<1x16xf32> to vector<1x4xf32>
      %584 = math.tanh %583 : vector<1x4xf32>
      %585 = vector.extract_strided_slice %582 {offsets = [0, 4], sizes = [1, 4], strides = [1, 1]} : vector<1x16xf32> to vector<1x4xf32>
      %586 = arith.mulf %585, %513 : vector<1x4xf32>
      %587 = vector.extract_strided_slice %582 {offsets = [0, 0], sizes = [1, 4], strides = [1, 1]} : vector<1x16xf32> to vector<1x4xf32>
      %588 = arith.mulf %587, %584 : vector<1x4xf32>
      %589 = arith.addf %586, %588 : vector<1x4xf32>
      %590 = vector.extract_strided_slice %582 {offsets = [0, 12], sizes = [1, 4], strides = [1, 1]} : vector<1x16xf32> to vector<1x4xf32>
      %591 = math.tanh %589 : vector<1x4xf32>
      %592 = arith.mulf %590, %591 : vector<1x4xf32>
      %593 = arith.index_cast %557 : i32 to index
      %c0_176 = arith.constant 0 : index
      %594 = vector.load %arg16[%593, %c0_176] : memref<64x8xf32, #tpu.memory_space<vmem>>, vector<1x4xf32>
      tpu.vector_store %arg16[%593, %c0_176], %592 {strides = array<i32>} : memref<64x8xf32, #tpu.memory_space<vmem>>, vector<1x4xf32>,
      %595 = arith.index_cast %557 : i32 to index
      %c0_177 = arith.constant 0 : index
      %596 = vector.load %arg18[%595, %c0_177] : memref<64x16xf32, #tpu.memory_space<vmem>>, vector<1x16xf32>
      %597 = vector.extract_strided_slice %553 {offsets = [0, 0], sizes = [1, 1], strides = [1, 1]} : vector<1x4xf32> to vector<1x1xf32>
      %598 = vector.broadcast %597 : vector<1x1xf32> to vector<1x16xf32>
      %599 = arith.mulf %598, %67 : vector<1x16xf32>
      %600 = arith.addf %596, %599 : vector<1x16xf32>
      %601 = vector.extract_strided_slice %553 {offsets = [0, 1], sizes = [1, 1], strides = [1, 1]} : vector<1x4xf32> to vector<1x1xf32>
      %602 = vector.broadcast %601 : vector<1x1xf32> to vector<1x16xf32>
      %603 = arith.mulf %602, %68 : vector<1x16xf32>
      %604 = arith.addf %600, %603 : vector<1x16xf32>
      %605 = vector.extract_strided_slice %553 {offsets = [0, 2], sizes = [1, 1], strides = [1, 1]} : vector<1x4xf32> to vector<1x1xf32>
      %606 = vector.broadcast %605 : vector<1x1xf32> to vector<1x16xf32>
      %607 = arith.mulf %606, %69 : vector<1x16xf32>
      %608 = arith.addf %604, %607 : vector<1x16xf32>
      %609 = vector.extract_strided_slice %553 {offsets = [0, 3], sizes = [1, 1], strides = [1, 1]} : vector<1x4xf32> to vector<1x1xf32>
      %610 = vector.broadcast %609 : vector<1x1xf32> to vector<1x16xf32>
      %611 = arith.mulf %610, %70 : vector<1x16xf32>
      %612 = arith.addf %608, %611 : vector<1x16xf32>
      %cst_178 = arith.constant 5.000000e-01 : f32
      %613 = vector.broadcast %cst_178 : f32 to vector<1x16xf32>
      %614 = arith.mulf %613, %612 : vector<1x16xf32>
      %615 = math.tanh %614 : vector<1x16xf32>
      %cst_179 = arith.constant 5.000000e-01 : f32
      %616 = vector.broadcast %cst_179 : f32 to vector<1x16xf32>
      %617 = arith.mulf %616, %615 : vector<1x16xf32>
      %cst_180 = arith.constant 5.000000e-01 : f32
      %618 = vector.broadcast %cst_180 : f32 to vector<1x16xf32>
      %619 = arith.addf %617, %618 : vector<1x16xf32>
      %620 = vector.extract_strided_slice %612 {offsets = [0, 8], sizes = [1, 4], strides = [1, 1]} : vector<1x16xf32> to vector<1x4xf32>
      %621 = math.tanh %620 : vector<1x4xf32>
      %622 = vector.extract_strided_slice %619 {offsets = [0, 4], sizes = [1, 4], strides = [1, 1]} : vector<1x16xf32> to vector<1x4xf32>
      %623 = arith.mulf %622, %550 : vector<1x4xf32>
      %624 = vector.extract_strided_slice %619 {offsets = [0, 0], sizes = [1, 4], strides = [1, 1]} : vector<1x16xf32> to vector<1x4xf32>
      %625 = arith.mulf %624, %621 : vector<1x4xf32>
      %626 = arith.addf %623, %625 : vector<1x4xf32>
      %627 = vector.extract_strided_slice %619 {offsets = [0, 12], sizes = [1, 4], strides = [1, 1]} : vector<1x16xf32> to vector<1x4xf32>
      %628 = math.tanh %626 : vector<1x4xf32>
      %629 = arith.mulf %627, %628 : vector<1x4xf32>
      %630 = arith.index_cast %557 : i32 to index
      %c4_181 = arith.constant 4 : index
      %631 = vector.load %arg16[%630, %c4_181] : memref<64x8xf32, #tpu.memory_space<vmem>>, vector<1x4xf32>
      tpu.vector_store %arg16[%630, %c4_181], %629 {strides = array<i32>} : memref<64x8xf32, #tpu.memory_space<vmem>>, vector<1x4xf32>,
      %c8_i32_182 = arith.constant 8 : i32
      %632 = arith.muli %arg19, %c8_i32_182 : i32
      %c5_i32 = arith.constant 5 : i32
      %633 = arith.addi %632, %c5_i32 : i32
      %634 = arith.index_cast %633 : i32 to index
      %c0_183 = arith.constant 0 : index
      %635 = vector.load %arg17[%634, %c0_183] : memref<64x16xf32, #tpu.memory_space<vmem>>, vector<1x16xf32>
      %636 = vector.extract_strided_slice %592 {offsets = [0, 0], sizes = [1, 1], strides = [1, 1]} : vector<1x4xf32> to vector<1x1xf32>
      %637 = vector.broadcast %636 : vector<1x1xf32> to vector<1x16xf32>
      %638 = arith.mulf %637, %67 : vector<1x16xf32>
      %639 = arith.addf %635, %638 : vector<1x16xf32>
      %640 = vector.extract_strided_slice %592 {offsets = [0, 1], sizes = [1, 1], strides = [1, 1]} : vector<1x4xf32> to vector<1x1xf32>
      %641 = vector.broadcast %640 : vector<1x1xf32> to vector<1x16xf32>
      %642 = arith.mulf %641, %68 : vector<1x16xf32>
      %643 = arith.addf %639, %642 : vector<1x16xf32>
      %644 = vector.extract_strided_slice %592 {offsets = [0, 2], sizes = [1, 1], strides = [1, 1]} : vector<1x4xf32> to vector<1x1xf32>
      %645 = vector.broadcast %644 : vector<1x1xf32> to vector<1x16xf32>
      %646 = arith.mulf %645, %69 : vector<1x16xf32>
      %647 = arith.addf %643, %646 : vector<1x16xf32>
      %648 = vector.extract_strided_slice %592 {offsets = [0, 3], sizes = [1, 1], strides = [1, 1]} : vector<1x4xf32> to vector<1x1xf32>
      %649 = vector.broadcast %648 : vector<1x1xf32> to vector<1x16xf32>
      %650 = arith.mulf %649, %70 : vector<1x16xf32>
      %651 = arith.addf %647, %650 : vector<1x16xf32>
      %cst_184 = arith.constant 5.000000e-01 : f32
      %652 = vector.broadcast %cst_184 : f32 to vector<1x16xf32>
      %653 = arith.mulf %652, %651 : vector<1x16xf32>
      %654 = math.tanh %653 : vector<1x16xf32>
      %cst_185 = arith.constant 5.000000e-01 : f32
      %655 = vector.broadcast %cst_185 : f32 to vector<1x16xf32>
      %656 = arith.mulf %655, %654 : vector<1x16xf32>
      %cst_186 = arith.constant 5.000000e-01 : f32
      %657 = vector.broadcast %cst_186 : f32 to vector<1x16xf32>
      %658 = arith.addf %656, %657 : vector<1x16xf32>
      %659 = vector.extract_strided_slice %651 {offsets = [0, 8], sizes = [1, 4], strides = [1, 1]} : vector<1x16xf32> to vector<1x4xf32>
      %660 = math.tanh %659 : vector<1x4xf32>
      %661 = vector.extract_strided_slice %658 {offsets = [0, 4], sizes = [1, 4], strides = [1, 1]} : vector<1x16xf32> to vector<1x4xf32>
      %662 = arith.mulf %661, %589 : vector<1x4xf32>
      %663 = vector.extract_strided_slice %658 {offsets = [0, 0], sizes = [1, 4], strides = [1, 1]} : vector<1x16xf32> to vector<1x4xf32>
      %664 = arith.mulf %663, %660 : vector<1x4xf32>
      %665 = arith.addf %662, %664 : vector<1x4xf32>
      %666 = vector.extract_strided_slice %658 {offsets = [0, 12], sizes = [1, 4], strides = [1, 1]} : vector<1x16xf32> to vector<1x4xf32>
      %667 = math.tanh %665 : vector<1x4xf32>
      %668 = arith.mulf %666, %667 : vector<1x4xf32>
      %669 = arith.index_cast %633 : i32 to index
      %c0_187 = arith.constant 0 : index
      %670 = vector.load %arg16[%669, %c0_187] : memref<64x8xf32, #tpu.memory_space<vmem>>, vector<1x4xf32>
      tpu.vector_store %arg16[%669, %c0_187], %668 {strides = array<i32>} : memref<64x8xf32, #tpu.memory_space<vmem>>, vector<1x4xf32>,
      %671 = arith.index_cast %633 : i32 to index
      %c0_188 = arith.constant 0 : index
      %672 = vector.load %arg18[%671, %c0_188] : memref<64x16xf32, #tpu.memory_space<vmem>>, vector<1x16xf32>
      %673 = vector.extract_strided_slice %629 {offsets = [0, 0], sizes = [1, 1], strides = [1, 1]} : vector<1x4xf32> to vector<1x1xf32>
      %674 = vector.broadcast %673 : vector<1x1xf32> to vector<1x16xf32>
      %675 = arith.mulf %674, %67 : vector<1x16xf32>
      %676 = arith.addf %672, %675 : vector<1x16xf32>
      %677 = vector.extract_strided_slice %629 {offsets = [0, 1], sizes = [1, 1], strides = [1, 1]} : vector<1x4xf32> to vector<1x1xf32>
      %678 = vector.broadcast %677 : vector<1x1xf32> to vector<1x16xf32>
      %679 = arith.mulf %678, %68 : vector<1x16xf32>
      %680 = arith.addf %676, %679 : vector<1x16xf32>
      %681 = vector.extract_strided_slice %629 {offsets = [0, 2], sizes = [1, 1], strides = [1, 1]} : vector<1x4xf32> to vector<1x1xf32>
      %682 = vector.broadcast %681 : vector<1x1xf32> to vector<1x16xf32>
      %683 = arith.mulf %682, %69 : vector<1x16xf32>
      %684 = arith.addf %680, %683 : vector<1x16xf32>
      %685 = vector.extract_strided_slice %629 {offsets = [0, 3], sizes = [1, 1], strides = [1, 1]} : vector<1x4xf32> to vector<1x1xf32>
      %686 = vector.broadcast %685 : vector<1x1xf32> to vector<1x16xf32>
      %687 = arith.mulf %686, %70 : vector<1x16xf32>
      %688 = arith.addf %684, %687 : vector<1x16xf32>
      %cst_189 = arith.constant 5.000000e-01 : f32
      %689 = vector.broadcast %cst_189 : f32 to vector<1x16xf32>
      %690 = arith.mulf %689, %688 : vector<1x16xf32>
      %691 = math.tanh %690 : vector<1x16xf32>
      %cst_190 = arith.constant 5.000000e-01 : f32
      %692 = vector.broadcast %cst_190 : f32 to vector<1x16xf32>
      %693 = arith.mulf %692, %691 : vector<1x16xf32>
      %cst_191 = arith.constant 5.000000e-01 : f32
      %694 = vector.broadcast %cst_191 : f32 to vector<1x16xf32>
      %695 = arith.addf %693, %694 : vector<1x16xf32>
      %696 = vector.extract_strided_slice %688 {offsets = [0, 8], sizes = [1, 4], strides = [1, 1]} : vector<1x16xf32> to vector<1x4xf32>
      %697 = math.tanh %696 : vector<1x4xf32>
      %698 = vector.extract_strided_slice %695 {offsets = [0, 4], sizes = [1, 4], strides = [1, 1]} : vector<1x16xf32> to vector<1x4xf32>
      %699 = arith.mulf %698, %626 : vector<1x4xf32>
      %700 = vector.extract_strided_slice %695 {offsets = [0, 0], sizes = [1, 4], strides = [1, 1]} : vector<1x16xf32> to vector<1x4xf32>
      %701 = arith.mulf %700, %697 : vector<1x4xf32>
      %702 = arith.addf %699, %701 : vector<1x4xf32>
      %703 = vector.extract_strided_slice %695 {offsets = [0, 12], sizes = [1, 4], strides = [1, 1]} : vector<1x16xf32> to vector<1x4xf32>
      %704 = math.tanh %702 : vector<1x4xf32>
      %705 = arith.mulf %703, %704 : vector<1x4xf32>
      %706 = arith.index_cast %633 : i32 to index
      %c4_192 = arith.constant 4 : index
      %707 = vector.load %arg16[%706, %c4_192] : memref<64x8xf32, #tpu.memory_space<vmem>>, vector<1x4xf32>
      tpu.vector_store %arg16[%706, %c4_192], %705 {strides = array<i32>} : memref<64x8xf32, #tpu.memory_space<vmem>>, vector<1x4xf32>,
      %c8_i32_193 = arith.constant 8 : i32
      %708 = arith.muli %arg19, %c8_i32_193 : i32
      %c6_i32 = arith.constant 6 : i32
      %709 = arith.addi %708, %c6_i32 : i32
      %710 = arith.index_cast %709 : i32 to index
      %c0_194 = arith.constant 0 : index
      %711 = vector.load %arg17[%710, %c0_194] : memref<64x16xf32, #tpu.memory_space<vmem>>, vector<1x16xf32>
      %712 = vector.extract_strided_slice %668 {offsets = [0, 0], sizes = [1, 1], strides = [1, 1]} : vector<1x4xf32> to vector<1x1xf32>
      %713 = vector.broadcast %712 : vector<1x1xf32> to vector<1x16xf32>
      %714 = arith.mulf %713, %67 : vector<1x16xf32>
      %715 = arith.addf %711, %714 : vector<1x16xf32>
      %716 = vector.extract_strided_slice %668 {offsets = [0, 1], sizes = [1, 1], strides = [1, 1]} : vector<1x4xf32> to vector<1x1xf32>
      %717 = vector.broadcast %716 : vector<1x1xf32> to vector<1x16xf32>
      %718 = arith.mulf %717, %68 : vector<1x16xf32>
      %719 = arith.addf %715, %718 : vector<1x16xf32>
      %720 = vector.extract_strided_slice %668 {offsets = [0, 2], sizes = [1, 1], strides = [1, 1]} : vector<1x4xf32> to vector<1x1xf32>
      %721 = vector.broadcast %720 : vector<1x1xf32> to vector<1x16xf32>
      %722 = arith.mulf %721, %69 : vector<1x16xf32>
      %723 = arith.addf %719, %722 : vector<1x16xf32>
      %724 = vector.extract_strided_slice %668 {offsets = [0, 3], sizes = [1, 1], strides = [1, 1]} : vector<1x4xf32> to vector<1x1xf32>
      %725 = vector.broadcast %724 : vector<1x1xf32> to vector<1x16xf32>
      %726 = arith.mulf %725, %70 : vector<1x16xf32>
      %727 = arith.addf %723, %726 : vector<1x16xf32>
      %cst_195 = arith.constant 5.000000e-01 : f32
      %728 = vector.broadcast %cst_195 : f32 to vector<1x16xf32>
      %729 = arith.mulf %728, %727 : vector<1x16xf32>
      %730 = math.tanh %729 : vector<1x16xf32>
      %cst_196 = arith.constant 5.000000e-01 : f32
      %731 = vector.broadcast %cst_196 : f32 to vector<1x16xf32>
      %732 = arith.mulf %731, %730 : vector<1x16xf32>
      %cst_197 = arith.constant 5.000000e-01 : f32
      %733 = vector.broadcast %cst_197 : f32 to vector<1x16xf32>
      %734 = arith.addf %732, %733 : vector<1x16xf32>
      %735 = vector.extract_strided_slice %727 {offsets = [0, 8], sizes = [1, 4], strides = [1, 1]} : vector<1x16xf32> to vector<1x4xf32>
      %736 = math.tanh %735 : vector<1x4xf32>
      %737 = vector.extract_strided_slice %734 {offsets = [0, 4], sizes = [1, 4], strides = [1, 1]} : vector<1x16xf32> to vector<1x4xf32>
      %738 = arith.mulf %737, %665 : vector<1x4xf32>
      %739 = vector.extract_strided_slice %734 {offsets = [0, 0], sizes = [1, 4], strides = [1, 1]} : vector<1x16xf32> to vector<1x4xf32>
      %740 = arith.mulf %739, %736 : vector<1x4xf32>
      %741 = arith.addf %738, %740 : vector<1x4xf32>
      %742 = vector.extract_strided_slice %734 {offsets = [0, 12], sizes = [1, 4], strides = [1, 1]} : vector<1x16xf32> to vector<1x4xf32>
      %743 = math.tanh %741 : vector<1x4xf32>
      %744 = arith.mulf %742, %743 : vector<1x4xf32>
      %745 = arith.index_cast %709 : i32 to index
      %c0_198 = arith.constant 0 : index
      %746 = vector.load %arg16[%745, %c0_198] : memref<64x8xf32, #tpu.memory_space<vmem>>, vector<1x4xf32>
      tpu.vector_store %arg16[%745, %c0_198], %744 {strides = array<i32>} : memref<64x8xf32, #tpu.memory_space<vmem>>, vector<1x4xf32>,
      %747 = arith.index_cast %709 : i32 to index
      %c0_199 = arith.constant 0 : index
      %748 = vector.load %arg18[%747, %c0_199] : memref<64x16xf32, #tpu.memory_space<vmem>>, vector<1x16xf32>
      %749 = vector.extract_strided_slice %705 {offsets = [0, 0], sizes = [1, 1], strides = [1, 1]} : vector<1x4xf32> to vector<1x1xf32>
      %750 = vector.broadcast %749 : vector<1x1xf32> to vector<1x16xf32>
      %751 = arith.mulf %750, %67 : vector<1x16xf32>
      %752 = arith.addf %748, %751 : vector<1x16xf32>
      %753 = vector.extract_strided_slice %705 {offsets = [0, 1], sizes = [1, 1], strides = [1, 1]} : vector<1x4xf32> to vector<1x1xf32>
      %754 = vector.broadcast %753 : vector<1x1xf32> to vector<1x16xf32>
      %755 = arith.mulf %754, %68 : vector<1x16xf32>
      %756 = arith.addf %752, %755 : vector<1x16xf32>
      %757 = vector.extract_strided_slice %705 {offsets = [0, 2], sizes = [1, 1], strides = [1, 1]} : vector<1x4xf32> to vector<1x1xf32>
      %758 = vector.broadcast %757 : vector<1x1xf32> to vector<1x16xf32>
      %759 = arith.mulf %758, %69 : vector<1x16xf32>
      %760 = arith.addf %756, %759 : vector<1x16xf32>
      %761 = vector.extract_strided_slice %705 {offsets = [0, 3], sizes = [1, 1], strides = [1, 1]} : vector<1x4xf32> to vector<1x1xf32>
      %762 = vector.broadcast %761 : vector<1x1xf32> to vector<1x16xf32>
      %763 = arith.mulf %762, %70 : vector<1x16xf32>
      %764 = arith.addf %760, %763 : vector<1x16xf32>
      %cst_200 = arith.constant 5.000000e-01 : f32
      %765 = vector.broadcast %cst_200 : f32 to vector<1x16xf32>
      %766 = arith.mulf %765, %764 : vector<1x16xf32>
      %767 = math.tanh %766 : vector<1x16xf32>
      %cst_201 = arith.constant 5.000000e-01 : f32
      %768 = vector.broadcast %cst_201 : f32 to vector<1x16xf32>
      %769 = arith.mulf %768, %767 : vector<1x16xf32>
      %cst_202 = arith.constant 5.000000e-01 : f32
      %770 = vector.broadcast %cst_202 : f32 to vector<1x16xf32>
      %771 = arith.addf %769, %770 : vector<1x16xf32>
      %772 = vector.extract_strided_slice %764 {offsets = [0, 8], sizes = [1, 4], strides = [1, 1]} : vector<1x16xf32> to vector<1x4xf32>
      %773 = math.tanh %772 : vector<1x4xf32>
      %774 = vector.extract_strided_slice %771 {offsets = [0, 4], sizes = [1, 4], strides = [1, 1]} : vector<1x16xf32> to vector<1x4xf32>
      %775 = arith.mulf %774, %702 : vector<1x4xf32>
      %776 = vector.extract_strided_slice %771 {offsets = [0, 0], sizes = [1, 4], strides = [1, 1]} : vector<1x16xf32> to vector<1x4xf32>
      %777 = arith.mulf %776, %773 : vector<1x4xf32>
      %778 = arith.addf %775, %777 : vector<1x4xf32>
      %779 = vector.extract_strided_slice %771 {offsets = [0, 12], sizes = [1, 4], strides = [1, 1]} : vector<1x16xf32> to vector<1x4xf32>
      %780 = math.tanh %778 : vector<1x4xf32>
      %781 = arith.mulf %779, %780 : vector<1x4xf32>
      %782 = arith.index_cast %709 : i32 to index
      %c4_203 = arith.constant 4 : index
      %783 = vector.load %arg16[%782, %c4_203] : memref<64x8xf32, #tpu.memory_space<vmem>>, vector<1x4xf32>
      tpu.vector_store %arg16[%782, %c4_203], %781 {strides = array<i32>} : memref<64x8xf32, #tpu.memory_space<vmem>>, vector<1x4xf32>,
      %c8_i32_204 = arith.constant 8 : i32
      %784 = arith.muli %arg19, %c8_i32_204 : i32
      %c7_i32 = arith.constant 7 : i32
      %785 = arith.addi %784, %c7_i32 : i32
      %786 = arith.index_cast %785 : i32 to index
      %c0_205 = arith.constant 0 : index
      %787 = vector.load %arg17[%786, %c0_205] : memref<64x16xf32, #tpu.memory_space<vmem>>, vector<1x16xf32>
      %788 = vector.extract_strided_slice %744 {offsets = [0, 0], sizes = [1, 1], strides = [1, 1]} : vector<1x4xf32> to vector<1x1xf32>
      %789 = vector.broadcast %788 : vector<1x1xf32> to vector<1x16xf32>
      %790 = arith.mulf %789, %67 : vector<1x16xf32>
      %791 = arith.addf %787, %790 : vector<1x16xf32>
      %792 = vector.extract_strided_slice %744 {offsets = [0, 1], sizes = [1, 1], strides = [1, 1]} : vector<1x4xf32> to vector<1x1xf32>
      %793 = vector.broadcast %792 : vector<1x1xf32> to vector<1x16xf32>
      %794 = arith.mulf %793, %68 : vector<1x16xf32>
      %795 = arith.addf %791, %794 : vector<1x16xf32>
      %796 = vector.extract_strided_slice %744 {offsets = [0, 2], sizes = [1, 1], strides = [1, 1]} : vector<1x4xf32> to vector<1x1xf32>
      %797 = vector.broadcast %796 : vector<1x1xf32> to vector<1x16xf32>
      %798 = arith.mulf %797, %69 : vector<1x16xf32>
      %799 = arith.addf %795, %798 : vector<1x16xf32>
      %800 = vector.extract_strided_slice %744 {offsets = [0, 3], sizes = [1, 1], strides = [1, 1]} : vector<1x4xf32> to vector<1x1xf32>
      %801 = vector.broadcast %800 : vector<1x1xf32> to vector<1x16xf32>
      %802 = arith.mulf %801, %70 : vector<1x16xf32>
      %803 = arith.addf %799, %802 : vector<1x16xf32>
      %cst_206 = arith.constant 5.000000e-01 : f32
      %804 = vector.broadcast %cst_206 : f32 to vector<1x16xf32>
      %805 = arith.mulf %804, %803 : vector<1x16xf32>
      %806 = math.tanh %805 : vector<1x16xf32>
      %cst_207 = arith.constant 5.000000e-01 : f32
      %807 = vector.broadcast %cst_207 : f32 to vector<1x16xf32>
      %808 = arith.mulf %807, %806 : vector<1x16xf32>
      %cst_208 = arith.constant 5.000000e-01 : f32
      %809 = vector.broadcast %cst_208 : f32 to vector<1x16xf32>
      %810 = arith.addf %808, %809 : vector<1x16xf32>
      %811 = vector.extract_strided_slice %803 {offsets = [0, 8], sizes = [1, 4], strides = [1, 1]} : vector<1x16xf32> to vector<1x4xf32>
      %812 = math.tanh %811 : vector<1x4xf32>
      %813 = vector.extract_strided_slice %810 {offsets = [0, 4], sizes = [1, 4], strides = [1, 1]} : vector<1x16xf32> to vector<1x4xf32>
      %814 = arith.mulf %813, %741 : vector<1x4xf32>
      %815 = vector.extract_strided_slice %810 {offsets = [0, 0], sizes = [1, 4], strides = [1, 1]} : vector<1x16xf32> to vector<1x4xf32>
      %816 = arith.mulf %815, %812 : vector<1x4xf32>
      %817 = arith.addf %814, %816 : vector<1x4xf32>
      %818 = vector.extract_strided_slice %810 {offsets = [0, 12], sizes = [1, 4], strides = [1, 1]} : vector<1x16xf32> to vector<1x4xf32>
      %819 = math.tanh %817 : vector<1x4xf32>
      %820 = arith.mulf %818, %819 : vector<1x4xf32>
      %821 = arith.index_cast %785 : i32 to index
      %c0_209 = arith.constant 0 : index
      %822 = vector.load %arg16[%821, %c0_209] : memref<64x8xf32, #tpu.memory_space<vmem>>, vector<1x4xf32>
      tpu.vector_store %arg16[%821, %c0_209], %820 {strides = array<i32>} : memref<64x8xf32, #tpu.memory_space<vmem>>, vector<1x4xf32>,
      %823 = arith.index_cast %785 : i32 to index
      %c0_210 = arith.constant 0 : index
      %824 = vector.load %arg18[%823, %c0_210] : memref<64x16xf32, #tpu.memory_space<vmem>>, vector<1x16xf32>
      %825 = vector.extract_strided_slice %781 {offsets = [0, 0], sizes = [1, 1], strides = [1, 1]} : vector<1x4xf32> to vector<1x1xf32>
      %826 = vector.broadcast %825 : vector<1x1xf32> to vector<1x16xf32>
      %827 = arith.mulf %826, %67 : vector<1x16xf32>
      %828 = arith.addf %824, %827 : vector<1x16xf32>
      %829 = vector.extract_strided_slice %781 {offsets = [0, 1], sizes = [1, 1], strides = [1, 1]} : vector<1x4xf32> to vector<1x1xf32>
      %830 = vector.broadcast %829 : vector<1x1xf32> to vector<1x16xf32>
      %831 = arith.mulf %830, %68 : vector<1x16xf32>
      %832 = arith.addf %828, %831 : vector<1x16xf32>
      %833 = vector.extract_strided_slice %781 {offsets = [0, 2], sizes = [1, 1], strides = [1, 1]} : vector<1x4xf32> to vector<1x1xf32>
      %834 = vector.broadcast %833 : vector<1x1xf32> to vector<1x16xf32>
      %835 = arith.mulf %834, %69 : vector<1x16xf32>
      %836 = arith.addf %832, %835 : vector<1x16xf32>
      %837 = vector.extract_strided_slice %781 {offsets = [0, 3], sizes = [1, 1], strides = [1, 1]} : vector<1x4xf32> to vector<1x1xf32>
      %838 = vector.broadcast %837 : vector<1x1xf32> to vector<1x16xf32>
      %839 = arith.mulf %838, %70 : vector<1x16xf32>
      %840 = arith.addf %836, %839 : vector<1x16xf32>
      %cst_211 = arith.constant 5.000000e-01 : f32
      %841 = vector.broadcast %cst_211 : f32 to vector<1x16xf32>
      %842 = arith.mulf %841, %840 : vector<1x16xf32>
      %843 = math.tanh %842 : vector<1x16xf32>
      %cst_212 = arith.constant 5.000000e-01 : f32
      %844 = vector.broadcast %cst_212 : f32 to vector<1x16xf32>
      %845 = arith.mulf %844, %843 : vector<1x16xf32>
      %cst_213 = arith.constant 5.000000e-01 : f32
      %846 = vector.broadcast %cst_213 : f32 to vector<1x16xf32>
      %847 = arith.addf %845, %846 : vector<1x16xf32>
      %848 = vector.extract_strided_slice %840 {offsets = [0, 8], sizes = [1, 4], strides = [1, 1]} : vector<1x16xf32> to vector<1x4xf32>
      %849 = math.tanh %848 : vector<1x4xf32>
      %850 = vector.extract_strided_slice %847 {offsets = [0, 4], sizes = [1, 4], strides = [1, 1]} : vector<1x16xf32> to vector<1x4xf32>
      %851 = arith.mulf %850, %778 : vector<1x4xf32>
      %852 = vector.extract_strided_slice %847 {offsets = [0, 0], sizes = [1, 4], strides = [1, 1]} : vector<1x16xf32> to vector<1x4xf32>
      %853 = arith.mulf %852, %849 : vector<1x4xf32>
      %854 = arith.addf %851, %853 : vector<1x4xf32>
      %855 = vector.extract_strided_slice %847 {offsets = [0, 12], sizes = [1, 4], strides = [1, 1]} : vector<1x16xf32> to vector<1x4xf32>
      %856 = math.tanh %854 : vector<1x4xf32>
      %857 = arith.mulf %855, %856 : vector<1x4xf32>
      %858 = arith.index_cast %785 : i32 to index
      %c4_214 = arith.constant 4 : index
      %859 = vector.load %arg16[%858, %c4_214] : memref<64x8xf32, #tpu.memory_space<vmem>>, vector<1x4xf32>
      tpu.vector_store %arg16[%858, %c4_214], %857 {strides = array<i32>} : memref<64x8xf32, #tpu.memory_space<vmem>>, vector<1x4xf32>,
      scf.yield %820, %857, %817, %854 : vector<1x4xf32>, vector<1x4xf32>, vector<1x4xf32>, vector<1x4xf32>
    }
    %c8_i32_47 = arith.constant 8 : i32
    %c0_48 = arith.constant 0 : index
    %c0_49 = arith.constant 0 : index
    %77 = vector.load %arg13[%c0_48, %c0_49] : memref<2x4xf32, #tpu.memory_space<vmem>>, vector<1x4xf32>
    tpu.vector_store %arg13[%c0_48, %c0_49], %76#0 {strides = array<i32>} : memref<2x4xf32, #tpu.memory_space<vmem>>, vector<1x4xf32>,
    %c0_50 = arith.constant 0 : index
    %c0_51 = arith.constant 0 : index
    %78 = vector.load %arg14[%c0_50, %c0_51] : memref<2x4xf32, #tpu.memory_space<vmem>>, vector<1x4xf32>
    tpu.vector_store %arg14[%c0_50, %c0_51], %76#2 {strides = array<i32>} : memref<2x4xf32, #tpu.memory_space<vmem>>, vector<1x4xf32>,
    %c1_52 = arith.constant 1 : index
    %c0_53 = arith.constant 0 : index
    %79 = vector.load %arg13[%c1_52, %c0_53] : memref<2x4xf32, #tpu.memory_space<vmem>>, vector<1x4xf32>
    tpu.vector_store %arg13[%c1_52, %c0_53], %76#1 {strides = array<i32>} : memref<2x4xf32, #tpu.memory_space<vmem>>, vector<1x4xf32>,
    %c1_54 = arith.constant 1 : index
    %c0_55 = arith.constant 0 : index
    %80 = vector.load %arg14[%c1_54, %c0_55] : memref<2x4xf32, #tpu.memory_space<vmem>>, vector<1x4xf32>
    tpu.vector_store %arg14[%c1_54, %c0_55], %76#3 {strides = array<i32>} : memref<2x4xf32, #tpu.memory_space<vmem>>, vector<1x4xf32>,
    %c0_56 = arith.constant 0 : index
    %c0_57 = arith.constant 0 : index
    %81 = vector.load %arg4[%c0_56, %c0_57] : memref<64x32xf32, #tpu.memory_space<vmem>>, vector<64x32xf32>
    %cst_58 = arith.constant 0.000000e+00 : f32
    %82 = vector.broadcast %cst_58 : f32 to vector<8x32xf32>
    %c0_59 = arith.constant 0 : index
    %c0_60 = arith.constant 0 : index
    %83 = vector.load %arg16[%c0_59, %c0_60] : memref<64x8xf32, #tpu.memory_space<vmem>>, vector<8x8xf32>
    %cst_61 = arith.constant dense<0xFF800000> : vector<8xf32>
    %84 = vector.multi_reduction <maximumf>, %83, %cst_61 [1] : vector<8x8xf32> to vector<8xf32>
    %85 = vector.shape_cast %84 : vector<8xf32> to vector<8x1xf32>
    %86 = vector.broadcast %85 : vector<8x1xf32> to vector<8x8xf32>
    %87 = arith.subf %83, %86 : vector<8x8xf32>
    %88 = math.exp %87 : vector<8x8xf32>
    %cst_62 = arith.constant dense<0.000000e+00> : vector<8xf32>
    %89 = vector.multi_reduction <add>, %88, %cst_62 [1] : vector<8x8xf32> to vector<8xf32>
    %90 = vector.shape_cast %89 : vector<8xf32> to vector<8x1xf32>
    %91 = vector.broadcast %90 : vector<8x1xf32> to vector<8x8xf32>
    %92 = arith.divf %88, %91 : vector<8x8xf32>
    %93 = vector.extract_strided_slice %2 {offsets = [0, 64], sizes = [8, 16], strides = [1, 1]} : vector<16x128xf32> to vector<8x16xf32>
    %cst_63 = arith.constant dense<0.000000e+00> : vector<8x16xf32>
    %94 = tpu.matmul %92, %93, %cst_63 {dimension_numbers = #tpu.dot_dimension_numbers<[1], [0], [0], [1], [0, 0, 1, 1], [], []>} : vector<8x8xf32>, vector<8x16xf32>, vector<8x16xf32> -> vector<8x16xf32>
    %95 = vector.extract_strided_slice %81 {offsets = [0, 0], sizes = [16, 32], strides = [1, 1]} : vector<64x32xf32> to vector<16x32xf32>
    %cst_64 = arith.constant dense<0.000000e+00> : vector<8x32xf32>
    %96 = tpu.matmul %94, %95, %cst_64 {dimension_numbers = #tpu.dot_dimension_numbers<[1], [0], [0], [1], [0, 0, 1, 1], [], []>} : vector<8x16xf32>, vector<16x32xf32>, vector<8x32xf32> -> vector<8x32xf32>
    %97 = arith.addf %82, %96 : vector<8x32xf32>
    %c16_65 = arith.constant 16 : index
    %c0_66 = arith.constant 0 : index
    %98 = vector.load %arg16[%c16_65, %c0_66] : memref<64x8xf32, #tpu.memory_space<vmem>>, vector<8x8xf32>
    %cst_67 = arith.constant dense<0xFF800000> : vector<8xf32>
    %99 = vector.multi_reduction <maximumf>, %98, %cst_67 [1] : vector<8x8xf32> to vector<8xf32>
    %100 = vector.shape_cast %99 : vector<8xf32> to vector<8x1xf32>
    %101 = vector.broadcast %100 : vector<8x1xf32> to vector<8x8xf32>
    %102 = arith.subf %98, %101 : vector<8x8xf32>
    %103 = math.exp %102 : vector<8x8xf32>
    %cst_68 = arith.constant dense<0.000000e+00> : vector<8xf32>
    %104 = vector.multi_reduction <add>, %103, %cst_68 [1] : vector<8x8xf32> to vector<8xf32>
    %105 = vector.shape_cast %104 : vector<8xf32> to vector<8x1xf32>
    %106 = vector.broadcast %105 : vector<8x1xf32> to vector<8x8xf32>
    %107 = arith.divf %103, %106 : vector<8x8xf32>
    %108 = vector.extract_strided_slice %2 {offsets = [0, 80], sizes = [8, 16], strides = [1, 1]} : vector<16x128xf32> to vector<8x16xf32>
    %cst_69 = arith.constant dense<0.000000e+00> : vector<8x16xf32>
    %109 = tpu.matmul %107, %108, %cst_69 {dimension_numbers = #tpu.dot_dimension_numbers<[1], [0], [0], [1], [0, 0, 1, 1], [], []>} : vector<8x8xf32>, vector<8x16xf32>, vector<8x16xf32> -> vector<8x16xf32>
    %110 = vector.extract_strided_slice %81 {offsets = [16, 0], sizes = [16, 32], strides = [1, 1]} : vector<64x32xf32> to vector<16x32xf32>
    %cst_70 = arith.constant dense<0.000000e+00> : vector<8x32xf32>
    %111 = tpu.matmul %109, %110, %cst_70 {dimension_numbers = #tpu.dot_dimension_numbers<[1], [0], [0], [1], [0, 0, 1, 1], [], []>} : vector<8x16xf32>, vector<16x32xf32>, vector<8x32xf32> -> vector<8x32xf32>
    %112 = arith.addf %97, %111 : vector<8x32xf32>
    %c32_71 = arith.constant 32 : index
    %c0_72 = arith.constant 0 : index
    %113 = vector.load %arg16[%c32_71, %c0_72] : memref<64x8xf32, #tpu.memory_space<vmem>>, vector<8x8xf32>
    %cst_73 = arith.constant dense<0xFF800000> : vector<8xf32>
    %114 = vector.multi_reduction <maximumf>, %113, %cst_73 [1] : vector<8x8xf32> to vector<8xf32>
    %115 = vector.shape_cast %114 : vector<8xf32> to vector<8x1xf32>
    %116 = vector.broadcast %115 : vector<8x1xf32> to vector<8x8xf32>
    %117 = arith.subf %113, %116 : vector<8x8xf32>
    %118 = math.exp %117 : vector<8x8xf32>
    %cst_74 = arith.constant dense<0.000000e+00> : vector<8xf32>
    %119 = vector.multi_reduction <add>, %118, %cst_74 [1] : vector<8x8xf32> to vector<8xf32>
    %120 = vector.shape_cast %119 : vector<8xf32> to vector<8x1xf32>
    %121 = vector.broadcast %120 : vector<8x1xf32> to vector<8x8xf32>
    %122 = arith.divf %118, %121 : vector<8x8xf32>
    %123 = vector.extract_strided_slice %2 {offsets = [0, 96], sizes = [8, 16], strides = [1, 1]} : vector<16x128xf32> to vector<8x16xf32>
    %cst_75 = arith.constant dense<0.000000e+00> : vector<8x16xf32>
    %124 = tpu.matmul %122, %123, %cst_75 {dimension_numbers = #tpu.dot_dimension_numbers<[1], [0], [0], [1], [0, 0, 1, 1], [], []>} : vector<8x8xf32>, vector<8x16xf32>, vector<8x16xf32> -> vector<8x16xf32>
    %125 = vector.extract_strided_slice %81 {offsets = [32, 0], sizes = [16, 32], strides = [1, 1]} : vector<64x32xf32> to vector<16x32xf32>
    %cst_76 = arith.constant dense<0.000000e+00> : vector<8x32xf32>
    %126 = tpu.matmul %124, %125, %cst_76 {dimension_numbers = #tpu.dot_dimension_numbers<[1], [0], [0], [1], [0, 0, 1, 1], [], []>} : vector<8x16xf32>, vector<16x32xf32>, vector<8x32xf32> -> vector<8x32xf32>
    %127 = arith.addf %112, %126 : vector<8x32xf32>
    %c48_77 = arith.constant 48 : index
    %c0_78 = arith.constant 0 : index
    %128 = vector.load %arg16[%c48_77, %c0_78] : memref<64x8xf32, #tpu.memory_space<vmem>>, vector<8x8xf32>
    %cst_79 = arith.constant dense<0xFF800000> : vector<8xf32>
    %129 = vector.multi_reduction <maximumf>, %128, %cst_79 [1] : vector<8x8xf32> to vector<8xf32>
    %130 = vector.shape_cast %129 : vector<8xf32> to vector<8x1xf32>
    %131 = vector.broadcast %130 : vector<8x1xf32> to vector<8x8xf32>
    %132 = arith.subf %128, %131 : vector<8x8xf32>
    %133 = math.exp %132 : vector<8x8xf32>
    %cst_80 = arith.constant dense<0.000000e+00> : vector<8xf32>
    %134 = vector.multi_reduction <add>, %133, %cst_80 [1] : vector<8x8xf32> to vector<8xf32>
    %135 = vector.shape_cast %134 : vector<8xf32> to vector<8x1xf32>
    %136 = vector.broadcast %135 : vector<8x1xf32> to vector<8x8xf32>
    %137 = arith.divf %133, %136 : vector<8x8xf32>
    %138 = vector.extract_strided_slice %2 {offsets = [0, 112], sizes = [8, 16], strides = [1, 1]} : vector<16x128xf32> to vector<8x16xf32>
    %cst_81 = arith.constant dense<0.000000e+00> : vector<8x16xf32>
    %139 = tpu.matmul %137, %138, %cst_81 {dimension_numbers = #tpu.dot_dimension_numbers<[1], [0], [0], [1], [0, 0, 1, 1], [], []>} : vector<8x8xf32>, vector<8x16xf32>, vector<8x16xf32> -> vector<8x16xf32>
    %140 = vector.extract_strided_slice %81 {offsets = [48, 0], sizes = [16, 32], strides = [1, 1]} : vector<64x32xf32> to vector<16x32xf32>
    %cst_82 = arith.constant dense<0.000000e+00> : vector<8x32xf32>
    %141 = tpu.matmul %139, %140, %cst_82 {dimension_numbers = #tpu.dot_dimension_numbers<[1], [0], [0], [1], [0, 0, 1, 1], [], []>} : vector<8x16xf32>, vector<16x32xf32>, vector<8x32xf32> -> vector<8x32xf32>
    %142 = arith.addf %127, %141 : vector<8x32xf32>
    %c0_83 = arith.constant 0 : index
    %c0_84 = arith.constant 0 : index
    %143 = vector.load %arg0[%c0_83, %c0_84] : memref<16x32xf32, #tpu.memory_space<vmem>>, vector<8x32xf32>
    %144 = arith.addf %142, %143 : vector<8x32xf32>
    %145 = vector.shape_cast %144 : vector<8x32xf32> to vector<1x8x32xf32>
    %cst_85 = arith.constant dense<0.000000e+00> : vector<1xf32>
    %146 = vector.multi_reduction <add>, %145, %cst_85 [1, 2] : vector<1x8x32xf32> to vector<1xf32>
    %147 = vector.shape_cast %146 : vector<1xf32> to vector<1x1x1xf32>
    %148 = vector.extract %147[0, 0, 0] : f32 from vector<1x1x1xf32>
    %cst_86 = arith.constant 2.560000e+02 : f32
    %149 = arith.divf %148, %cst_86 : f32
    %150 = vector.broadcast %149 : f32 to vector<8x32xf32>
    %151 = arith.subf %144, %150 : vector<8x32xf32>
    %152 = arith.mulf %151, %151 : vector<8x32xf32>
    %153 = vector.shape_cast %152 : vector<8x32xf32> to vector<1x8x32xf32>
    %cst_87 = arith.constant dense<0.000000e+00> : vector<1xf32>
    %154 = vector.multi_reduction <add>, %153, %cst_87 [1, 2] : vector<1x8x32xf32> to vector<1xf32>
    %155 = vector.shape_cast %154 : vector<1xf32> to vector<1x1x1xf32>
    %156 = vector.extract %155[0, 0, 0] : f32 from vector<1x1x1xf32>
    %cst_88 = arith.constant 2.550000e+02 : f32
    %157 = arith.divf %156, %cst_88 : f32
    %158 = vector.broadcast %149 : f32 to vector<8x32xf32>
    %159 = arith.subf %144, %158 : vector<8x32xf32>
    %cst_89 = arith.constant 9.99999974E-6 : f32
    %160 = arith.addf %157, %cst_89 : f32
    %161 = math.rsqrt %160 : f32
    %162 = vector.broadcast %161 : f32 to vector<8x32xf32>
    %163 = arith.mulf %159, %162 : vector<8x32xf32>
    %c0_90 = arith.constant 0 : index
    %c0_91 = arith.constant 0 : index
    %c0_92 = arith.constant 0 : index
    %164 = vector.load %arg12[%c0_90, %c0_91, %c0_92] : memref<2x8x32xf32, #tpu.memory_space<vmem>>, vector<1x8x32xf32>
    %165 = vector.shape_cast %164 : vector<1x8x32xf32> to vector<8x32xf32>
    %166 = vector.shape_cast %163 : vector<8x32xf32> to vector<1x8x32xf32>
    tpu.vector_store %arg12[%c0_90, %c0_91, %c0_92], %166 {strides = array<i32>} : memref<2x8x32xf32, #tpu.memory_space<vmem>>, vector<1x8x32xf32>,
    %cst_93 = arith.constant 0.000000e+00 : f32
    %167 = vector.broadcast %cst_93 : f32 to vector<8x32xf32>
    %c8_94 = arith.constant 8 : index
    %c0_95 = arith.constant 0 : index
    %168 = vector.load %arg16[%c8_94, %c0_95] : memref<64x8xf32, #tpu.memory_space<vmem>>, vector<8x8xf32>
    %cst_96 = arith.constant dense<0xFF800000> : vector<8xf32>
    %169 = vector.multi_reduction <maximumf>, %168, %cst_96 [1] : vector<8x8xf32> to vector<8xf32>
    %170 = vector.shape_cast %169 : vector<8xf32> to vector<8x1xf32>
    %171 = vector.broadcast %170 : vector<8x1xf32> to vector<8x8xf32>
    %172 = arith.subf %168, %171 : vector<8x8xf32>
    %173 = math.exp %172 : vector<8x8xf32>
    %cst_97 = arith.constant dense<0.000000e+00> : vector<8xf32>
    %174 = vector.multi_reduction <add>, %173, %cst_97 [1] : vector<8x8xf32> to vector<8xf32>
    %175 = vector.shape_cast %174 : vector<8xf32> to vector<8x1xf32>
    %176 = vector.broadcast %175 : vector<8x1xf32> to vector<8x8xf32>
    %177 = arith.divf %173, %176 : vector<8x8xf32>
    %178 = vector.extract_strided_slice %2 {offsets = [8, 64], sizes = [8, 16], strides = [1, 1]} : vector<16x128xf32> to vector<8x16xf32>
    %cst_98 = arith.constant dense<0.000000e+00> : vector<8x16xf32>
    %179 = tpu.matmul %177, %178, %cst_98 {dimension_numbers = #tpu.dot_dimension_numbers<[1], [0], [0], [1], [0, 0, 1, 1], [], []>} : vector<8x8xf32>, vector<8x16xf32>, vector<8x16xf32> -> vector<8x16xf32>
    %180 = vector.extract_strided_slice %81 {offsets = [0, 0], sizes = [16, 32], strides = [1, 1]} : vector<64x32xf32> to vector<16x32xf32>
    %cst_99 = arith.constant dense<0.000000e+00> : vector<8x32xf32>
    %181 = tpu.matmul %179, %180, %cst_99 {dimension_numbers = #tpu.dot_dimension_numbers<[1], [0], [0], [1], [0, 0, 1, 1], [], []>} : vector<8x16xf32>, vector<16x32xf32>, vector<8x32xf32> -> vector<8x32xf32>
    %182 = arith.addf %167, %181 : vector<8x32xf32>
    %c24_100 = arith.constant 24 : index
    %c0_101 = arith.constant 0 : index
    %183 = vector.load %arg16[%c24_100, %c0_101] : memref<64x8xf32, #tpu.memory_space<vmem>>, vector<8x8xf32>
    %cst_102 = arith.constant dense<0xFF800000> : vector<8xf32>
    %184 = vector.multi_reduction <maximumf>, %183, %cst_102 [1] : vector<8x8xf32> to vector<8xf32>
    %185 = vector.shape_cast %184 : vector<8xf32> to vector<8x1xf32>
    %186 = vector.broadcast %185 : vector<8x1xf32> to vector<8x8xf32>
    %187 = arith.subf %183, %186 : vector<8x8xf32>
    %188 = math.exp %187 : vector<8x8xf32>
    %cst_103 = arith.constant dense<0.000000e+00> : vector<8xf32>
    %189 = vector.multi_reduction <add>, %188, %cst_103 [1] : vector<8x8xf32> to vector<8xf32>
    %190 = vector.shape_cast %189 : vector<8xf32> to vector<8x1xf32>
    %191 = vector.broadcast %190 : vector<8x1xf32> to vector<8x8xf32>
    %192 = arith.divf %188, %191 : vector<8x8xf32>
    %193 = vector.extract_strided_slice %2 {offsets = [8, 80], sizes = [8, 16], strides = [1, 1]} : vector<16x128xf32> to vector<8x16xf32>
    %cst_104 = arith.constant dense<0.000000e+00> : vector<8x16xf32>
    %194 = tpu.matmul %192, %193, %cst_104 {dimension_numbers = #tpu.dot_dimension_numbers<[1], [0], [0], [1], [0, 0, 1, 1], [], []>} : vector<8x8xf32>, vector<8x16xf32>, vector<8x16xf32> -> vector<8x16xf32>
    %195 = vector.extract_strided_slice %81 {offsets = [16, 0], sizes = [16, 32], strides = [1, 1]} : vector<64x32xf32> to vector<16x32xf32>
    %cst_105 = arith.constant dense<0.000000e+00> : vector<8x32xf32>
    %196 = tpu.matmul %194, %195, %cst_105 {dimension_numbers = #tpu.dot_dimension_numbers<[1], [0], [0], [1], [0, 0, 1, 1], [], []>} : vector<8x16xf32>, vector<16x32xf32>, vector<8x32xf32> -> vector<8x32xf32>
    %197 = arith.addf %182, %196 : vector<8x32xf32>
    %c40 = arith.constant 40 : index
    %c0_106 = arith.constant 0 : index
    %198 = vector.load %arg16[%c40, %c0_106] : memref<64x8xf32, #tpu.memory_space<vmem>>, vector<8x8xf32>
    %cst_107 = arith.constant dense<0xFF800000> : vector<8xf32>
    %199 = vector.multi_reduction <maximumf>, %198, %cst_107 [1] : vector<8x8xf32> to vector<8xf32>
    %200 = vector.shape_cast %199 : vector<8xf32> to vector<8x1xf32>
    %201 = vector.broadcast %200 : vector<8x1xf32> to vector<8x8xf32>
    %202 = arith.subf %198, %201 : vector<8x8xf32>
    %203 = math.exp %202 : vector<8x8xf32>
    %cst_108 = arith.constant dense<0.000000e+00> : vector<8xf32>
    %204 = vector.multi_reduction <add>, %203, %cst_108 [1] : vector<8x8xf32> to vector<8xf32>
    %205 = vector.shape_cast %204 : vector<8xf32> to vector<8x1xf32>
    %206 = vector.broadcast %205 : vector<8x1xf32> to vector<8x8xf32>
    %207 = arith.divf %203, %206 : vector<8x8xf32>
    %208 = vector.extract_strided_slice %2 {offsets = [8, 96], sizes = [8, 16], strides = [1, 1]} : vector<16x128xf32> to vector<8x16xf32>
    %cst_109 = arith.constant dense<0.000000e+00> : vector<8x16xf32>
    %209 = tpu.matmul %207, %208, %cst_109 {dimension_numbers = #tpu.dot_dimension_numbers<[1], [0], [0], [1], [0, 0, 1, 1], [], []>} : vector<8x8xf32>, vector<8x16xf32>, vector<8x16xf32> -> vector<8x16xf32>
    %210 = vector.extract_strided_slice %81 {offsets = [32, 0], sizes = [16, 32], strides = [1, 1]} : vector<64x32xf32> to vector<16x32xf32>
    %cst_110 = arith.constant dense<0.000000e+00> : vector<8x32xf32>
    %211 = tpu.matmul %209, %210, %cst_110 {dimension_numbers = #tpu.dot_dimension_numbers<[1], [0], [0], [1], [0, 0, 1, 1], [], []>} : vector<8x16xf32>, vector<16x32xf32>, vector<8x32xf32> -> vector<8x32xf32>
    %212 = arith.addf %197, %211 : vector<8x32xf32>
    %c56 = arith.constant 56 : index
    %c0_111 = arith.constant 0 : index
    %213 = vector.load %arg16[%c56, %c0_111] : memref<64x8xf32, #tpu.memory_space<vmem>>, vector<8x8xf32>
    %cst_112 = arith.constant dense<0xFF800000> : vector<8xf32>
    %214 = vector.multi_reduction <maximumf>, %213, %cst_112 [1] : vector<8x8xf32> to vector<8xf32>
    %215 = vector.shape_cast %214 : vector<8xf32> to vector<8x1xf32>
    %216 = vector.broadcast %215 : vector<8x1xf32> to vector<8x8xf32>
    %217 = arith.subf %213, %216 : vector<8x8xf32>
    %218 = math.exp %217 : vector<8x8xf32>
    %cst_113 = arith.constant dense<0.000000e+00> : vector<8xf32>
    %219 = vector.multi_reduction <add>, %218, %cst_113 [1] : vector<8x8xf32> to vector<8xf32>
    %220 = vector.shape_cast %219 : vector<8xf32> to vector<8x1xf32>
    %221 = vector.broadcast %220 : vector<8x1xf32> to vector<8x8xf32>
    %222 = arith.divf %218, %221 : vector<8x8xf32>
    %223 = vector.extract_strided_slice %2 {offsets = [8, 112], sizes = [8, 16], strides = [1, 1]} : vector<16x128xf32> to vector<8x16xf32>
    %cst_114 = arith.constant dense<0.000000e+00> : vector<8x16xf32>
    %224 = tpu.matmul %222, %223, %cst_114 {dimension_numbers = #tpu.dot_dimension_numbers<[1], [0], [0], [1], [0, 0, 1, 1], [], []>} : vector<8x8xf32>, vector<8x16xf32>, vector<8x16xf32> -> vector<8x16xf32>
    %225 = vector.extract_strided_slice %81 {offsets = [48, 0], sizes = [16, 32], strides = [1, 1]} : vector<64x32xf32> to vector<16x32xf32>
    %cst_115 = arith.constant dense<0.000000e+00> : vector<8x32xf32>
    %226 = tpu.matmul %224, %225, %cst_115 {dimension_numbers = #tpu.dot_dimension_numbers<[1], [0], [0], [1], [0, 0, 1, 1], [], []>} : vector<8x16xf32>, vector<16x32xf32>, vector<8x32xf32> -> vector<8x32xf32>
    %227 = arith.addf %212, %226 : vector<8x32xf32>
    %c8_116 = arith.constant 8 : index
    %c0_117 = arith.constant 0 : index
    %228 = vector.load %arg0[%c8_116, %c0_117] : memref<16x32xf32, #tpu.memory_space<vmem>>, vector<8x32xf32>
    %229 = arith.addf %227, %228 : vector<8x32xf32>
    %230 = vector.shape_cast %229 : vector<8x32xf32> to vector<1x8x32xf32>
    %cst_118 = arith.constant dense<0.000000e+00> : vector<1xf32>
    %231 = vector.multi_reduction <add>, %230, %cst_118 [1, 2] : vector<1x8x32xf32> to vector<1xf32>
    %232 = vector.shape_cast %231 : vector<1xf32> to vector<1x1x1xf32>
    %233 = vector.extract %232[0, 0, 0] : f32 from vector<1x1x1xf32>
    %cst_119 = arith.constant 2.560000e+02 : f32
    %234 = arith.divf %233, %cst_119 : f32
    %235 = vector.broadcast %234 : f32 to vector<8x32xf32>
    %236 = arith.subf %229, %235 : vector<8x32xf32>
    %237 = arith.mulf %236, %236 : vector<8x32xf32>
    %238 = vector.shape_cast %237 : vector<8x32xf32> to vector<1x8x32xf32>
    %cst_120 = arith.constant dense<0.000000e+00> : vector<1xf32>
    %239 = vector.multi_reduction <add>, %238, %cst_120 [1, 2] : vector<1x8x32xf32> to vector<1xf32>
    %240 = vector.shape_cast %239 : vector<1xf32> to vector<1x1x1xf32>
    %241 = vector.extract %240[0, 0, 0] : f32 from vector<1x1x1xf32>
    %cst_121 = arith.constant 2.550000e+02 : f32
    %242 = arith.divf %241, %cst_121 : f32
    %243 = vector.broadcast %234 : f32 to vector<8x32xf32>
    %244 = arith.subf %229, %243 : vector<8x32xf32>
    %cst_122 = arith.constant 9.99999974E-6 : f32
    %245 = arith.addf %242, %cst_122 : f32
    %246 = math.rsqrt %245 : f32
    %247 = vector.broadcast %246 : f32 to vector<8x32xf32>
    %248 = arith.mulf %244, %247 : vector<8x32xf32>
    %c1_123 = arith.constant 1 : index
    %c0_124 = arith.constant 0 : index
    %c0_125 = arith.constant 0 : index
    %249 = vector.load %arg12[%c1_123, %c0_124, %c0_125] : memref<2x8x32xf32, #tpu.memory_space<vmem>>, vector<1x8x32xf32>
    %250 = vector.shape_cast %249 : vector<1x8x32xf32> to vector<8x32xf32>
    %251 = vector.shape_cast %248 : vector<8x32xf32> to vector<1x8x32xf32>
    tpu.vector_store %arg12[%c1_123, %c0_124, %c0_125], %251 {strides = array<i32>} : memref<2x8x32xf32, #tpu.memory_space<vmem>>, vector<1x8x32xf32>,
    return
  }
}

</mosaic_0001>

<llo_original>
// kernel: mha_lstm_sublayer_forward.1
$region0: #{mha_lstm_sublayer_forward.1}
  #allocation0 [shape = 'u32[]', space=smem, size = 0x4, offset = 0x4, fixed_abs, tag = 'smem constant byte address 0x4 - core index']
  #allocation1 [shape = 'u32[144,128]{1,0:T(1,128)}', space=vmem, size = 0x12000, scoped, tag = 'internal scratch']
  #allocation2 [shape = 'f32[64,8]{1,0:T(8,128)}', space=vmem, size = 0x8000, scoped, tag = 'scratch operand']
  #allocation3 [shape = 'f32[64,8]{1,0:T(8,128)}', space=vmem, size = 0x8000, scoped, tag = 'scratch operand']
  #allocation4 [shape = 'f32[64,16]{1,0:T(8,128)}', space=vmem, size = 0x8000, scoped, tag = 'scratch operand']
  #allocation5 [shape = 'f32[64,16]{1,0:T(8,128)}', space=vmem, size = 0x8000, scoped, tag = 'scratch operand']
  %s0 = inlined_call_operand.vmem [shape: f32[16,32], index: 0, kind: input, shape index: {}]
  %s1 = inlined_call_operand.vmem [shape: f32[16,8], index: 1, kind: input, shape index: {}]
  %s2 = inlined_call_operand.vmem [shape: f32[16,8], index: 2, kind: input, shape index: {}]
  %s3 = inlined_call_operand.vmem [shape: f32[32,128], index: 3, kind: input, shape index: {}]
  %s4 = inlined_call_operand.vmem [shape: f32[64,32], index: 4, kind: input, shape index: {}]
  %s5 = inlined_call_operand.vmem [shape: f32[6,16], index: 5, kind: input, shape index: {}]
  %s6 = inlined_call_operand.vmem [shape: f32[4,16], index: 6, kind: input, shape index: {}]
  %s7 = inlined_call_operand.vmem [shape: f32[1,16], index: 7, kind: input, shape index: {}]
  %s8 = inlined_call_operand.vmem [shape: f32[2,4], index: 8, kind: input, shape index: {}]
  %s9 = inlined_call_operand.vmem [shape: f32[2,4], index: 9, kind: input, shape index: {}]
  %s10 = inlined_call_operand.vmem [shape: f32[2], index: 10, kind: input, shape index: {}]
  %s11 = inlined_call_operand.vmem [shape: f32[2], index: 11, kind: input, shape index: {}]
  %s12 = inlined_call_operand.hbm [shape: f32[2,8,32], index: 12, kind: output, shape index: {0}]
  %s13 = inlined_call_operand.hbm [shape: f32[2,4], index: 13, kind: output, shape index: {1}]
  %s14 = inlined_call_operand.hbm [shape: f32[2,4], index: 14, kind: output, shape index: {2}]
  %15 = xla_tuple %s12, %s13, %s14
  %s16 = sld [smem:[#allocation0]]
  $region89: #{mha_lstm_sublayer_forward.1} parent=0
    _
  %s18 = ssub.s32 1, %s16
  %s19 = scalar_select 0, %s18, %s16
  $region1: #{mha_lstm_sublayer_forward.1} parent=0
    #allocation6 [shape = 'u8[512]{0}', space=smem, size = 0x200, scoped, tag = 'input window, operand 10, single buffered']
    #allocation7 [shape = 's32[1]{0}', space=sflag, size = 0x4, scoped, tag = 'scoped memory for mha_lstm_sublayer_forward.1']
    #allocation8 [shape = 's32[1]{0}', space=sflag, size = 0x4, scoped, tag = 'scoped memory for mha_lstm_sublayer_forward.1']
    #allocation9 [shape = 'u8[512]{0}', space=smem, size = 0x200, scoped, tag = 'input window, operand 11, single buffered']
    #allocation10 [shape = 's32[1]{0}', space=sflag, size = 0x4, scoped, tag = 'scoped memory for mha_lstm_sublayer_forward.1']
    #allocation11 [shape = 'u8[8192]{0}', space=vmem, size = 0x2000, scoped, tag = 'output window, operand 0, single buffered']
    #allocation12 [shape = 'u8[1024]{0}', space=vmem, size = 0x400, scoped, tag = 'output window, operand 1, single buffered']
    #allocation13 [shape = 's32[1]{0}', space=sflag, size = 0x4, scoped, tag = 'scoped memory for mha_lstm_sublayer_forward.1']
    #allocation14 [shape = 'u8[1024]{0}', space=vmem, size = 0x400, scoped, tag = 'output window, operand 2, single buffered']
    %20 = vsyncpa [#allocation8], 0
    %21 = vsyncpa [#allocation10], 0
    %22 = vsyncpa [#allocation7], 0
    %23 = vsyncpa [#allocation13], 0
    // Predicated region
    $region2: #{mha_lstm_sublayer_forward.1} parent=1 // pred_check
      _
    $region3: #{mha_lstm_sublayer_forward.1} parent=1 // pred_check_branch
      %25 = sbr.rel (0) target = $region5
    $region4: #{mha_lstm_sublayer_forward.1} parent=1 // pred_region
      _
    $region5: #{mha_lstm_sublayer_forward.1} parent=1 // pred_fallthru
      _
    // Predicated region
    $region6: #{mha_lstm_sublayer_forward.1} parent=1 // pred_check
      _
    $region7: #{mha_lstm_sublayer_forward.1} parent=1 // pred_check_branch
      %27 = sbr.rel (0) target = $region9
    $region8: #{mha_lstm_sublayer_forward.1} parent=1 // pred_region
      _
    $region9: #{mha_lstm_sublayer_forward.1} parent=1 // pred_fallthru
      _
    // Predicated region
    $region10: #{mha_lstm_sublayer_forward.1} parent=1 // pred_check
      _
    $region11: #{mha_lstm_sublayer_forward.1} parent=1 // pred_check_branch
      %29 = sbr.rel (0) target = $region13
    $region12: #{mha_lstm_sublayer_forward.1} parent=1 // pred_region
      _
    $region13: #{mha_lstm_sublayer_forward.1} parent=1 // pred_fallthru
      _
    // Predicated region
    $region14: #{mha_lstm_sublayer_forward.1} parent=1 // pred_check
      _
    $region15: #{mha_lstm_sublayer_forward.1} parent=1 // pred_check_branch
      %31 = sbr.rel (0) target = $region17
    $region16: #{mha_lstm_sublayer_forward.1} parent=1 // pred_region
      _
    $region17: #{mha_lstm_sublayer_forward.1} parent=1 // pred_fallthru
      _
    // Predicated region
    $region18: #{mha_lstm_sublayer_forward.1} parent=1 // pred_check
      _
    $region19: #{mha_lstm_sublayer_forward.1} parent=1 // pred_check_branch
      %33 = sbr.rel (0) target = $region21
    $region20: #{mha_lstm_sublayer_forward.1} parent=1 // pred_region
      _
    $region21: #{mha_lstm_sublayer_forward.1} parent=1 // pred_fallthru
      _
    // Predicated region
    $region22: #{mha_lstm_sublayer_forward.1} parent=1 // pred_check
      _
    $region23: #{mha_lstm_sublayer_forward.1} parent=1 // pred_check_branch
      %35 = sbr.rel (0) target = $region25
    $region24: #{mha_lstm_sublayer_forward.1} parent=1 // pred_region
      _
    $region25: #{mha_lstm_sublayer_forward.1} parent=1 // pred_fallthru
      _
    // Predicated region
    $region26: #{mha_lstm_sublayer_forward.1} parent=1 // pred_check
      _
    $region27: #{mha_lstm_sublayer_forward.1} parent=1 // pred_check_branch
      %37 = sbr.rel (0) target = $region29
    $region28: #{mha_lstm_sublayer_forward.1} parent=1 // pred_region
      _
    $region29: #{mha_lstm_sublayer_forward.1} parent=1 // pred_fallthru
      _
    // Predicated region
    $region30: #{mha_lstm_sublayer_forward.1} parent=1 // pred_check
      _
    $region31: #{mha_lstm_sublayer_forward.1} parent=1 // pred_check_branch
      %39 = sbr.rel (0) target = $region33
    $region32: #{mha_lstm_sublayer_forward.1} parent=1 // pred_region
      _
    $region33: #{mha_lstm_sublayer_forward.1} parent=1 // pred_fallthru
      _
    // Predicated region
    $region34: #{mha_lstm_sublayer_forward.1} parent=1 // pred_check
      _
    $region35: #{mha_lstm_sublayer_forward.1} parent=1 // pred_check_branch
      %41 = sbr.rel (0) target = $region37
    $region36: #{mha_lstm_sublayer_forward.1} parent=1 // pred_region
      _
    $region37: #{mha_lstm_sublayer_forward.1} parent=1 // pred_fallthru
      _
    // Predicated region
    $region38: #{mha_lstm_sublayer_forward.1} parent=1 // pred_check
      _
    $region39: #{mha_lstm_sublayer_forward.1} parent=1 // pred_check_branch
      %43 = sbr.rel (0) target = $region41
    $region40: #{mha_lstm_sublayer_forward.1} parent=1 // pred_region
      _
    $region41: #{mha_lstm_sublayer_forward.1} parent=1 // pred_fallthru
      _
    // Predicated region
    $region42: #{mha_lstm_sublayer_forward.1} parent=1 // pred_check
      _
    $region43: #{mha_lstm_sublayer_forward.1} parent=1 // pred_check_branch
      %45 = sbr.rel (0) target = $region45
    $region44: #{mha_lstm_sublayer_forward.1} parent=1 // pred_region
      %s47 = ssub.s32 16, 16
      %48 = vsyncadd [#allocation8], %s47
      %s50 = sshll.u32 %s10, 4
      %s51 = int_to_ptr.vmem [resolvable:$true] %s50
      %53 = dma.vmem_to_smem %s51, 16, [#allocation6], [#allocation8]
    $region45: #{mha_lstm_sublayer_forward.1} parent=1 // pred_fallthru
      _
    // Predicated region
    $region46: #{mha_lstm_sublayer_forward.1} parent=1 // pred_check
      _
    $region47: #{mha_lstm_sublayer_forward.1} parent=1 // pred_check_branch
      %55 = sbr.rel (0) target = $region49
    $region48: #{mha_lstm_sublayer_forward.1} parent=1 // pred_region
      %s57 = ssub.s32 16, 16
      %58 = vsyncadd [#allocation10], %s57
      %s60 = sshll.u32 %s11, 4
      %s61 = int_to_ptr.vmem [resolvable:$true] %s60
      %63 = dma.vmem_to_smem %s61, 16, [#allocation9], [#allocation10]
    $region49: #{mha_lstm_sublayer_forward.1} parent=1 // pred_fallthru
      _
    // Predicated region
    $region50: #{mha_lstm_sublayer_forward.1} parent=1 // pred_check
      _
    $region51: #{mha_lstm_sublayer_forward.1} parent=1 // pred_check_branch
      %65 = sbr.rel (0) target = $region53
    $region52: #{mha_lstm_sublayer_forward.1} parent=1 // pred_region
      %66 = dma.done [#allocation8], 16
    $region53: #{mha_lstm_sublayer_forward.1} parent=1 // pred_fallthru
      _
    // Predicated region
    $region54: #{mha_lstm_sublayer_forward.1} parent=1 // pred_check
      _
    $region55: #{mha_lstm_sublayer_forward.1} parent=1 // pred_check_branch
      %68 = sbr.rel (0) target = $region57
    $region56: #{mha_lstm_sublayer_forward.1} parent=1 // pred_region
      %69 = dma.done [#allocation10], 16
    $region57: #{mha_lstm_sublayer_forward.1} parent=1 // pred_fallthru
      _
    %70 = sfence
    %v71 = vld [vmem:[%s0] sm:$0xff]
    %v72 = vld [vmem:[%s0 + $0x8] sm:$0xff]
    %v73 = vld [vmem:[%s3] sm:$0xff]
    %v74 = vld [vmem:[%s3 + $0x8] sm:$0xff]
    %v75 = vld [vmem:[%s3 + $0x10] sm:$0xff]
    %v76 = vld [vmem:[%s3 + $0x18] sm:$0xff]
    %vm77 = vcmask 261120
    %v79 = vsel %vm77, %v71, 0
    %v82 = vsel %vm77, %v72, 0
    %84 = vmatprep.subr.mxu0 0.0
    %85 = vmatpush1.msra.mxu0 0.0
    %86 = vmatprep.subr.mxu0 0.0
    %87 = vmatpush1.msra.mxu0 0.0
    %88 = vmatprep.subr.mxu0 0.0
    %89 = vmatpush1.msra.mxu0 0.0
    %90 = vmatprep.subr.mxu0 0.0
    %91 = vmatpush1.msra.mxu0 0.0
    %92 = vmatprep.subr.mxu0 0.0
    %93 = vmatpush1.msra.mxu0 0.0
    %94 = vmatprep.subr.mxu0 0.0
    %95 = vmatpush1.msra.mxu0 0.0
    %96 = vmatprep.subr.mxu0 0.0
    %97 = vmatpush1.msra.mxu0 0.0
    %98 = vmatprep.subr.mxu0 0.0
    %99 = vmatpush1.msra.mxu0 0.0
    %100 = vmatprep.subr.mxu0 0.0
    %101 = vmatpush1.msra.mxu0 0.0
    %102 = vmatprep.subr.mxu0 0.0
    %103 = vmatpush1.msra.mxu0 0.0
    %104 = vmatprep.subr.mxu0 0.0
    %105 = vmatpush1.msra.mxu0 0.0
    %106 = vmatprep.subr.mxu0 0.0
    %107 = vmatpush1.msra.mxu0 0.0
    %108 = vmatprep.subr.mxu0 0.0
    %109 = vmatpush1.msra.mxu0 %v76
    %110 = vmatprep.subr.mxu0 0.0
    %111 = vmatpush1.msra.mxu0 %v75
    %112 = vmatprep.subr.mxu0 0.0
    %113 = vmatpush1.msra.mxu0 %v74
    %114 = vmatprep.subr.mxu0 0.0
    %115 = vmatpush1.msra.mxu0 %v73
    %116 = vmatprep.subr.mxu0 0.0
    %117 = vmatpush2.msra.mxu0 0.0
    %118 = vmatprep.subr.mxu0 0.0
    %119 = vmatpush2.msra.mxu0 0.0
    %120 = vmatprep.subr.mxu0 0.0
    %121 = vmatpush2.msra.mxu0 0.0
    %122 = vmatprep.subr.mxu0 0.0
    %123 = vmatpush2.msra.mxu0 0.0
    %124 = vmatprep.subr.mxu0 0.0
    %125 = vmatpush2.msra.mxu0 0.0
    %126 = vmatprep.subr.mxu0 0.0
    %127 = vmatpush2.msra.mxu0 0.0
    %128 = vmatprep.subr.mxu0 0.0
    %129 = vmatpush2.msra.mxu0 0.0
    %130 = vmatprep.subr.mxu0 0.0
    %131 = vmatpush2.msra.mxu0 0.0
    %132 = vmatprep.subr.mxu0 0.0
    %133 = vmatpush2.msra.mxu0 0.0
    %134 = vmatprep.subr.mxu0 0.0
    %135 = vmatpush2.msra.mxu0 0.0
    %136 = vmatprep.subr.mxu0 0.0
    %137 = vmatpush2.msra.mxu0 0.0
    %138 = vmatprep.subr.mxu0 0.0
    %139 = vmatpush2.msra.mxu0 0.0
    %140 = vmatprep.subr.mxu0 0.0
    %141 = vmatpush2.msra.mxu0 0.0
    %142 = vmatprep.subr.mxu0 0.0
    %143 = vmatpush2.msra.mxu0 0.0
    %144 = vmatprep.subr.mxu0 0.0
    %145 = vmatpush2.msra.mxu0 0.0
    %146 = vmatprep.subr.mxu0 0.0
    %147 = vmatpush2.msra.mxu0 0.0
    %148 = vmatprep.mubr.f32.mxu0 0.0
    %149 = vmatmul.mubr.f32.gmra.mxu0 %v79
    %v150 = vpop.f32.mrf.mxu0
    %v151 = vadd.f32 0.0, %v150
    %v152 = vpop.f32.mrf.mxu0
    %153 = vmatprep.mubr.f32.mxu0 0.0
    %154 = vmatmul.mubr.f32.gmra.mxu0 %v82
    %v155 = vpop.f32.mrf.mxu0
    %v156 = vadd.f32 0.0, %v155
    %v157 = vpop.f32.mrf.mxu0
    %158 = vdwg.mxu0
    %160 = vrot.lane.b32.xlu0 %v151, 96
    %v161 = vpop.permute.xlu0 %160
    %vm162 = vcmask 130048
    %v163 = vsel %vm162, %v151, 0
    %v165 = vsel %vm162, %v161, 0
    %167 = vmatprep.subr.mxu0 0.0
    %168 = vmatpush1.xpose.msra.mxu0 0.0
    %169 = vmatprep.subr.mxu0 0.0
    %170 = vmatpush1.xpose.msra.mxu0 0.0
    %171 = vmatprep.subr.mxu0 0.0
    %172 = vmatpush1.xpose.msra.mxu0 0.0
    %173 = vmatprep.subr.mxu0 0.0
    %174 = vmatpush1.xpose.msra.mxu0 0.0
    %175 = vmatprep.subr.mxu0 0.0
    %176 = vmatpush1.xpose.msra.mxu0 0.0
    %177 = vmatprep.subr.mxu0 0.0
    %178 = vmatpush1.xpose.msra.mxu0 0.0
    %179 = vmatprep.subr.mxu0 0.0
    %180 = vmatpush1.xpose.msra.mxu0 0.0
    %181 = vmatprep.subr.mxu0 0.0
    %182 = vmatpush1.xpose.msra.mxu0 0.0
    %183 = vmatprep.subr.mxu0 0.0
    %184 = vmatpush1.xpose.msra.mxu0 0.0
    %185 = vmatprep.subr.mxu0 0.0
    %186 = vmatpush1.xpose.msra.mxu0 0.0
    %187 = vmatprep.subr.mxu0 0.0
    %188 = vmatpush1.xpose.msra.mxu0 0.0
    %189 = vmatprep.subr.mxu0 0.0
    %190 = vmatpush1.xpose.msra.mxu0 0.0
    %191 = vmatprep.subr.mxu0 0.0
    %192 = vmatpush1.xpose.msra.mxu0 0.0
    %193 = vmatprep.subr.mxu0 0.0
    %194 = vmatpush1.xpose.msra.mxu0 0.0
    %195 = vmatprep.subr.mxu0 0.0
    %196 = vmatpush1.xpose.msra.mxu0 0.0
    %197 = vmatprep.subr.mxu0 0.0
    %198 = vmatpush1.xpose.msra.mxu0 %v165
    %199 = vmatprep.subr.mxu0 0.0
    %200 = vmatpush2.xpose.msra.mxu0 0.0
    %201 = vmatprep.subr.mxu0 0.0
    %202 = vmatpush2.xpose.msra.mxu0 0.0
    %203 = vmatprep.subr.mxu0 0.0
    %204 = vmatpush2.xpose.msra.mxu0 0.0
    %205 = vmatprep.subr.mxu0 0.0
    %206 = vmatpush2.xpose.msra.mxu0 0.0
    %207 = vmatprep.subr.mxu0 0.0
    %208 = vmatpush2.xpose.msra.mxu0 0.0
    %209 = vmatprep.subr.mxu0 0.0
    %210 = vmatpush2.xpose.msra.mxu0 0.0
    %211 = vmatprep.subr.mxu0 0.0
    %212 = vmatpush2.xpose.msra.mxu0 0.0
    %213 = vmatprep.subr.mxu0 0.0
    %214 = vmatpush2.xpose.msra.mxu0 0.0
    %215 = vmatprep.subr.mxu0 0.0
    %216 = vmatpush2.xpose.msra.mxu0 0.0
    %217 = vmatprep.subr.mxu0 0.0
    %218 = vmatpush2.xpose.msra.mxu0 0.0
    %219 = vmatprep.subr.mxu0 0.0
    %220 = vmatpush2.xpose.msra.mxu0 0.0
    %221 = vmatprep.subr.mxu0 0.0
    %222 = vmatpush2.xpose.msra.mxu0 0.0
    %223 = vmatprep.subr.mxu0 0.0
    %224 = vmatpush2.xpose.msra.mxu0 0.0
    %225 = vmatprep.subr.mxu0 0.0
    %226 = vmatpush2.xpose.msra.mxu0 0.0
    %227 = vmatprep.subr.mxu0 0.0
    %228 = vmatpush2.xpose.msra.mxu0 0.0
    %229 = vmatprep.subr.mxu0 0.0
    %230 = vmatpush2.xpose.msra.mxu0 0.0
    %231 = vmatprep.mubr.f32.mxu0 0.0
    %232 = vmatmul.mubr.f32.gmra.mxu0 %v163
    %v233 = vpop.f32.mrf.mxu0
    %v234 = vadd.f32 0.0, %v233
    %v235 = vpop.f32.mrf.mxu0
    %236 = vdwg.mxu0
    %v237 = vmul.f32 %v234, 0.25
    %vm238 = vcmask 64512
    %239 = vst.msk [vmem:[#allocation2] sm:$0xff] %vm238, %v237
    %241 = vrot.lane.b32.xlu0 %v156, 96
    %v242 = vpop.permute.xlu0 %241
    %v243 = vsel %vm162, %v156, 0
    %v245 = vsel %vm162, %v242, 0
    %247 = vmatprep.subr.mxu0 0.0
    %248 = vmatpush1.xpose.msra.mxu0 0.0
    %249 = vmatprep.subr.mxu0 0.0
    %250 = vmatpush1.xpose.msra.mxu0 0.0
    %251 = vmatprep.subr.mxu0 0.0
    %252 = vmatpush1.xpose.msra.mxu0 0.0
    %253 = vmatprep.subr.mxu0 0.0
    %254 = vmatpush1.xpose.msra.mxu0 0.0
    %255 = vmatprep.subr.mxu0 0.0
    %256 = vmatpush1.xpose.msra.mxu0 0.0
    %257 = vmatprep.subr.mxu0 0.0
    %258 = vmatpush1.xpose.msra.mxu0 0.0
    %259 = vmatprep.subr.mxu0 0.0
    %260 = vmatpush1.xpose.msra.mxu0 0.0
    %261 = vmatprep.subr.mxu0 0.0
    %262 = vmatpush1.xpose.msra.mxu0 0.0
    %263 = vmatprep.subr.mxu0 0.0
    %264 = vmatpush1.xpose.msra.mxu0 0.0
    %265 = vmatprep.subr.mxu0 0.0
    %266 = vmatpush1.xpose.msra.mxu0 0.0
    %267 = vmatprep.subr.mxu0 0.0
    %268 = vmatpush1.xpose.msra.mxu0 0.0
    %269 = vmatprep.subr.mxu0 0.0
    %270 = vmatpush1.xpose.msra.mxu0 0.0
    %271 = vmatprep.subr.mxu0 0.0
    %272 = vmatpush1.xpose.msra.mxu0 0.0
    %273 = vmatprep.subr.mxu0 0.0
    %274 = vmatpush1.xpose.msra.mxu0 0.0
    %275 = vmatprep.subr.mxu0 0.0
    %276 = vmatpush1.xpose.msra.mxu0 0.0
    %277 = vmatprep.subr.mxu0 0.0
    %278 = vmatpush1.xpose.msra.mxu0 %v245
    %279 = vmatprep.subr.mxu0 0.0
    %280 = vmatpush2.xpose.msra.mxu0 0.0
    %281 = vmatprep.subr.mxu0 0.0
    %282 = vmatpush2.xpose.msra.mxu0 0.0
    %283 = vmatprep.subr.mxu0 0.0
    %284 = vmatpush2.xpose.msra.mxu0 0.0
    %285 = vmatprep.subr.mxu0 0.0
    %286 = vmatpush2.xpose.msra.mxu0 0.0
    %287 = vmatprep.subr.mxu0 0.0
    %288 = vmatpush2.xpose.msra.mxu0 0.0
    %289 = vmatprep.subr.mxu0 0.0
    %290 = vmatpush2.xpose.msra.mxu0 0.0
    %291 = vmatprep.subr.mxu0 0.0
    %292 = vmatpush2.xpose.msra.mxu0 0.0
    %293 = vmatprep.subr.mxu0 0.0
    %294 = vmatpush2.xpose.msra.mxu0 0.0
    %295 = vmatprep.subr.mxu0 0.0
    %296 = vmatpush2.xpose.msra.mxu0 0.0
    %297 = vmatprep.subr.mxu0 0.0
    %298 = vmatpush2.xpose.msra.mxu0 0.0
    %299 = vmatprep.subr.mxu0 0.0
    %300 = vmatpush2.xpose.msra.mxu0 0.0
    %301 = vmatprep.subr.mxu0 0.0
    %302 = vmatpush2.xpose.msra.mxu0 0.0
    %303 = vmatprep.subr.mxu0 0.0
    %304 = vmatpush2.xpose.msra.mxu0 0.0
    %305 = vmatprep.subr.mxu0 0.0
    %306 = vmatpush2.xpose.msra.mxu0 0.0
    %307 = vmatprep.subr.mxu0 0.0
    %308 = vmatpush2.xpose.msra.mxu0 0.0
    %309 = vmatprep.subr.mxu0 0.0
    %310 = vmatpush2.xpose.msra.mxu0 0.0
    %311 = vmatprep.mubr.f32.mxu0 0.0
    %312 = vmatmul.mubr.f32.gmra.mxu0 %v243
    %v313 = vpop.f32.mrf.mxu0
    %v314 = vadd.f32 0.0, %v313
    %v315 = vpop.f32.mrf.mxu0
    %316 = vdwg.mxu0
    %v317 = vmul.f32 %v314, 0.25
    %318 = vst.msk [vmem:[#allocation2 + $0x8] sm:$0xff] %vm238, %v317
    %319 = vrot.lane.b32.xlu0 %v151, 112
    %v320 = vpop.permute.xlu0 %319
    %321 = vrot.lane.b32.xlu0 %v151, 80
    %v322 = vpop.permute.xlu0 %321
    %v323 = vsel %vm162, %v320, 0
    %v325 = vsel %vm162, %v322, 0
    %327 = vmatprep.subr.mxu0 0.0
    %328 = vmatpush1.xpose.msra.mxu0 0.0
    %329 = vmatprep.subr.mxu0 0.0
    %330 = vmatpush1.xpose.msra.mxu0 0.0
    %331 = vmatprep.subr.mxu0 0.0
    %332 = vmatpush1.xpose.msra.mxu0 0.0
    %333 = vmatprep.subr.mxu0 0.0
    %334 = vmatpush1.xpose.msra.mxu0 0.0
    %335 = vmatprep.subr.mxu0 0.0
    %336 = vmatpush1.xpose.msra.mxu0 0.0
    %337 = vmatprep.subr.mxu0 0.0
    %338 = vmatpush1.xpose.msra.mxu0 0.0
    %339 = vmatprep.subr.mxu0 0.0
    %340 = vmatpush1.xpose.msra.mxu0 0.0
    %341 = vmatprep.subr.mxu0 0.0
    %342 = vmatpush1.xpose.msra.mxu0 0.0
    %343 = vmatprep.subr.mxu0 0.0
    %344 = vmatpush1.xpose.msra.mxu0 0.0
    %345 = vmatprep.subr.mxu0 0.0
    %346 = vmatpush1.xpose.msra.mxu0 0.0
    %347 = vmatprep.subr.mxu0 0.0
    %348 = vmatpush1.xpose.msra.mxu0 0.0
    %349 = vmatprep.subr.mxu0 0.0
    %350 = vmatpush1.xpose.msra.mxu0 0.0
    %351 = vmatprep.subr.mxu0 0.0
    %352 = vmatpush1.xpose.msra.mxu0 0.0
    %353 = vmatprep.subr.mxu0 0.0
    %354 = vmatpush1.xpose.msra.mxu0 0.0
    %355 = vmatprep.subr.mxu0 0.0
    %356 = vmatpush1.xpose.msra.mxu0 0.0
    %357 = vmatprep.subr.mxu0 0.0
    %358 = vmatpush1.xpose.msra.mxu0 %v325
    %359 = vmatprep.subr.mxu0 0.0
    %360 = vmatpush2.xpose.msra.mxu0 0.0
    %361 = vmatprep.subr.mxu0 0.0
    %362 = vmatpush2.xpose.msra.mxu0 0.0
    %363 = vmatprep.subr.mxu0 0.0
    %364 = vmatpush2.xpose.msra.mxu0 0.0
    %365 = vmatprep.subr.mxu0 0.0
    %366 = vmatpush2.xpose.msra.mxu0 0.0
    %367 = vmatprep.subr.mxu0 0.0
    %368 = vmatpush2.xpose.msra.mxu0 0.0
    %369 = vmatprep.subr.mxu0 0.0
    %370 = vmatpush2.xpose.msra.mxu0 0.0
    %371 = vmatprep.subr.mxu0 0.0
    %372 = vmatpush2.xpose.msra.mxu0 0.0
    %373 = vmatprep.subr.mxu0 0.0
    %374 = vmatpush2.xpose.msra.mxu0 0.0
    %375 = vmatprep.subr.mxu0 0.0
    %376 = vmatpush2.xpose.msra.mxu0 0.0
    %377 = vmatprep.subr.mxu0 0.0
    %378 = vmatpush2.xpose.msra.mxu0 0.0
    %379 = vmatprep.subr.mxu0 0.0
    %380 = vmatpush2.xpose.msra.mxu0 0.0
    %381 = vmatprep.subr.mxu0 0.0
    %382 = vmatpush2.xpose.msra.mxu0 0.0
    %383 = vmatprep.subr.mxu0 0.0
    %384 = vmatpush2.xpose.msra.mxu0 0.0
    %385 = vmatprep.subr.mxu0 0.0
    %386 = vmatpush2.xpose.msra.mxu0 0.0
    %387 = vmatprep.subr.mxu0 0.0
    %388 = vmatpush2.xpose.msra.mxu0 0.0
    %389 = vmatprep.subr.mxu0 0.0
    %390 = vmatpush2.xpose.msra.mxu0 0.0
    %391 = vmatprep.mubr.f32.mxu0 0.0
    %392 = vmatmul.mubr.f32.gmra.mxu0 %v323
    %v393 = vpop.f32.mrf.mxu0
    %v394 = vadd.f32 0.0, %v393
    %v395 = vpop.f32.mrf.mxu0
    %396 = vdwg.mxu0
    %v397 = vmul.f32 %v394, 0.25
    %398 = vst.msk [vmem:[#allocation2 + $0x10] sm:$0xff] %vm238, %v397
    %399 = vrot.lane.b32.xlu0 %v156, 112
    %v400 = vpop.permute.xlu0 %399
    %401 = vrot.lane.b32.xlu0 %v156, 80
    %v402 = vpop.permute.xlu0 %401
    %v403 = vsel %vm162, %v400, 0
    %v405 = vsel %vm162, %v402, 0
    %407 = vmatprep.subr.mxu0 0.0
    %408 = vmatpush1.xpose.msra.mxu0 0.0
    %409 = vmatprep.subr.mxu0 0.0
    %410 = vmatpush1.xpose.msra.mxu0 0.0
    %411 = vmatprep.subr.mxu0 0.0
    %412 = vmatpush1.xpose.msra.mxu0 0.0
    %413 = vmatprep.subr.mxu0 0.0
    %414 = vmatpush1.xpose.msra.mxu0 0.0
    %415 = vmatprep.subr.mxu0 0.0
    %416 = vmatpush1.xpose.msra.mxu0 0.0
    %417 = vmatprep.subr.mxu0 0.0
    %418 = vmatpush1.xpose.msra.mxu0 0.0
    %419 = vmatprep.subr.mxu0 0.0
    %420 = vmatpush1.xpose.msra.mxu0 0.0
    %421 = vmatprep.subr.mxu0 0.0
    %422 = vmatpush1.xpose.msra.mxu0 0.0
    %423 = vmatprep.subr.mxu0 0.0
    %424 = vmatpush1.xpose.msra.mxu0 0.0
    %425 = vmatprep.subr.mxu0 0.0
    %426 = vmatpush1.xpose.msra.mxu0 0.0
    %427 = vmatprep.subr.mxu0 0.0
    %428 = vmatpush1.xpose.msra.mxu0 0.0
    %429 = vmatprep.subr.mxu0 0.0
    %430 = vmatpush1.xpose.msra.mxu0 0.0
    %431 = vmatprep.subr.mxu0 0.0
    %432 = vmatpush1.xpose.msra.mxu0 0.0
    %433 = vmatprep.subr.mxu0 0.0
    %434 = vmatpush1.xpose.msra.mxu0 0.0
    %435 = vmatprep.subr.mxu0 0.0
    %436 = vmatpush1.xpose.msra.mxu0 0.0
    %437 = vmatprep.subr.mxu0 0.0
    %438 = vmatpush1.xpose.msra.mxu0 %v405
    %439 = vmatprep.subr.mxu0 0.0
    %440 = vmatpush2.xpose.msra.mxu0 0.0
    %441 = vmatprep.subr.mxu0 0.0
    %442 = vmatpush2.xpose.msra.mxu0 0.0
    %443 = vmatprep.subr.mxu0 0.0
    %444 = vmatpush2.xpose.msra.mxu0 0.0
    %445 = vmatprep.subr.mxu0 0.0
    %446 = vmatpush2.xpose.msra.mxu0 0.0
    %447 = vmatprep.subr.mxu0 0.0
    %448 = vmatpush2.xpose.msra.mxu0 0.0
    %449 = vmatprep.subr.mxu0 0.0
    %450 = vmatpush2.xpose.msra.mxu0 0.0
    %451 = vmatprep.subr.mxu0 0.0
    %452 = vmatpush2.xpose.msra.mxu0 0.0
    %453 = vmatprep.subr.mxu0 0.0
    %454 = vmatpush2.xpose.msra.mxu0 0.0
    %455 = vmatprep.subr.mxu0 0.0
    %456 = vmatpush2.xpose.msra.mxu0 0.0
    %457 = vmatprep.subr.mxu0 0.0
    %458 = vmatpush2.xpose.msra.mxu0 0.0
    %459 = vmatprep.subr.mxu0 0.0
    %460 = vmatpush2.xpose.msra.mxu0 0.0
    %461 = vmatprep.subr.mxu0 0.0
    %462 = vmatpush2.xpose.msra.mxu0 0.0
    %463 = vmatprep.subr.mxu0 0.0
    %464 = vmatpush2.xpose.msra.mxu0 0.0
    %465 = vmatprep.subr.mxu0 0.0
    %466 = vmatpush2.xpose.msra.mxu0 0.0
    %467 = vmatprep.subr.mxu0 0.0
    %468 = vmatpush2.xpose.msra.mxu0 0.0
    %469 = vmatprep.subr.mxu0 0.0
    %470 = vmatpush2.xpose.msra.mxu0 0.0
    %471 = vmatprep.mubr.f32.mxu0 0.0
    %472 = vmatmul.mubr.f32.gmra.mxu0 %v403
    %v473 = vpop.f32.mrf.mxu0
    %v474 = vadd.f32 0.0, %v473
    %v475 = vpop.f32.mrf.mxu0
    %476 = vdwg.mxu0
    %v477 = vmul.f32 %v474, 0.25
    %478 = vst.msk [vmem:[#allocation2 + $0x18] sm:$0xff] %vm238, %v477
    %v479 = vld [vmem:[%s1] sm:$0xff]
    %v480 = vld [vmem:[%s1 + $0x8] sm:$0xff]
    %481 = vst.msk [vmem:[#allocation2 + $0x20] sm:$0xff] %vm238, %v479
    %482 = vst.msk [vmem:[#allocation2 + $0x28] sm:$0xff] %vm238, %v480
    %v483 = vld [vmem:[%s2] sm:$0xff]
    %v484 = vld [vmem:[%s2 + $0x8] sm:$0xff]
    %485 = vst.msk [vmem:[#allocation2 + $0x30] sm:$0xff] %vm238, %v483
    %486 = vst.msk [vmem:[#allocation2 + $0x38] sm:$0xff] %vm238, %v484
    %v487 = vld [vmem:[#allocation2] sm:$0xff]
    %v488 = vld [vmem:[#allocation2 + $0x8] sm:$0xff]
    %v489 = vld [vmem:[#allocation2 + $0x10] sm:$0xff]
    %v490 = vld [vmem:[#allocation2 + $0x18] sm:$0xff]
    %v491 = vld [vmem:[#allocation2 + $0x20] sm:$0xff]
    %v492 = vld [vmem:[#allocation2 + $0x28] sm:$0xff]
    %v493 = vld [vmem:[#allocation2 + $0x30] sm:$0xff]
    %v494 = vld [vmem:[#allocation2 + $0x38] sm:$0xff]
    %v495 = vld [vmem:[%s5] sm:$0x3f]
    %v496 = vld [vmem:[%s7] sm:$0x1]
    %s497 = sld [smem:[#allocation6]]
    %v498 = vstv %s497
    %v499 = vmul.f32 %v498, %v495
    %s500 = sld [smem:[#allocation9]]
    %v501 = vstv %s500
    %v502 = vmul.f32 %v501, %v495
    %v504 = vrot.slane %v502, 1
    %v506 = vadd.f32 %v499, %v504
    %v508 = vlaneseq
    %v509 = vshrl.u32 %v508, 7
    %v510 = vsub.s32 0, %v509
    %v511 = vrot.slane %v496, %v510
    %v513 = vadd.f32 %v506, %v511
    %v514 = vlaneseq
    %v515 = vshrl.u32 %v514, 7
    %v516 = vsub.s32 4, %v515
    %v517 = vrot.slane %v513, %v516
    %vm518 = vcmask 31744
    %v520 = vsel %vm518, %v487, 0
    %v523 = vsel %vm518, %v488, 0
    %v526 = vsel %vm518, %v489, 0
    %v529 = vsel %vm518, %v490, 0
    %v532 = vsel %vm518, %v491, 0
    %v535 = vsel %vm518, %v492, 0
    %v538 = vsel %vm518, %v493, 0
    %v541 = vsel %vm518, %v494, 0
    %vm543 = vcmask 1043456
    %v545 = vsel %vm543, %v495, 0
    %547 = vmatprep.subr.mxu0 0.0
    %548 = vmatpush1.msra.mxu0 0.0
    %549 = vmatprep.subr.mxu0 0.0
    %550 = vmatpush1.msra.mxu0 0.0
    %551 = vmatprep.subr.mxu0 0.0
    %552 = vmatpush1.msra.mxu0 0.0
    %553 = vmatprep.subr.mxu0 0.0
    %554 = vmatpush1.msra.mxu0 0.0
    %555 = vmatprep.subr.mxu0 0.0
    %556 = vmatpush1.msra.mxu0 0.0
    %557 = vmatprep.subr.mxu0 0.0
    %558 = vmatpush1.msra.mxu0 0.0
    %559 = vmatprep.subr.mxu0 0.0
    %560 = vmatpush1.msra.mxu0 0.0
    %561 = vmatprep.subr.mxu0 0.0
    %562 = vmatpush1.msra.mxu0 0.0
    %563 = vmatprep.subr.mxu0 0.0
    %564 = vmatpush1.msra.mxu0 0.0
    %565 = vmatprep.subr.mxu0 0.0
    %566 = vmatpush1.msra.mxu0 0.0
    %567 = vmatprep.subr.mxu0 0.0
    %568 = vmatpush1.msra.mxu0 0.0
    %569 = vmatprep.subr.mxu0 0.0
    %570 = vmatpush1.msra.mxu0 0.0
    %571 = vmatprep.subr.mxu0 0.0
    %572 = vmatpush1.msra.mxu0 0.0
    %573 = vmatprep.subr.mxu0 0.0
    %574 = vmatpush1.msra.mxu0 0.0
    %575 = vmatprep.subr.mxu0 0.0
    %576 = vmatpush1.msra.mxu0 0.0
    %577 = vmatprep.subr.mxu0 0.0
    %578 = vmatpush1.msra.mxu0 %v545
    %579 = vmatprep.subr.mxu0 0.0
    %580 = vmatpush2.msra.mxu0 0.0
    %581 = vmatprep.subr.mxu0 0.0
    %582 = vmatpush2.msra.mxu0 0.0
    %583 = vmatprep.subr.mxu0 0.0
    %584 = vmatpush2.msra.mxu0 0.0
    %585 = vmatprep.subr.mxu0 0.0
    %586 = vmatpush2.msra.mxu0 0.0
    %587 = vmatprep.subr.mxu0 0.0
    %588 = vmatpush2.msra.mxu0 0.0
    %589 = vmatprep.subr.mxu0 0.0
    %590 = vmatpush2.msra.mxu0 0.0
    %591 = vmatprep.subr.mxu0 0.0
    %592 = vmatpush2.msra.mxu0 0.0
    %593 = vmatprep.subr.mxu0 0.0
    %594 = vmatpush2.msra.mxu0 0.0
    %595 = vmatprep.subr.mxu0 0.0
    %596 = vmatpush2.msra.mxu0 0.0
    %597 = vmatprep.subr.mxu0 0.0
    %598 = vmatpush2.msra.mxu0 0.0
    %599 = vmatprep.subr.mxu0 0.0
    %600 = vmatpush2.msra.mxu0 0.0
    %601 = vmatprep.subr.mxu0 0.0
    %602 = vmatpush2.msra.mxu0 0.0
    %603 = vmatprep.subr.mxu0 0.0
    %604 = vmatpush2.msra.mxu0 0.0
    %605 = vmatprep.subr.mxu0 0.0
    %606 = vmatpush2.msra.mxu0 0.0
    %607 = vmatprep.subr.mxu0 0.0
    %608 = vmatpush2.msra.mxu0 0.0
    %609 = vmatprep.subr.mxu0 0.0
    %610 = vmatpush2.msra.mxu0 0.0
    %611 = vmatprep.mubr.f32.mxu0 0.0
    %612 = vmatmul.mubr.f32.gmra.mxu0 %v520
    %v613 = vpop.f32.mrf.mxu0
    %v614 = vadd.f32 %v517, %v613
    %v615 = vpop.f32.mrf.mxu0
    %616 = vmatprep.mubr.f32.mxu0 0.0
    %617 = vmatmul.mubr.f32.gmra.mxu0 %v523
    %v618 = vpop.f32.mrf.mxu0
    %v619 = vadd.f32 %v517, %v618
    %v620 = vpop.f32.mrf.mxu0
    %621 = vmatprep.mubr.f32.mxu0 0.0
    %622 = vmatmul.mubr.f32.gmra.mxu0 %v526
    %v623 = vpop.f32.mrf.mxu0
    %v624 = vadd.f32 %v517, %v623
    %v625 = vpop.f32.mrf.mxu0
    %626 = vmatprep.mubr.f32.mxu0 0.0
    %627 = vmatmul.mubr.f32.gmra.mxu0 %v529
    %v628 = vpop.f32.mrf.mxu0
    %v629 = vadd.f32 %v517, %v628
    %v630 = vpop.f32.mrf.mxu0
    %631 = vmatprep.mubr.f32.mxu0 0.0
    %632 = vmatmul.mubr.f32.gmra.mxu0 %v532
    %v633 = vpop.f32.mrf.mxu0
    %v634 = vadd.f32 %v517, %v633
    %v635 = vpop.f32.mrf.mxu0
    %636 = vmatprep.mubr.f32.mxu0 0.0
    %637 = vmatmul.mubr.f32.gmra.mxu0 %v535
    %v638 = vpop.f32.mrf.mxu0
    %v639 = vadd.f32 %v517, %v638
    %v640 = vpop.f32.mrf.mxu0
    %641 = vmatprep.mubr.f32.mxu0 0.0
    %642 = vmatmul.mubr.f32.gmra.mxu0 %v538
    %v643 = vpop.f32.mrf.mxu0
    %v644 = vadd.f32 %v517, %v643
    %v645 = vpop.f32.mrf.mxu0
    %646 = vmatprep.mubr.f32.mxu0 0.0
    %647 = vmatmul.mubr.f32.gmra.mxu0 %v541
    %v648 = vpop.f32.mrf.mxu0
    %v649 = vadd.f32 %v517, %v648
    %v650 = vpop.f32.mrf.mxu0
    %651 = vdwg.mxu0
    %652 = vst.msk [vmem:[#allocation4] sm:$0xff] %vm162, %v614
    %653 = vst.msk [vmem:[#allocation4 + $0x8] sm:$0xff] %vm162, %v619
    %654 = vst.msk [vmem:[#allocation4 + $0x10] sm:$0xff] %vm162, %v624
    %655 = vst.msk [vmem:[#allocation4 + $0x18] sm:$0xff] %vm162, %v629
    %656 = vst.msk [vmem:[#allocation4 + $0x20] sm:$0xff] %vm162, %v634
    %657 = vst.msk [vmem:[#allocation4 + $0x28] sm:$0xff] %vm162, %v639
    %658 = vst.msk [vmem:[#allocation4 + $0x30] sm:$0xff] %vm162, %v644
    %659 = vst.msk [vmem:[#allocation4 + $0x38] sm:$0xff] %vm162, %v649
    %s660 = sld [smem:[#allocation6 + $0x1]]
    %v661 = vstv %s660
    %v662 = vmul.f32 %v661, %v495
    %s663 = sld [smem:[#allocation9 + $0x1]]
    %v664 = vstv %s663
    %v665 = vmul.f32 %v664, %v495
    %v667 = vrot.slane %v665, 1
    %v669 = vadd.f32 %v662, %v667
    %v670 = vadd.f32 %v669, %v511
    %v671 = vlaneseq
    %v672 = vshrl.u32 %v671, 7
    %v673 = vsub.s32 4, %v672
    %v674 = vrot.slane %v670, %v673
    %675 = vrot.lane.b32.xlu0 %v487, 124
    %v676 = vpop.permute.xlu0 %675
    %677 = vrot.lane.b32.xlu0 %v488, 124
    %v678 = vpop.permute.xlu0 %677
    %679 = vrot.lane.b32.xlu0 %v489, 124
    %v680 = vpop.permute.xlu0 %679
    %681 = vrot.lane.b32.xlu0 %v490, 124
    %v682 = vpop.permute.xlu0 %681
    %683 = vrot.lane.b32.xlu0 %v491, 124
    %v684 = vpop.permute.xlu0 %683
    %685 = vrot.lane.b32.xlu0 %v492, 124
    %v686 = vpop.permute.xlu0 %685
    %687 = vrot.lane.b32.xlu0 %v493, 124
    %v688 = vpop.permute.xlu0 %687
    %689 = vrot.lane.b32.xlu0 %v494, 124
    %v690 = vpop.permute.xlu0 %689
    %v691 = vsel %vm518, %v676, 0
    %v693 = vsel %vm518, %v678, 0
    %v695 = vsel %vm518, %v680, 0
    %v697 = vsel %vm518, %v682, 0
    %v699 = vsel %vm518, %v684, 0
    %v701 = vsel %vm518, %v686, 0
    %v703 = vsel %vm518, %v688, 0
    %v705 = vsel %vm518, %v690, 0
    %707 = vmatprep.subr.mxu0 0.0
    %708 = vmatpush1.msra.mxu0 0.0
    %709 = vmatprep.subr.mxu0 0.0
    %710 = vmatpush1.msra.mxu0 0.0
    %711 = vmatprep.subr.mxu0 0.0
    %712 = vmatpush1.msra.mxu0 0.0
    %713 = vmatprep.subr.mxu0 0.0
    %714 = vmatpush1.msra.mxu0 0.0
    %715 = vmatprep.subr.mxu0 0.0
    %716 = vmatpush1.msra.mxu0 0.0
    %717 = vmatprep.subr.mxu0 0.0
    %718 = vmatpush1.msra.mxu0 0.0
    %719 = vmatprep.subr.mxu0 0.0
    %720 = vmatpush1.msra.mxu0 0.0
    %721 = vmatprep.subr.mxu0 0.0
    %722 = vmatpush1.msra.mxu0 0.0
    %723 = vmatprep.subr.mxu0 0.0
    %724 = vmatpush1.msra.mxu0 0.0
    %725 = vmatprep.subr.mxu0 0.0
    %726 = vmatpush1.msra.mxu0 0.0
    %727 = vmatprep.subr.mxu0 0.0
    %728 = vmatpush1.msra.mxu0 0.0
    %729 = vmatprep.subr.mxu0 0.0
    %730 = vmatpush1.msra.mxu0 0.0
    %731 = vmatprep.subr.mxu0 0.0
    %732 = vmatpush1.msra.mxu0 0.0
    %733 = vmatprep.subr.mxu0 0.0
    %734 = vmatpush1.msra.mxu0 0.0
    %735 = vmatprep.subr.mxu0 0.0
    %736 = vmatpush1.msra.mxu0 0.0
    %737 = vmatprep.subr.mxu0 0.0
    %738 = vmatpush1.msra.mxu0 %v545
    %739 = vmatprep.subr.mxu0 0.0
    %740 = vmatpush2.msra.mxu0 0.0
    %741 = vmatprep.subr.mxu0 0.0
    %742 = vmatpush2.msra.mxu0 0.0
    %743 = vmatprep.subr.mxu0 0.0
    %744 = vmatpush2.msra.mxu0 0.0
    %745 = vmatprep.subr.mxu0 0.0
    %746 = vmatpush2.msra.mxu0 0.0
    %747 = vmatprep.subr.mxu0 0.0
    %748 = vmatpush2.msra.mxu0 0.0
    %749 = vmatprep.subr.mxu0 0.0
    %750 = vmatpush2.msra.mxu0 0.0
    %751 = vmatprep.subr.mxu0 0.0
    %752 = vmatpush2.msra.mxu0 0.0
    %753 = vmatprep.subr.mxu0 0.0
    %754 = vmatpush2.msra.mxu0 0.0
    %755 = vmatprep.subr.mxu0 0.0
    %756 = vmatpush2.msra.mxu0 0.0
    %757 = vmatprep.subr.mxu0 0.0
    %758 = vmatpush2.msra.mxu0 0.0
    %759 = vmatprep.subr.mxu0 0.0
    %760 = vmatpush2.msra.mxu0 0.0
    %761 = vmatprep.subr.mxu0 0.0
    %762 = vmatpush2.msra.mxu0 0.0
    %763 = vmatprep.subr.mxu0 0.0
    %764 = vmatpush2.msra.mxu0 0.0
    %765 = vmatprep.subr.mxu0 0.0
    %766 = vmatpush2.msra.mxu0 0.0
    %767 = vmatprep.subr.mxu0 0.0
    %768 = vmatpush2.msra.mxu0 0.0
    %769 = vmatprep.subr.mxu0 0.0
    %770 = vmatpush2.msra.mxu0 0.0
    %771 = vmatprep.mubr.f32.mxu0 0.0
    %772 = vmatmul.mubr.f32.gmra.mxu0 %v691
    %v773 = vpop.f32.mrf.mxu0
    %v774 = vadd.f32 %v674, %v773
    %v775 = vpop.f32.mrf.mxu0
    %776 = vmatprep.mubr.f32.mxu0 0.0
    %777 = vmatmul.mubr.f32.gmra.mxu0 %v693
    %v778 = vpop.f32.mrf.mxu0
    %v779 = vadd.f32 %v674, %v778
    %v780 = vpop.f32.mrf.mxu0
    %781 = vmatprep.mubr.f32.mxu0 0.0
    %782 = vmatmul.mubr.f32.gmra.mxu0 %v695
    %v783 = vpop.f32.mrf.mxu0
    %v784 = vadd.f32 %v674, %v783
    %v785 = vpop.f32.mrf.mxu0
    %786 = vmatprep.mubr.f32.mxu0 0.0
    %787 = vmatmul.mubr.f32.gmra.mxu0 %v697
    %v788 = vpop.f32.mrf.mxu0
    %v789 = vadd.f32 %v674, %v788
    %v790 = vpop.f32.mrf.mxu0
    %791 = vmatprep.mubr.f32.mxu0 0.0
    %792 = vmatmul.mubr.f32.gmra.mxu0 %v699
    %v793 = vpop.f32.mrf.mxu0
    %v794 = vadd.f32 %v674, %v793
    %v795 = vpop.f32.mrf.mxu0
    %796 = vmatprep.mubr.f32.mxu0 0.0
    %797 = vmatmul.mubr.f32.gmra.mxu0 %v701
    %v798 = vpop.f32.mrf.mxu0
    %v799 = vadd.f32 %v674, %v798
    %v800 = vpop.f32.mrf.mxu0
    %801 = vmatprep.mubr.f32.mxu0 0.0
    %802 = vmatmul.mubr.f32.gmra.mxu0 %v703
    %v803 = vpop.f32.mrf.mxu0
    %v804 = vadd.f32 %v674, %v803
    %v805 = vpop.f32.mrf.mxu0
    %806 = vmatprep.mubr.f32.mxu0 0.0
    %807 = vmatmul.mubr.f32.gmra.mxu0 %v705
    %v808 = vpop.f32.mrf.mxu0
    %v809 = vadd.f32 %v674, %v808
    %v810 = vpop.f32.mrf.mxu0
    %811 = vdwg.mxu0
    %812 = vst.msk [vmem:[#allocation5] sm:$0xff] %vm162, %v774
    %813 = vst.msk [vmem:[#allocation5 + $0x8] sm:$0xff] %vm162, %v779
    %814 = vst.msk [vmem:[#allocation5 + $0x10] sm:$0xff] %vm162, %v784
    %815 = vst.msk [vmem:[#allocation5 + $0x18] sm:$0xff] %vm162, %v789
    %816 = vst.msk [vmem:[#allocation5 + $0x20] sm:$0xff] %vm162, %v794
    %817 = vst.msk [vmem:[#allocation5 + $0x28] sm:$0xff] %vm162, %v799
    %818 = vst.msk [vmem:[#allocation5 + $0x30] sm:$0xff] %vm162, %v804
    %819 = vst.msk [vmem:[#allocation5 + $0x38] sm:$0xff] %vm162, %v809
    %v820 = vld [vmem:[%s6] sm:$0xf]
    %v821 = vld [vmem:[%s8] sm:$0x1]
    %v822 = vld [vmem:[%s8 + $0x1] sm:$0x1]
    %v823 = vld [vmem:[%s9] sm:$0x1]
    %v824 = vld [vmem:[%s9 + $0x1] sm:$0x1]
    loop: start=0, step=1, limit=8
    $region58: #{mha_lstm_sublayer_forward.1} parent=1 // loop_pre_header
      _
    $region59: #{mha_lstm_sublayer_forward.1} parent=1 // loop_header
      %s826 = sphi 0, %s830
      %p827 = scmp.ge.s32.totalorder %s826, 8
      %v831 = vphi %v821, %v1661
      %v832 = vphi %v822, %v1719
      %v833 = vphi %v823, %v1723
      %v834 = vphi %v824, %v1727
    $region60: #{mha_lstm_sublayer_forward.1} parent=1 // loop_header_branch
      %829 = sbr.rel (%p827) target = $region64
    $region61: #{mha_lstm_sublayer_forward.1} parent=1 // loop_body
      %s835 = smul.u32 %s826, 8
      %s836 = scalar_lea.vmem [#allocation4], %s835
      %v837 = vld [vmem:[%s836] sm:$0x1]
      %839 = vset.pattern.permute.xlu0 0
      %840 = vperm.xlu0 %839, %v831
      %v841 = vpop.permute.xlu0 %840
      %v843 = vmul.f32 %v841, %v820
      %v844 = vadd.f32 %v837, %v843
      %845 = vset.pattern.permute.xlu0 1
      %846 = vperm.xlu0 %845, %v831
      %v847 = vpop.permute.xlu0 %846
      %v850 = vrot.slane %v820, 1
      %v852 = vmul.f32 %v847, %v850
      %v853 = vadd.f32 %v844, %v852
      %854 = vset.pattern.permute.xlu0 2
      %855 = vperm.xlu0 %854, %v831
      %v856 = vpop.permute.xlu0 %855
      %v858 = vrot.slane %v820, 2
      %v860 = vmul.f32 %v856, %v858
      %v861 = vadd.f32 %v853, %v860
      %862 = vset.pattern.permute.xlu0 3
      %863 = vperm.xlu0 %862, %v831
      %v864 = vpop.permute.xlu0 %863
      %v866 = vrot.slane %v820, 3
      %v868 = vmul.f32 %v864, %v866
      %v869 = vadd.f32 %v861, %v868
      %v870 = vmul.f32 %v869, 0.5
      %v871 = vtanh.pop %v870
      %v872 = vmul.f32 %v871, 0.5
      %v873 = vadd.f32 %v872, 0.5
      %v874 = vtanh.pop %v869
      %876 = vrot.lane.b32.xlu0 %v833, 4
      %v877 = vpop.permute.xlu0 %876
      %v879 = vmul.f32 %v873, %v877
      %881 = vrot.lane.b32.xlu0 %v874, 120
      %v882 = vpop.permute.xlu0 %881
      %v884 = vmul.f32 %v873, %v882
      %886 = vrot.lane.b32.xlu0 %v884, 4
      %v887 = vpop.permute.xlu0 %886
      %v889 = vadd.f32 %v879, %v887
      %v890 = vtanh.pop %v889
      %892 = vrot.lane.b32.xlu0 %v890, 8
      %v893 = vpop.permute.xlu0 %892
      %v895 = vmul.f32 %v873, %v893
      %897 = vrot.lane.b32.xlu0 %v895, 116
      %v898 = vpop.permute.xlu0 %897
      %s900 = scalar_lea.vmem [#allocation3], %s835
      %vm901 = vcmask 24576
      %902 = vst.msk [vmem:[%s900] sm:$0x1] %vm901, %v898
      %s903 = scalar_lea.vmem [#allocation5], %s835
      %v904 = vld [vmem:[%s903] sm:$0x1]
      %906 = vset.pattern.permute.xlu0 0
      %907 = vperm.xlu0 %906, %v832
      %v908 = vpop.permute.xlu0 %907
      %v910 = vmul.f32 %v908, %v820
      %v911 = vadd.f32 %v904, %v910
      %912 = vset.pattern.permute.xlu0 1
      %913 = vperm.xlu0 %912, %v832
      %v914 = vpop.permute.xlu0 %913
      %v916 = vmul.f32 %v914, %v850
      %v917 = vadd.f32 %v911, %v916
      %918 = vset.pattern.permute.xlu0 2
      %919 = vperm.xlu0 %918, %v832
      %v920 = vpop.permute.xlu0 %919
      %v922 = vmul.f32 %v920, %v858
      %v923 = vadd.f32 %v917, %v922
      %924 = vset.pattern.permute.xlu0 3
      %925 = vperm.xlu0 %924, %v832
      %v926 = vpop.permute.xlu0 %925
      %v928 = vmul.f32 %v926, %v866
      %v929 = vadd.f32 %v923, %v928
      %v930 = vmul.f32 %v929, 0.5
      %v931 = vtanh.pop %v930
      %v932 = vmul.f32 %v931, 0.5
      %v933 = vadd.f32 %v932, 0.5
      %v934 = vtanh.pop %v929
      %936 = vrot.lane.b32.xlu0 %v834, 4
      %v937 = vpop.permute.xlu0 %936
      %v939 = vmul.f32 %v933, %v937
      %941 = vrot.lane.b32.xlu0 %v934, 120
      %v942 = vpop.permute.xlu0 %941
      %v944 = vmul.f32 %v933, %v942
      %946 = vrot.lane.b32.xlu0 %v944, 4
      %v947 = vpop.permute.xlu0 %946
      %v949 = vadd.f32 %v939, %v947
      %v950 = vtanh.pop %v949
      %952 = vrot.lane.b32.xlu0 %v950, 8
      %v953 = vpop.permute.xlu0 %952
      %v955 = vmul.f32 %v933, %v953
      %957 = vrot.lane.b32.xlu0 %v955, 120
      %v958 = vpop.permute.xlu0 %957
      %vm960 = vcmask 57376
      %961 = vst.msk [vmem:[%s900] sm:$0x1] %vm960, %v958
      %s962 = sadd.s32 %s835, 1
      %s963 = scalar_lea.vmem [#allocation4], %s962
      %v964 = vld [vmem:[%s963] sm:$0x1]
      %965 = vset.pattern.permute.xlu0 12
      %966 = vperm.xlu0 %965, %v895
      %v967 = vpop.permute.xlu0 %966
      %v969 = vmul.f32 %v967, %v820
      %v970 = vadd.f32 %v964, %v969
      %971 = vset.pattern.permute.xlu0 13
      %972 = vperm.xlu0 %971, %v895
      %v973 = vpop.permute.xlu0 %972
      %v975 = vmul.f32 %v973, %v850
      %v976 = vadd.f32 %v970, %v975
      %977 = vset.pattern.permute.xlu0 14
      %978 = vperm.xlu0 %977, %v895
      %v979 = vpop.permute.xlu0 %978
      %v981 = vmul.f32 %v979, %v858
      %v982 = vadd.f32 %v976, %v981
      %983 = vset.pattern.permute.xlu0 15
      %984 = vperm.xlu0 %983, %v895
      %v985 = vpop.permute.xlu0 %984
      %v987 = vmul.f32 %v985, %v866
      %v988 = vadd.f32 %v982, %v987
      %v989 = vmul.f32 %v988, 0.5
      %v990 = vtanh.pop %v989
      %v991 = vmul.f32 %v990, 0.5
      %v992 = vadd.f32 %v991, 0.5
      %v993 = vtanh.pop %v988
      %v994 = vmul.f32 %v992, %v889
      %996 = vrot.lane.b32.xlu0 %v993, 120
      %v997 = vpop.permute.xlu0 %996
      %v999 = vmul.f32 %v992, %v997
      %1001 = vrot.lane.b32.xlu0 %v999, 4
      %v1002 = vpop.permute.xlu0 %1001
      %v1004 = vadd.f32 %v994, %v1002
      %v1005 = vtanh.pop %v1004
      %1007 = vrot.lane.b32.xlu0 %v1005, 8
      %v1008 = vpop.permute.xlu0 %1007
      %v1010 = vmul.f32 %v992, %v1008
      %1012 = vrot.lane.b32.xlu0 %v1010, 116
      %v1013 = vpop.permute.xlu0 %1012
      %s1015 = scalar_lea.vmem [#allocation3], %s962
      %1016 = vst.msk [vmem:[%s1015] sm:$0x1] %vm901, %v1013
      %s1017 = scalar_lea.vmem [#allocation5], %s962
      %v1018 = vld [vmem:[%s1017] sm:$0x1]
      %1019 = vset.pattern.permute.xlu0 12
      %1020 = vperm.xlu0 %1019, %v955
      %v1021 = vpop.permute.xlu0 %1020
      %v1023 = vmul.f32 %v1021, %v820
      %v1024 = vadd.f32 %v1018, %v1023
      %1025 = vset.pattern.permute.xlu0 13
      %1026 = vperm.xlu0 %1025, %v955
      %v1027 = vpop.permute.xlu0 %1026
      %v1029 = vmul.f32 %v1027, %v850
      %v1030 = vadd.f32 %v1024, %v1029
      %1031 = vset.pattern.permute.xlu0 14
      %1032 = vperm.xlu0 %1031, %v955
      %v1033 = vpop.permute.xlu0 %1032
      %v1035 = vmul.f32 %v1033, %v858
      %v1036 = vadd.f32 %v1030, %v1035
      %1037 = vset.pattern.permute.xlu0 15
      %1038 = vperm.xlu0 %1037, %v955
      %v1039 = vpop.permute.xlu0 %1038
      %v1041 = vmul.f32 %v1039, %v866
      %v1042 = vadd.f32 %v1036, %v1041
      %v1043 = vmul.f32 %v1042, 0.5
      %v1044 = vtanh.pop %v1043
      %v1045 = vmul.f32 %v1044, 0.5
      %v1046 = vadd.f32 %v1045, 0.5
      %v1047 = vtanh.pop %v1042
      %v1048 = vmul.f32 %v1046, %v949
      %1050 = vrot.lane.b32.xlu0 %v1047, 120
      %v1051 = vpop.permute.xlu0 %1050
      %v1053 = vmul.f32 %v1046, %v1051
      %1055 = vrot.lane.b32.xlu0 %v1053, 4
      %v1056 = vpop.permute.xlu0 %1055
      %v1058 = vadd.f32 %v1048, %v1056
      %v1059 = vtanh.pop %v1058
      %1061 = vrot.lane.b32.xlu0 %v1059, 8
      %v1062 = vpop.permute.xlu0 %1061
      %v1064 = vmul.f32 %v1046, %v1062
      %1066 = vrot.lane.b32.xlu0 %v1064, 120
      %v1067 = vpop.permute.xlu0 %1066
      %1069 = vst.msk [vmem:[%s1015] sm:$0x1] %vm960, %v1067
      %s1070 = sadd.s32 %s835, 2
      %s1071 = scalar_lea.vmem [#allocation4], %s1070
      %v1072 = vld [vmem:[%s1071] sm:$0x1]
      %1073 = vset.pattern.permute.xlu0 12
      %1074 = vperm.xlu0 %1073, %v1010
      %v1075 = vpop.permute.xlu0 %1074
      %v1077 = vmul.f32 %v1075, %v820
      %v1078 = vadd.f32 %v1072, %v1077
      %1079 = vset.pattern.permute.xlu0 13
      %1080 = vperm.xlu0 %1079, %v1010
      %v1081 = vpop.permute.xlu0 %1080
      %v1083 = vmul.f32 %v1081, %v850
      %v1084 = vadd.f32 %v1078, %v1083
      %1085 = vset.pattern.permute.xlu0 14
      %1086 = vperm.xlu0 %1085, %v1010
      %v1087 = vpop.permute.xlu0 %1086
      %v1089 = vmul.f32 %v1087, %v858
      %v1090 = vadd.f32 %v1084, %v1089
      %1091 = vset.pattern.permute.xlu0 15
      %1092 = vperm.xlu0 %1091, %v1010
      %v1093 = vpop.permute.xlu0 %1092
      %v1095 = vmul.f32 %v1093, %v866
      %v1096 = vadd.f32 %v1090, %v1095
      %v1097 = vmul.f32 %v1096, 0.5
      %v1098 = vtanh.pop %v1097
      %v1099 = vmul.f32 %v1098, 0.5
      %v1100 = vadd.f32 %v1099, 0.5
      %v1101 = vtanh.pop %v1096
      %v1102 = vmul.f32 %v1100, %v1004
      %1104 = vrot.lane.b32.xlu0 %v1101, 120
      %v1105 = vpop.permute.xlu0 %1104
      %v1107 = vmul.f32 %v1100, %v1105
      %1109 = vrot.lane.b32.xlu0 %v1107, 4
      %v1110 = vpop.permute.xlu0 %1109
      %v1112 = vadd.f32 %v1102, %v1110
      %v1113 = vtanh.pop %v1112
      %1115 = vrot.lane.b32.xlu0 %v1113, 8
      %v1116 = vpop.permute.xlu0 %1115
      %v1118 = vmul.f32 %v1100, %v1116
      %1120 = vrot.lane.b32.xlu0 %v1118, 116
      %v1121 = vpop.permute.xlu0 %1120
      %s1123 = scalar_lea.vmem [#allocation3], %s1070
      %1124 = vst.msk [vmem:[%s1123] sm:$0x1] %vm901, %v1121
      %s1125 = scalar_lea.vmem [#allocation5], %s1070
      %v1126 = vld [vmem:[%s1125] sm:$0x1]
      %1127 = vset.pattern.permute.xlu0 12
      %1128 = vperm.xlu0 %1127, %v1064
      %v1129 = vpop.permute.xlu0 %1128
      %v1131 = vmul.f32 %v1129, %v820
      %v1132 = vadd.f32 %v1126, %v1131
      %1133 = vset.pattern.permute.xlu0 13
      %1134 = vperm.xlu0 %1133, %v1064
      %v1135 = vpop.permute.xlu0 %1134
      %v1137 = vmul.f32 %v1135, %v850
      %v1138 = vadd.f32 %v1132, %v1137
      %1139 = vset.pattern.permute.xlu0 14
      %1140 = vperm.xlu0 %1139, %v1064
      %v1141 = vpop.permute.xlu0 %1140
      %v1143 = vmul.f32 %v1141, %v858
      %v1144 = vadd.f32 %v1138, %v1143
      %1145 = vset.pattern.permute.xlu0 15
      %1146 = vperm.xlu0 %1145, %v1064
      %v1147 = vpop.permute.xlu0 %1146
      %v1149 = vmul.f32 %v1147, %v866
      %v1150 = vadd.f32 %v1144, %v1149
      %v1151 = vmul.f32 %v1150, 0.5
      %v1152 = vtanh.pop %v1151
      %v1153 = vmul.f32 %v1152, 0.5
      %v1154 = vadd.f32 %v1153, 0.5
      %v1155 = vtanh.pop %v1150
      %v1156 = vmul.f32 %v1154, %v1058
      %1158 = vrot.lane.b32.xlu0 %v1155, 120
      %v1159 = vpop.permute.xlu0 %1158
      %v1161 = vmul.f32 %v1154, %v1159
      %1163 = vrot.lane.b32.xlu0 %v1161, 4
      %v1164 = vpop.permute.xlu0 %1163
      %v1166 = vadd.f32 %v1156, %v1164
      %v1167 = vtanh.pop %v1166
      %1169 = vrot.lane.b32.xlu0 %v1167, 8
      %v1170 = vpop.permute.xlu0 %1169
      %v1172 = vmul.f32 %v1154, %v1170
      %1174 = vrot.lane.b32.xlu0 %v1172, 120
      %v1175 = vpop.permute.xlu0 %1174
      %1177 = vst.msk [vmem:[%s1123] sm:$0x1] %vm960, %v1175
      %s1178 = sadd.s32 %s835, 3
      %s1179 = scalar_lea.vmem [#allocation4], %s1178
      %v1180 = vld [vmem:[%s1179] sm:$0x1]
      %1181 = vset.pattern.permute.xlu0 12
      %1182 = vperm.xlu0 %1181, %v1118
      %v1183 = vpop.permute.xlu0 %1182
      %v1185 = vmul.f32 %v1183, %v820
      %v1186 = vadd.f32 %v1180, %v1185
      %1187 = vset.pattern.permute.xlu0 13
      %1188 = vperm.xlu0 %1187, %v1118
      %v1189 = vpop.permute.xlu0 %1188
      %v1191 = vmul.f32 %v1189, %v850
      %v1192 = vadd.f32 %v1186, %v1191
      %1193 = vset.pattern.permute.xlu0 14
      %1194 = vperm.xlu0 %1193, %v1118
      %v1195 = vpop.permute.xlu0 %1194
      %v1197 = vmul.f32 %v1195, %v858
      %v1198 = vadd.f32 %v1192, %v1197
      %1199 = vset.pattern.permute.xlu0 15
      %1200 = vperm.xlu0 %1199, %v1118
      %v1201 = vpop.permute.xlu0 %1200
      %v1203 = vmul.f32 %v1201, %v866
      %v1204 = vadd.f32 %v1198, %v1203
      %v1205 = vmul.f32 %v1204, 0.5
      %v1206 = vtanh.pop %v1205
      %v1207 = vmul.f32 %v1206, 0.5
      %v1208 = vadd.f32 %v1207, 0.5
      %v1209 = vtanh.pop %v1204
      %v1210 = vmul.f32 %v1208, %v1112
      %1212 = vrot.lane.b32.xlu0 %v1209, 120
      %v1213 = vpop.permute.xlu0 %1212
      %v1215 = vmul.f32 %v1208, %v1213
      %1217 = vrot.lane.b32.xlu0 %v1215, 4
      %v1218 = vpop.permute.xlu0 %1217
      %v1220 = vadd.f32 %v1210, %v1218
      %v1221 = vtanh.pop %v1220
      %1223 = vrot.lane.b32.xlu0 %v1221, 8
      %v1224 = vpop.permute.xlu0 %1223
      %v1226 = vmul.f32 %v1208, %v1224
      %1228 = vrot.lane.b32.xlu0 %v1226, 116
      %v1229 = vpop.permute.xlu0 %1228
      %s1231 = scalar_lea.vmem [#allocation3], %s1178
      %1232 = vst.msk [vmem:[%s1231] sm:$0x1] %vm901, %v1229
      %s1233 = scalar_lea.vmem [#allocation5], %s1178
      %v1234 = vld [vmem:[%s1233] sm:$0x1]
      %1235 = vset.pattern.permute.xlu0 12
      %1236 = vperm.xlu0 %1235, %v1172
      %v1237 = vpop.permute.xlu0 %1236
      %v1239 = vmul.f32 %v1237, %v820
      %v1240 = vadd.f32 %v1234, %v1239
      %1241 = vset.pattern.permute.xlu0 13
      %1242 = vperm.xlu0 %1241, %v1172
      %v1243 = vpop.permute.xlu0 %1242
      %v1245 = vmul.f32 %v1243, %v850
      %v1246 = vadd.f32 %v1240, %v1245
      %1247 = vset.pattern.permute.xlu0 14
      %1248 = vperm.xlu0 %1247, %v1172
      %v1249 = vpop.permute.xlu0 %1248
      %v1251 = vmul.f32 %v1249, %v858
      %v1252 = vadd.f32 %v1246, %v1251
      %1253 = vset.pattern.permute.xlu0 15
      %1254 = vperm.xlu0 %1253, %v1172
      %v1255 = vpop.permute.xlu0 %1254
      %v1257 = vmul.f32 %v1255, %v866
      %v1258 = vadd.f32 %v1252, %v1257
      %v1259 = vmul.f32 %v1258, 0.5
      %v1260 = vtanh.pop %v1259
      %v1261 = vmul.f32 %v1260, 0.5
      %v1262 = vadd.f32 %v1261, 0.5
      %v1263 = vtanh.pop %v1258
      %v1264 = vmul.f32 %v1262, %v1166
      %1266 = vrot.lane.b32.xlu0 %v1263, 120
      %v1267 = vpop.permute.xlu0 %1266
      %v1269 = vmul.f32 %v1262, %v1267
      %1271 = vrot.lane.b32.xlu0 %v1269, 4
      %v1272 = vpop.permute.xlu0 %1271
      %v1274 = vadd.f32 %v1264, %v1272
      %v1275 = vtanh.pop %v1274
      %1277 = vrot.lane.b32.xlu0 %v1275, 8
      %v1278 = vpop.permute.xlu0 %1277
      %v1280 = vmul.f32 %v1262, %v1278
      %1282 = vrot.lane.b32.xlu0 %v1280, 120
      %v1283 = vpop.permute.xlu0 %1282
      %1285 = vst.msk [vmem:[%s1231] sm:$0x1] %vm960, %v1283
      %s1286 = sadd.s32 %s835, 4
      %s1287 = scalar_lea.vmem [#allocation4], %s1286
      %v1288 = vld [vmem:[%s1287] sm:$0x1]
      %1289 = vset.pattern.permute.xlu0 12
      %1290 = vperm.xlu0 %1289, %v1226
      %v1291 = vpop.permute.xlu0 %1290
      %v1293 = vmul.f32 %v1291, %v820
      %v1294 = vadd.f32 %v1288, %v1293
      %1295 = vset.pattern.permute.xlu0 13
      %1296 = vperm.xlu0 %1295, %v1226
      %v1297 = vpop.permute.xlu0 %1296
      %v1299 = vmul.f32 %v1297, %v850
      %v1300 = vadd.f32 %v1294, %v1299
      %1301 = vset.pattern.permute.xlu0 14
      %1302 = vperm.xlu0 %1301, %v1226
      %v1303 = vpop.permute.xlu0 %1302
      %v1305 = vmul.f32 %v1303, %v858
      %v1306 = vadd.f32 %v1300, %v1305
      %1307 = vset.pattern.permute.xlu0 15
      %1308 = vperm.xlu0 %1307, %v1226
      %v1309 = vpop.permute.xlu0 %1308
      %v1311 = vmul.f32 %v1309, %v866
      %v1312 = vadd.f32 %v1306, %v1311
      %v1313 = vmul.f32 %v1312, 0.5
      %v1314 = vtanh.pop %v1313
      %v1315 = vmul.f32 %v1314, 0.5
      %v1316 = vadd.f32 %v1315, 0.5
      %v1317 = vtanh.pop %v1312
      %v1318 = vmul.f32 %v1316, %v1220
      %1320 = vrot.lane.b32.xlu0 %v1317, 120
      %v1321 = vpop.permute.xlu0 %1320
      %v1323 = vmul.f32 %v1316, %v1321
      %1325 = vrot.lane.b32.xlu0 %v1323, 4
      %v1326 = vpop.permute.xlu0 %1325
      %v1328 = vadd.f32 %v1318, %v1326
      %v1329 = vtanh.pop %v1328
      %1331 = vrot.lane.b32.xlu0 %v1329, 8
      %v1332 = vpop.permute.xlu0 %1331
      %v1334 = vmul.f32 %v1316, %v1332
      %1336 = vrot.lane.b32.xlu0 %v1334, 116
      %v1337 = vpop.permute.xlu0 %1336
      %s1339 = scalar_lea.vmem [#allocation3], %s1286
      %1340 = vst.msk [vmem:[%s1339] sm:$0x1] %vm901, %v1337
      %s1341 = scalar_lea.vmem [#allocation5], %s1286
      %v1342 = vld [vmem:[%s1341] sm:$0x1]
      %1343 = vset.pattern.permute.xlu0 12
      %1344 = vperm.xlu0 %1343, %v1280
      %v1345 = vpop.permute.xlu0 %1344
      %v1347 = vmul.f32 %v1345, %v820
      %v1348 = vadd.f32 %v1342, %v1347
      %1349 = vset.pattern.permute.xlu0 13
      %1350 = vperm.xlu0 %1349, %v1280
      %v1351 = vpop.permute.xlu0 %1350
      %v1353 = vmul.f32 %v1351, %v850
      %v1354 = vadd.f32 %v1348, %v1353
      %1355 = vset.pattern.permute.xlu0 14
      %1356 = vperm.xlu0 %1355, %v1280
      %v1357 = vpop.permute.xlu0 %1356
      %v1359 = vmul.f32 %v1357, %v858
      %v1360 = vadd.f32 %v1354, %v1359
      %1361 = vset.pattern.permute.xlu0 15
      %1362 = vperm.xlu0 %1361, %v1280
      %v1363 = vpop.permute.xlu0 %1362
      %v1365 = vmul.f32 %v1363, %v866
      %v1366 = vadd.f32 %v1360, %v1365
      %v1367 = vmul.f32 %v1366, 0.5
      %v1368 = vtanh.pop %v1367
      %v1369 = vmul.f32 %v1368, 0.5
      %v1370 = vadd.f32 %v1369, 0.5
      %v1371 = vtanh.pop %v1366
      %v1372 = vmul.f32 %v1370, %v1274
      %1374 = vrot.lane.b32.xlu0 %v1371, 120
      %v1375 = vpop.permute.xlu0 %1374
      %v1377 = vmul.f32 %v1370, %v1375
      %1379 = vrot.lane.b32.xlu0 %v1377, 4
      %v1380 = vpop.permute.xlu0 %1379
      %v1382 = vadd.f32 %v1372, %v1380
      %v1383 = vtanh.pop %v1382
      %1385 = vrot.lane.b32.xlu0 %v1383, 8
      %v1386 = vpop.permute.xlu0 %1385
      %v1388 = vmul.f32 %v1370, %v1386
      %1390 = vrot.lane.b32.xlu0 %v1388, 120
      %v1391 = vpop.permute.xlu0 %1390
      %1393 = vst.msk [vmem:[%s1339] sm:$0x1] %vm960, %v1391
      %s1394 = sadd.s32 %s835, 5
      %s1395 = scalar_lea.vmem [#allocation4], %s1394
      %v1396 = vld [vmem:[%s1395] sm:$0x1]
      %1397 = vset.pattern.permute.xlu0 12
      %1398 = vperm.xlu0 %1397, %v1334
      %v1399 = vpop.permute.xlu0 %1398
      %v1401 = vmul.f32 %v1399, %v820
      %v1402 = vadd.f32 %v1396, %v1401
      %1403 = vset.pattern.permute.xlu0 13
      %1404 = vperm.xlu0 %1403, %v1334
      %v1405 = vpop.permute.xlu0 %1404
      %v1407 = vmul.f32 %v1405, %v850
      %v1408 = vadd.f32 %v1402, %v1407
      %1409 = vset.pattern.permute.xlu0 14
      %1410 = vperm.xlu0 %1409, %v1334
      %v1411 = vpop.permute.xlu0 %1410
      %v1413 = vmul.f32 %v1411, %v858
      %v1414 = vadd.f32 %v1408, %v1413
      %1415 = vset.pattern.permute.xlu0 15
      %1416 = vperm.xlu0 %1415, %v1334
      %v1417 = vpop.permute.xlu0 %1416
      %v1419 = vmul.f32 %v1417, %v866
      %v1420 = vadd.f32 %v1414, %v1419
      %v1421 = vmul.f32 %v1420, 0.5
      %v1422 = vtanh.pop %v1421
      %v1423 = vmul.f32 %v1422, 0.5
      %v1424 = vadd.f32 %v1423, 0.5
      %v1425 = vtanh.pop %v1420
      %v1426 = vmul.f32 %v1424, %v1328
      %1428 = vrot.lane.b32.xlu0 %v1425, 120
      %v1429 = vpop.permute.xlu0 %1428
      %v1431 = vmul.f32 %v1424, %v1429
      %1433 = vrot.lane.b32.xlu0 %v1431, 4
      %v1434 = vpop.permute.xlu0 %1433
      %v1436 = vadd.f32 %v1426, %v1434
      %v1437 = vtanh.pop %v1436
      %1439 = vrot.lane.b32.xlu0 %v1437, 8
      %v1440 = vpop.permute.xlu0 %1439
      %v1442 = vmul.f32 %v1424, %v1440
      %1444 = vrot.lane.b32.xlu0 %v1442, 116
      %v1445 = vpop.permute.xlu0 %1444
      %s1447 = scalar_lea.vmem [#allocation3], %s1394
      %1448 = vst.msk [vmem:[%s1447] sm:$0x1] %vm901, %v1445
      %s1449 = scalar_lea.vmem [#allocation5], %s1394
      %v1450 = vld [vmem:[%s1449] sm:$0x1]
      %1451 = vset.pattern.permute.xlu0 12
      %1452 = vperm.xlu0 %1451, %v1388
      %v1453 = vpop.permute.xlu0 %1452
      %v1455 = vmul.f32 %v1453, %v820
      %v1456 = vadd.f32 %v1450, %v1455
      %1457 = vset.pattern.permute.xlu0 13
      %1458 = vperm.xlu0 %1457, %v1388
      %v1459 = vpop.permute.xlu0 %1458
      %v1461 = vmul.f32 %v1459, %v850
      %v1462 = vadd.f32 %v1456, %v1461
      %1463 = vset.pattern.permute.xlu0 14
      %1464 = vperm.xlu0 %1463, %v1388
      %v1465 = vpop.permute.xlu0 %1464
      %v1467 = vmul.f32 %v1465, %v858
      %v1468 = vadd.f32 %v1462, %v1467
      %1469 = vset.pattern.permute.xlu0 15
      %1470 = vperm.xlu0 %1469, %v1388
      %v1471 = vpop.permute.xlu0 %1470
      %v1473 = vmul.f32 %v1471, %v866
      %v1474 = vadd.f32 %v1468, %v1473
      %v1475 = vmul.f32 %v1474, 0.5
      %v1476 = vtanh.pop %v1475
      %v1477 = vmul.f32 %v1476, 0.5
      %v1478 = vadd.f32 %v1477, 0.5
      %v1479 = vtanh.pop %v1474
      %v1480 = vmul.f32 %v1478, %v1382
      %1482 = vrot.lane.b32.xlu0 %v1479, 120
      %v1483 = vpop.permute.xlu0 %1482
      %v1485 = vmul.f32 %v1478, %v1483
      %1487 = vrot.lane.b32.xlu0 %v1485, 4
      %v1488 = vpop.permute.xlu0 %1487
      %v1490 = vadd.f32 %v1480, %v1488
      %v1491 = vtanh.pop %v1490
      %1493 = vrot.lane.b32.xlu0 %v1491, 8
      %v1494 = vpop.permute.xlu0 %1493
      %v1496 = vmul.f32 %v1478, %v1494
      %1498 = vrot.lane.b32.xlu0 %v1496, 120
      %v1499 = vpop.permute.xlu0 %1498
      %1501 = vst.msk [vmem:[%s1447] sm:$0x1] %vm960, %v1499
      %s1502 = sadd.s32 %s835, 6
      %s1503 = scalar_lea.vmem [#allocation4], %s1502
      %v1504 = vld [vmem:[%s1503] sm:$0x1]
      %1505 = vset.pattern.permute.xlu0 12
      %1506 = vperm.xlu0 %1505, %v1442
      %v1507 = vpop.permute.xlu0 %1506
      %v1509 = vmul.f32 %v1507, %v820
      %v1510 = vadd.f32 %v1504, %v1509
      %1511 = vset.pattern.permute.xlu0 13
      %1512 = vperm.xlu0 %1511, %v1442
      %v1513 = vpop.permute.xlu0 %1512
      %v1515 = vmul.f32 %v1513, %v850
      %v1516 = vadd.f32 %v1510, %v1515
      %1517 = vset.pattern.permute.xlu0 14
      %1518 = vperm.xlu0 %1517, %v1442
      %v1519 = vpop.permute.xlu0 %1518
      %v1521 = vmul.f32 %v1519, %v858
      %v1522 = vadd.f32 %v1516, %v1521
      %1523 = vset.pattern.permute.xlu0 15
      %1524 = vperm.xlu0 %1523, %v1442
      %v1525 = vpop.permute.xlu0 %1524
      %v1527 = vmul.f32 %v1525, %v866
      %v1528 = vadd.f32 %v1522, %v1527
      %v1529 = vmul.f32 %v1528, 0.5
      %v1530 = vtanh.pop %v1529
      %v1531 = vmul.f32 %v1530, 0.5
      %v1532 = vadd.f32 %v1531, 0.5
      %v1533 = vtanh.pop %v1528
      %v1534 = vmul.f32 %v1532, %v1436
      %1536 = vrot.lane.b32.xlu0 %v1533, 120
      %v1537 = vpop.permute.xlu0 %1536
      %v1539 = vmul.f32 %v1532, %v1537
      %1541 = vrot.lane.b32.xlu0 %v1539, 4
      %v1542 = vpop.permute.xlu0 %1541
      %v1544 = vadd.f32 %v1534, %v1542
      %v1545 = vtanh.pop %v1544
      %1547 = vrot.lane.b32.xlu0 %v1545, 8
      %v1548 = vpop.permute.xlu0 %1547
      %v1550 = vmul.f32 %v1532, %v1548
      %1552 = vrot.lane.b32.xlu0 %v1550, 116
      %v1553 = vpop.permute.xlu0 %1552
      %s1555 = scalar_lea.vmem [#allocation3], %s1502
      %1556 = vst.msk [vmem:[%s1555] sm:$0x1] %vm901, %v1553
      %s1557 = scalar_lea.vmem [#allocation5], %s1502
      %v1558 = vld [vmem:[%s1557] sm:$0x1]
      %1559 = vset.pattern.permute.xlu0 12
      %1560 = vperm.xlu0 %1559, %v1496
      %v1561 = vpop.permute.xlu0 %1560
      %v1563 = vmul.f32 %v1561, %v820
      %v1564 = vadd.f32 %v1558, %v1563
      %1565 = vset.pattern.permute.xlu0 13
      %1566 = vperm.xlu0 %1565, %v1496
      %v1567 = vpop.permute.xlu0 %1566
      %v1569 = vmul.f32 %v1567, %v850
      %v1570 = vadd.f32 %v1564, %v1569
      %1571 = vset.pattern.permute.xlu0 14
      %1572 = vperm.xlu0 %1571, %v1496
      %v1573 = vpop.permute.xlu0 %1572
      %v1575 = vmul.f32 %v1573, %v858
      %v1576 = vadd.f32 %v1570, %v1575
      %1577 = vset.pattern.permute.xlu0 15
      %1578 = vperm.xlu0 %1577, %v1496
      %v1579 = vpop.permute.xlu0 %1578
      %v1581 = vmul.f32 %v1579, %v866
      %v1582 = vadd.f32 %v1576, %v1581
      %v1583 = vmul.f32 %v1582, 0.5
      %v1584 = vtanh.pop %v1583
      %v1585 = vmul.f32 %v1584, 0.5
      %v1586 = vadd.f32 %v1585, 0.5
      %v1587 = vtanh.pop %v1582
      %v1588 = vmul.f32 %v1586, %v1490
      %1590 = vrot.lane.b32.xlu0 %v1587, 120
      %v1591 = vpop.permute.xlu0 %1590
      %v1593 = vmul.f32 %v1586, %v1591
      %1595 = vrot.lane.b32.xlu0 %v1593, 4
      %v1596 = vpop.permute.xlu0 %1595
      %v1598 = vadd.f32 %v1588, %v1596
      %v1599 = vtanh.pop %v1598
      %1601 = vrot.lane.b32.xlu0 %v1599, 8
      %v1602 = vpop.permute.xlu0 %1601
      %v1604 = vmul.f32 %v1586, %v1602
      %1606 = vrot.lane.b32.xlu0 %v1604, 120
      %v1607 = vpop.permute.xlu0 %1606
      %1609 = vst.msk [vmem:[%s1555] sm:$0x1] %vm960, %v1607
      %s1610 = sadd.s32 %s835, 7
      %s1611 = scalar_lea.vmem [#allocation4], %s1610
      %v1612 = vld [vmem:[%s1611] sm:$0x1]
      %1613 = vset.pattern.permute.xlu0 12
      %1614 = vperm.xlu0 %1613, %v1550
      %v1615 = vpop.permute.xlu0 %1614
      %v1617 = vmul.f32 %v1615, %v820
      %v1618 = vadd.f32 %v1612, %v1617
      %1619 = vset.pattern.permute.xlu0 13
      %1620 = vperm.xlu0 %1619, %v1550
      %v1621 = vpop.permute.xlu0 %1620
      %v1623 = vmul.f32 %v1621, %v850
      %v1624 = vadd.f32 %v1618, %v1623
      %1625 = vset.pattern.permute.xlu0 14
      %1626 = vperm.xlu0 %1625, %v1550
      %v1627 = vpop.permute.xlu0 %1626
      %v1629 = vmul.f32 %v1627, %v858
      %v1630 = vadd.f32 %v1624, %v1629
      %1631 = vset.pattern.permute.xlu0 15
      %1632 = vperm.xlu0 %1631, %v1550
      %v1633 = vpop.permute.xlu0 %1632
      %v1635 = vmul.f32 %v1633, %v866
      %v1636 = vadd.f32 %v1630, %v1635
      %v1637 = vmul.f32 %v1636, 0.5
      %v1638 = vtanh.pop %v1637
      %v1639 = vmul.f32 %v1638, 0.5
      %v1640 = vadd.f32 %v1639, 0.5
      %v1641 = vtanh.pop %v1636
      %v1642 = vmul.f32 %v1640, %v1544
      %1644 = vrot.lane.b32.xlu0 %v1641, 120
      %v1645 = vpop.permute.xlu0 %1644
      %v1647 = vmul.f32 %v1640, %v1645
      %1649 = vrot.lane.b32.xlu0 %v1647, 4
      %v1650 = vpop.permute.xlu0 %1649
      %v1652 = vadd.f32 %v1642, %v1650
      %v1653 = vtanh.pop %v1652
      %1655 = vrot.lane.b32.xlu0 %v1653, 8
      %v1656 = vpop.permute.xlu0 %1655
      %v1658 = vmul.f32 %v1640, %v1656
      %1660 = vrot.lane.b32.xlu0 %v1658, 116
      %v1661 = vpop.permute.xlu0 %1660
      %s1663 = scalar_lea.vmem [#allocation3], %s1610
      %1664 = vst.msk [vmem:[%s1663] sm:$0x1] %vm901, %v1661
      %s1665 = scalar_lea.vmem [#allocation5], %s1610
      %v1666 = vld [vmem:[%s1665] sm:$0x1]
      %1667 = vset.pattern.permute.xlu0 12
      %1668 = vperm.xlu0 %1667, %v1604
      %v1669 = vpop.permute.xlu0 %1668
      %v1671 = vmul.f32 %v1669, %v820
      %v1672 = vadd.f32 %v1666, %v1671
      %1673 = vset.pattern.permute.xlu0 13
      %1674 = vperm.xlu0 %1673, %v1604
      %v1675 = vpop.permute.xlu0 %1674
      %v1677 = vmul.f32 %v1675, %v850
      %v1678 = vadd.f32 %v1672, %v1677
      %1679 = vset.pattern.permute.xlu0 14
      %1680 = vperm.xlu0 %1679, %v1604
      %v1681 = vpop.permute.xlu0 %1680
      %v1683 = vmul.f32 %v1681, %v858
      %v1684 = vadd.f32 %v1678, %v1683
      %1685 = vset.pattern.permute.xlu0 15
      %1686 = vperm.xlu0 %1685, %v1604
      %v1687 = vpop.permute.xlu0 %1686
      %v1689 = vmul.f32 %v1687, %v866
      %v1690 = vadd.f32 %v1684, %v1689
      %v1691 = vmul.f32 %v1690, 0.5
      %v1692 = vtanh.pop %v1691
      %v1693 = vmul.f32 %v1692, 0.5
      %v1694 = vadd.f32 %v1693, 0.5
      %v1695 = vtanh.pop %v1690
      %v1696 = vmul.f32 %v1694, %v1598
      %1698 = vrot.lane.b32.xlu0 %v1695, 120
      %v1699 = vpop.permute.xlu0 %1698
      %v1701 = vmul.f32 %v1694, %v1699
      %1703 = vrot.lane.b32.xlu0 %v1701, 4
      %v1704 = vpop.permute.xlu0 %1703
      %v1706 = vadd.f32 %v1696, %v1704
      %v1707 = vtanh.pop %v1706
      %1709 = vrot.lane.b32.xlu0 %v1707, 8
      %v1710 = vpop.permute.xlu0 %1709
      %v1712 = vmul.f32 %v1694, %v1710
      %1714 = vrot.lane.b32.xlu0 %v1712, 120
      %v1715 = vpop.permute.xlu0 %1714
      %1717 = vst.msk [vmem:[%s1663] sm:$0x1] %vm960, %v1715
      %1718 = vrot.lane.b32.xlu0 %v1712, 116
      %v1719 = vpop.permute.xlu0 %1718
      %1722 = vrot.lane.b32.xlu0 %v1652, 124
      %v1723 = vpop.permute.xlu0 %1722
      %1726 = vrot.lane.b32.xlu0 %v1706, 124
      %v1727 = vpop.permute.xlu0 %1726
    $region62: #{mha_lstm_sublayer_forward.1} parent=1 // loop_footer
      %s830 = sadd.s32 1, %s826
    $region63: #{mha_lstm_sublayer_forward.1} parent=1 // loop_footer_branch
      %825 = sbr.rel target = $region59
    $region64: #{mha_lstm_sublayer_forward.1} parent=1 // loop_exit
      _
    %vm1729 = vcmask 24576
    %1730 = vst.msk [vmem:[#allocation12] sm:$0x1] %vm1729, %v831
    %1731 = vst.msk [vmem:[#allocation14] sm:$0x1] %vm1729, %v833
    %1732 = vst.msk [vmem:[#allocation12 + $0x1] sm:$0x1] %vm1729, %v832
    %1733 = vst.msk [vmem:[#allocation14 + $0x1] sm:$0x1] %vm1729, %v834
    %v1734 = vld [vmem:[%s4] sm:$0xff]
    %v1735 = vld [vmem:[%s4 + $0x8] sm:$0xff]
    %v1736 = vld [vmem:[%s4 + $0x10] sm:$0xff]
    %v1737 = vld [vmem:[%s4 + $0x18] sm:$0xff]
    %v1738 = vld [vmem:[%s4 + $0x20] sm:$0xff]
    %v1739 = vld [vmem:[%s4 + $0x28] sm:$0xff]
    %v1740 = vld [vmem:[%s4 + $0x30] sm:$0xff]
    %v1741 = vld [vmem:[%s4 + $0x38] sm:$0xff]
    %v1742 = vld [vmem:[#allocation3] sm:$0xff]
    %v1743 = vsel %vm238, %v1742, -inf
    %1744 = vmax.xlane.f32.xlu0 %v1743
    %v1745 = vpop.xlane.xlu0 %1744
    %v1746 = vsub.f32 %v1742, %v1745
    %v1747 = vmul.f32 %v1746, 1.442695
    %v1748 = vpow.pop %v1747
    %v1749 = vsel %vm238, %v1748, 0.0
    %1750 = vadd.xlane.f32.xlu0 %v1749
    %v1751 = vpop.xlane.xlu0 %1750
    %v1752 = vrcp.pop %v1751
    %v1753 = vmul.f32 %v1748, %v1752
    %1754 = vrot.lane.b32.xlu0 %v151, 64
    %v1755 = vpop.permute.xlu0 %1754
    %v1758 = vsel %vm238, %v1753, 0
    %1760 = vmatprep.subr.mxu0 0.0
    %1761 = vmatpush1.msra.mxu0 0.0
    %1762 = vmatprep.subr.mxu0 0.0
    %1763 = vmatpush1.msra.mxu0 0.0
    %1764 = vmatprep.subr.mxu0 0.0
    %1765 = vmatpush1.msra.mxu0 0.0
    %1766 = vmatprep.subr.mxu0 0.0
    %1767 = vmatpush1.msra.mxu0 0.0
    %1768 = vmatprep.subr.mxu0 0.0
    %1769 = vmatpush1.msra.mxu0 0.0
    %1770 = vmatprep.subr.mxu0 0.0
    %1771 = vmatpush1.msra.mxu0 0.0
    %1772 = vmatprep.subr.mxu0 0.0
    %1773 = vmatpush1.msra.mxu0 0.0
    %1774 = vmatprep.subr.mxu0 0.0
    %1775 = vmatpush1.msra.mxu0 0.0
    %1776 = vmatprep.subr.mxu0 0.0
    %1777 = vmatpush1.msra.mxu0 0.0
    %1778 = vmatprep.subr.mxu0 0.0
    %1779 = vmatpush1.msra.mxu0 0.0
    %1780 = vmatprep.subr.mxu0 0.0
    %1781 = vmatpush1.msra.mxu0 0.0
    %1782 = vmatprep.subr.mxu0 0.0
    %1783 = vmatpush1.msra.mxu0 0.0
    %1784 = vmatprep.subr.mxu0 0.0
    %1785 = vmatpush1.msra.mxu0 0.0
    %1786 = vmatprep.subr.mxu0 0.0
    %1787 = vmatpush1.msra.mxu0 0.0
    %1788 = vmatprep.subr.mxu0 0.0
    %1789 = vmatpush1.msra.mxu0 0.0
    %1790 = vmatprep.subr.mxu0 0.0
    %1791 = vmatpush1.msra.mxu0 %v1755
    %1792 = vmatprep.subr.mxu0 0.0
    %1793 = vmatpush2.msra.mxu0 0.0
    %1794 = vmatprep.subr.mxu0 0.0
    %1795 = vmatpush2.msra.mxu0 0.0
    %1796 = vmatprep.subr.mxu0 0.0
    %1797 = vmatpush2.msra.mxu0 0.0
    %1798 = vmatprep.subr.mxu0 0.0
    %1799 = vmatpush2.msra.mxu0 0.0
    %1800 = vmatprep.subr.mxu0 0.0
    %1801 = vmatpush2.msra.mxu0 0.0
    %1802 = vmatprep.subr.mxu0 0.0
    %1803 = vmatpush2.msra.mxu0 0.0
    %1804 = vmatprep.subr.mxu0 0.0
    %1805 = vmatpush2.msra.mxu0 0.0
    %1806 = vmatprep.subr.mxu0 0.0
    %1807 = vmatpush2.msra.mxu0 0.0
    %1808 = vmatprep.subr.mxu0 0.0
    %1809 = vmatpush2.msra.mxu0 0.0
    %1810 = vmatprep.subr.mxu0 0.0
    %1811 = vmatpush2.msra.mxu0 0.0
    %1812 = vmatprep.subr.mxu0 0.0
    %1813 = vmatpush2.msra.mxu0 0.0
    %1814 = vmatprep.subr.mxu0 0.0
    %1815 = vmatpush2.msra.mxu0 0.0
    %1816 = vmatprep.subr.mxu0 0.0
    %1817 = vmatpush2.msra.mxu0 0.0
    %1818 = vmatprep.subr.mxu0 0.0
    %1819 = vmatpush2.msra.mxu0 0.0
    %1820 = vmatprep.subr.mxu0 0.0
    %1821 = vmatpush2.msra.mxu0 0.0
    %1822 = vmatprep.subr.mxu0 0.0
    %1823 = vmatpush2.msra.mxu0 0.0
    %1824 = vmatprep.mubr.f32.mxu0 0.0
    %1825 = vmatmul.mubr.f32.gmra.mxu0 %v1758
    %v1826 = vpop.f32.mrf.mxu0
    %v1827 = vadd.f32 0.0, %v1826
    %v1828 = vpop.f32.mrf.mxu0
    %1829 = vdwg.mxu0
    %v1830 = vld [vmem:[#allocation3 + $0x10] sm:$0xff]
    %v1831 = vsel %vm238, %v1830, -inf
    %1832 = vmax.xlane.f32.xlu0 %v1831
    %v1833 = vpop.xlane.xlu0 %1832
    %v1834 = vsub.f32 %v1830, %v1833
    %v1835 = vmul.f32 %v1834, 1.442695
    %v1836 = vpow.pop %v1835
    %v1837 = vsel %vm238, %v1836, 0.0
    %1838 = vadd.xlane.f32.xlu0 %v1837
    %v1839 = vpop.xlane.xlu0 %1838
    %v1840 = vrcp.pop %v1839
    %v1841 = vmul.f32 %v1836, %v1840
    %1842 = vrot.lane.b32.xlu0 %v151, 48
    %v1843 = vpop.permute.xlu0 %1842
    %v1846 = vsel %vm238, %v1841, 0
    %1848 = vmatprep.subr.mxu0 0.0
    %1849 = vmatpush1.msra.mxu0 0.0
    %1850 = vmatprep.subr.mxu0 0.0
    %1851 = vmatpush1.msra.mxu0 0.0
    %1852 = vmatprep.subr.mxu0 0.0
    %1853 = vmatpush1.msra.mxu0 0.0
    %1854 = vmatprep.subr.mxu0 0.0
    %1855 = vmatpush1.msra.mxu0 0.0
    %1856 = vmatprep.subr.mxu0 0.0
    %1857 = vmatpush1.msra.mxu0 0.0
    %1858 = vmatprep.subr.mxu0 0.0
    %1859 = vmatpush1.msra.mxu0 0.0
    %1860 = vmatprep.subr.mxu0 0.0
    %1861 = vmatpush1.msra.mxu0 0.0
    %1862 = vmatprep.subr.mxu0 0.0
    %1863 = vmatpush1.msra.mxu0 0.0
    %1864 = vmatprep.subr.mxu0 0.0
    %1865 = vmatpush1.msra.mxu0 0.0
    %1866 = vmatprep.subr.mxu0 0.0
    %1867 = vmatpush1.msra.mxu0 0.0
    %1868 = vmatprep.subr.mxu0 0.0
    %1869 = vmatpush1.msra.mxu0 0.0
    %1870 = vmatprep.subr.mxu0 0.0
    %1871 = vmatpush1.msra.mxu0 0.0
    %1872 = vmatprep.subr.mxu0 0.0
    %1873 = vmatpush1.msra.mxu0 0.0
    %1874 = vmatprep.subr.mxu0 0.0
    %1875 = vmatpush1.msra.mxu0 0.0
    %1876 = vmatprep.subr.mxu0 0.0
    %1877 = vmatpush1.msra.mxu0 0.0
    %1878 = vmatprep.subr.mxu0 0.0
    %1879 = vmatpush1.msra.mxu0 %v1843
    %1880 = vmatprep.subr.mxu0 0.0
    %1881 = vmatpush2.msra.mxu0 0.0
    %1882 = vmatprep.subr.mxu0 0.0
    %1883 = vmatpush2.msra.mxu0 0.0
    %1884 = vmatprep.subr.mxu0 0.0
    %1885 = vmatpush2.msra.mxu0 0.0
    %1886 = vmatprep.subr.mxu0 0.0
    %1887 = vmatpush2.msra.mxu0 0.0
    %1888 = vmatprep.subr.mxu0 0.0
    %1889 = vmatpush2.msra.mxu0 0.0
    %1890 = vmatprep.subr.mxu0 0.0
    %1891 = vmatpush2.msra.mxu0 0.0
    %1892 = vmatprep.subr.mxu0 0.0
    %1893 = vmatpush2.msra.mxu0 0.0
    %1894 = vmatprep.subr.mxu0 0.0
    %1895 = vmatpush2.msra.mxu0 0.0
    %1896 = vmatprep.subr.mxu0 0.0
    %1897 = vmatpush2.msra.mxu0 0.0
    %1898 = vmatprep.subr.mxu0 0.0
    %1899 = vmatpush2.msra.mxu0 0.0
    %1900 = vmatprep.subr.mxu0 0.0
    %1901 = vmatpush2.msra.mxu0 0.0
    %1902 = vmatprep.subr.mxu0 0.0
    %1903 = vmatpush2.msra.mxu0 0.0
    %1904 = vmatprep.subr.mxu0 0.0
    %1905 = vmatpush2.msra.mxu0 0.0
    %1906 = vmatprep.subr.mxu0 0.0
    %1907 = vmatpush2.msra.mxu0 0.0
    %1908 = vmatprep.subr.mxu0 0.0
    %1909 = vmatpush2.msra.mxu0 0.0
    %1910 = vmatprep.subr.mxu0 0.0
    %1911 = vmatpush2.msra.mxu0 0.0
    %1912 = vmatprep.mubr.f32.mxu0 0.0
    %1913 = vmatmul.mubr.f32.gmra.mxu0 %v1846
    %v1914 = vpop.f32.mrf.mxu0
    %v1915 = vadd.f32 0.0, %v1914
    %v1916 = vpop.f32.mrf.mxu0
    %1917 = vdwg.mxu0
    %v1919 = vsel %vm162, %v1915, 0
    %1921 = vmatprep.subr.mxu0 0.0
    %1922 = vmatpush1.msra.mxu0 0.0
    %1923 = vmatprep.subr.mxu0 0.0
    %1924 = vmatpush1.msra.mxu0 0.0
    %1925 = vmatprep.subr.mxu0 0.0
    %1926 = vmatpush1.msra.mxu0 0.0
    %1927 = vmatprep.subr.mxu0 0.0
    %1928 = vmatpush1.msra.mxu0 0.0
    %1929 = vmatprep.subr.mxu0 0.0
    %1930 = vmatpush1.msra.mxu0 0.0
    %1931 = vmatprep.subr.mxu0 0.0
    %1932 = vmatpush1.msra.mxu0 0.0
    %1933 = vmatprep.subr.mxu0 0.0
    %1934 = vmatpush1.msra.mxu0 0.0
    %1935 = vmatprep.subr.mxu0 0.0
    %1936 = vmatpush1.msra.mxu0 0.0
    %1937 = vmatprep.subr.mxu0 0.0
    %1938 = vmatpush1.msra.mxu0 0.0
    %1939 = vmatprep.subr.mxu0 0.0
    %1940 = vmatpush1.msra.mxu0 0.0
    %1941 = vmatprep.subr.mxu0 0.0
    %1942 = vmatpush1.msra.mxu0 0.0
    %1943 = vmatprep.subr.mxu0 0.0
    %1944 = vmatpush1.msra.mxu0 0.0
    %1945 = vmatprep.subr.mxu0 0.0
    %1946 = vmatpush1.msra.mxu0 0.0
    %1947 = vmatprep.subr.mxu0 0.0
    %1948 = vmatpush1.msra.mxu0 0.0
    %1949 = vmatprep.subr.mxu0 0.0
    %1950 = vmatpush1.msra.mxu0 %v1737
    %1951 = vmatprep.subr.mxu0 0.0
    %1952 = vmatpush1.msra.mxu0 %v1736
    %1953 = vmatprep.subr.mxu0 0.0
    %1954 = vmatpush2.msra.mxu0 0.0
    %1955 = vmatprep.subr.mxu0 0.0
    %1956 = vmatpush2.msra.mxu0 0.0
    %1957 = vmatprep.subr.mxu0 0.0
    %1958 = vmatpush2.msra.mxu0 0.0
    %1959 = vmatprep.subr.mxu0 0.0
    %1960 = vmatpush2.msra.mxu0 0.0
    %1961 = vmatprep.subr.mxu0 0.0
    %1962 = vmatpush2.msra.mxu0 0.0
    %1963 = vmatprep.subr.mxu0 0.0
    %1964 = vmatpush2.msra.mxu0 0.0
    %1965 = vmatprep.subr.mxu0 0.0
    %1966 = vmatpush2.msra.mxu0 0.0
    %1967 = vmatprep.subr.mxu0 0.0
    %1968 = vmatpush2.msra.mxu0 0.0
    %1969 = vmatprep.subr.mxu0 0.0
    %1970 = vmatpush2.msra.mxu0 0.0
    %1971 = vmatprep.subr.mxu0 0.0
    %1972 = vmatpush2.msra.mxu0 0.0
    %1973 = vmatprep.subr.mxu0 0.0
    %1974 = vmatpush2.msra.mxu0 0.0
    %1975 = vmatprep.subr.mxu0 0.0
    %1976 = vmatpush2.msra.mxu0 0.0
    %1977 = vmatprep.subr.mxu0 0.0
    %1978 = vmatpush2.msra.mxu0 0.0
    %1979 = vmatprep.subr.mxu0 0.0
    %1980 = vmatpush2.msra.mxu0 0.0
    %1981 = vmatprep.subr.mxu0 0.0
    %1982 = vmatpush2.msra.mxu0 0.0
    %1983 = vmatprep.subr.mxu0 0.0
    %1984 = vmatpush2.msra.mxu0 0.0
    %1985 = vmatprep.mubr.f32.mxu0 0.0
    %1986 = vmatmul.mubr.f32.gmra.mxu0 %v1919
    %v1987 = vpop.f32.mrf.mxu0
    %v1988 = vadd.f32 0.0, %v1987
    %v1989 = vpop.f32.mrf.mxu0
    %1990 = vdwg.mxu0
    %v1992 = vsel %vm162, %v1827, 0
    %1994 = vmatprep.subr.mxu0 0.0
    %1995 = vmatpush1.msra.mxu0 0.0
    %1996 = vmatprep.subr.mxu0 0.0
    %1997 = vmatpush1.msra.mxu0 0.0
    %1998 = vmatprep.subr.mxu0 0.0
    %1999 = vmatpush1.msra.mxu0 0.0
    %2000 = vmatprep.subr.mxu0 0.0
    %2001 = vmatpush1.msra.mxu0 0.0
    %2002 = vmatprep.subr.mxu0 0.0
    %2003 = vmatpush1.msra.mxu0 0.0
    %2004 = vmatprep.subr.mxu0 0.0
    %2005 = vmatpush1.msra.mxu0 0.0
    %2006 = vmatprep.subr.mxu0 0.0
    %2007 = vmatpush1.msra.mxu0 0.0
    %2008 = vmatprep.subr.mxu0 0.0
    %2009 = vmatpush1.msra.mxu0 0.0
    %2010 = vmatprep.subr.mxu0 0.0
    %2011 = vmatpush1.msra.mxu0 0.0
    %2012 = vmatprep.subr.mxu0 0.0
    %2013 = vmatpush1.msra.mxu0 0.0
    %2014 = vmatprep.subr.mxu0 0.0
    %2015 = vmatpush1.msra.mxu0 0.0
    %2016 = vmatprep.subr.mxu0 0.0
    %2017 = vmatpush1.msra.mxu0 0.0
    %2018 = vmatprep.subr.mxu0 0.0
    %2019 = vmatpush1.msra.mxu0 0.0
    %2020 = vmatprep.subr.mxu0 0.0
    %2021 = vmatpush1.msra.mxu0 0.0
    %2022 = vmatprep.subr.mxu0 0.0
    %2023 = vmatpush1.msra.mxu0 %v1735
    %2024 = vmatprep.subr.mxu0 0.0
    %2025 = vmatpush1.msra.mxu0 %v1734
    %2026 = vmatprep.subr.mxu0 0.0
    %2027 = vmatpush2.msra.mxu0 0.0
    %2028 = vmatprep.subr.mxu0 0.0
    %2029 = vmatpush2.msra.mxu0 0.0
    %2030 = vmatprep.subr.mxu0 0.0
    %2031 = vmatpush2.msra.mxu0 0.0
    %2032 = vmatprep.subr.mxu0 0.0
    %2033 = vmatpush2.msra.mxu0 0.0
    %2034 = vmatprep.subr.mxu0 0.0
    %2035 = vmatpush2.msra.mxu0 0.0
    %2036 = vmatprep.subr.mxu0 0.0
    %2037 = vmatpush2.msra.mxu0 0.0
    %2038 = vmatprep.subr.mxu0 0.0
    %2039 = vmatpush2.msra.mxu0 0.0
    %2040 = vmatprep.subr.mxu0 0.0
    %2041 = vmatpush2.msra.mxu0 0.0
    %2042 = vmatprep.subr.mxu0 0.0
    %2043 = vmatpush2.msra.mxu0 0.0
    %2044 = vmatprep.subr.mxu0 0.0
    %2045 = vmatpush2.msra.mxu0 0.0
    %2046 = vmatprep.subr.mxu0 0.0
    %2047 = vmatpush2.msra.mxu0 0.0
    %2048 = vmatprep.subr.mxu0 0.0
    %2049 = vmatpush2.msra.mxu0 0.0
    %2050 = vmatprep.subr.mxu0 0.0
    %2051 = vmatpush2.msra.mxu0 0.0
    %2052 = vmatprep.subr.mxu0 0.0
    %2053 = vmatpush2.msra.mxu0 0.0
    %2054 = vmatprep.subr.mxu0 0.0
    %2055 = vmatpush2.msra.mxu0 0.0
    %2056 = vmatprep.subr.mxu0 0.0
    %2057 = vmatpush2.msra.mxu0 0.0
    %2058 = vmatprep.mubr.f32.mxu0 0.0
    %2059 = vmatmul.mubr.f32.gmra.mxu0 %v1992
    %v2060 = vpop.f32.mrf.mxu0
    %v2061 = vadd.f32 %v1988, %v2060
    %v2062 = vpop.f32.mrf.mxu0
    %2063 = vdwg.mxu0
    %v2064 = vld [vmem:[#allocation3 + $0x20] sm:$0xff]
    %v2065 = vsel %vm238, %v2064, -inf
    %2066 = vmax.xlane.f32.xlu0 %v2065
    %v2067 = vpop.xlane.xlu0 %2066
    %v2068 = vsub.f32 %v2064, %v2067
    %v2069 = vmul.f32 %v2068, 1.442695
    %v2070 = vpow.pop %v2069
    %v2071 = vsel %vm238, %v2070, 0.0
    %2072 = vadd.xlane.f32.xlu0 %v2071
    %v2073 = vpop.xlane.xlu0 %2072
    %v2074 = vrcp.pop %v2073
    %v2075 = vmul.f32 %v2070, %v2074
    %2076 = vrot.lane.b32.xlu0 %v151, 32
    %v2077 = vpop.permute.xlu0 %2076
    %v2080 = vsel %vm238, %v2075, 0
    %2082 = vmatprep.subr.mxu0 0.0
    %2083 = vmatpush1.msra.mxu0 0.0
    %2084 = vmatprep.subr.mxu0 0.0
    %2085 = vmatpush1.msra.mxu0 0.0
    %2086 = vmatprep.subr.mxu0 0.0
    %2087 = vmatpush1.msra.mxu0 0.0
    %2088 = vmatprep.subr.mxu0 0.0
    %2089 = vmatpush1.msra.mxu0 0.0
    %2090 = vmatprep.subr.mxu0 0.0
    %2091 = vmatpush1.msra.mxu0 0.0
    %2092 = vmatprep.subr.mxu0 0.0
    %2093 = vmatpush1.msra.mxu0 0.0
    %2094 = vmatprep.subr.mxu0 0.0
    %2095 = vmatpush1.msra.mxu0 0.0
    %2096 = vmatprep.subr.mxu0 0.0
    %2097 = vmatpush1.msra.mxu0 0.0
    %2098 = vmatprep.subr.mxu0 0.0
    %2099 = vmatpush1.msra.mxu0 0.0
    %2100 = vmatprep.subr.mxu0 0.0
    %2101 = vmatpush1.msra.mxu0 0.0
    %2102 = vmatprep.subr.mxu0 0.0
    %2103 = vmatpush1.msra.mxu0 0.0
    %2104 = vmatprep.subr.mxu0 0.0
    %2105 = vmatpush1.msra.mxu0 0.0
    %2106 = vmatprep.subr.mxu0 0.0
    %2107 = vmatpush1.msra.mxu0 0.0
    %2108 = vmatprep.subr.mxu0 0.0
    %2109 = vmatpush1.msra.mxu0 0.0
    %2110 = vmatprep.subr.mxu0 0.0
    %2111 = vmatpush1.msra.mxu0 0.0
    %2112 = vmatprep.subr.mxu0 0.0
    %2113 = vmatpush1.msra.mxu0 %v2077
    %2114 = vmatprep.subr.mxu0 0.0
    %2115 = vmatpush2.msra.mxu0 0.0
    %2116 = vmatprep.subr.mxu0 0.0
    %2117 = vmatpush2.msra.mxu0 0.0
    %2118 = vmatprep.subr.mxu0 0.0
    %2119 = vmatpush2.msra.mxu0 0.0
    %2120 = vmatprep.subr.mxu0 0.0
    %2121 = vmatpush2.msra.mxu0 0.0
    %2122 = vmatprep.subr.mxu0 0.0
    %2123 = vmatpush2.msra.mxu0 0.0
    %2124 = vmatprep.subr.mxu0 0.0
    %2125 = vmatpush2.msra.mxu0 0.0
    %2126 = vmatprep.subr.mxu0 0.0
    %2127 = vmatpush2.msra.mxu0 0.0
    %2128 = vmatprep.subr.mxu0 0.0
    %2129 = vmatpush2.msra.mxu0 0.0
    %2130 = vmatprep.subr.mxu0 0.0
    %2131 = vmatpush2.msra.mxu0 0.0
    %2132 = vmatprep.subr.mxu0 0.0
    %2133 = vmatpush2.msra.mxu0 0.0
    %2134 = vmatprep.subr.mxu0 0.0
    %2135 = vmatpush2.msra.mxu0 0.0
    %2136 = vmatprep.subr.mxu0 0.0
    %2137 = vmatpush2.msra.mxu0 0.0
    %2138 = vmatprep.subr.mxu0 0.0
    %2139 = vmatpush2.msra.mxu0 0.0
    %2140 = vmatprep.subr.mxu0 0.0
    %2141 = vmatpush2.msra.mxu0 0.0
    %2142 = vmatprep.subr.mxu0 0.0
    %2143 = vmatpush2.msra.mxu0 0.0
    %2144 = vmatprep.subr.mxu0 0.0
    %2145 = vmatpush2.msra.mxu0 0.0
    %2146 = vmatprep.mubr.f32.mxu0 0.0
    %2147 = vmatmul.mubr.f32.gmra.mxu0 %v2080
    %v2148 = vpop.f32.mrf.mxu0
    %v2149 = vadd.f32 0.0, %v2148
    %v2150 = vpop.f32.mrf.mxu0
    %2151 = vdwg.mxu0
    %v2153 = vsel %vm162, %v2149, 0
    %2155 = vmatprep.subr.mxu0 0.0
    %2156 = vmatpush1.msra.mxu0 0.0
    %2157 = vmatprep.subr.mxu0 0.0
    %2158 = vmatpush1.msra.mxu0 0.0
    %2159 = vmatprep.subr.mxu0 0.0
    %2160 = vmatpush1.msra.mxu0 0.0
    %2161 = vmatprep.subr.mxu0 0.0
    %2162 = vmatpush1.msra.mxu0 0.0
    %2163 = vmatprep.subr.mxu0 0.0
    %2164 = vmatpush1.msra.mxu0 0.0
    %2165 = vmatprep.subr.mxu0 0.0
    %2166 = vmatpush1.msra.mxu0 0.0
    %2167 = vmatprep.subr.mxu0 0.0
    %2168 = vmatpush1.msra.mxu0 0.0
    %2169 = vmatprep.subr.mxu0 0.0
    %2170 = vmatpush1.msra.mxu0 0.0
    %2171 = vmatprep.subr.mxu0 0.0
    %2172 = vmatpush1.msra.mxu0 0.0
    %2173 = vmatprep.subr.mxu0 0.0
    %2174 = vmatpush1.msra.mxu0 0.0
    %2175 = vmatprep.subr.mxu0 0.0
    %2176 = vmatpush1.msra.mxu0 0.0
    %2177 = vmatprep.subr.mxu0 0.0
    %2178 = vmatpush1.msra.mxu0 0.0
    %2179 = vmatprep.subr.mxu0 0.0
    %2180 = vmatpush1.msra.mxu0 0.0
    %2181 = vmatprep.subr.mxu0 0.0
    %2182 = vmatpush1.msra.mxu0 0.0
    %2183 = vmatprep.subr.mxu0 0.0
    %2184 = vmatpush1.msra.mxu0 %v1739
    %2185 = vmatprep.subr.mxu0 0.0
    %2186 = vmatpush1.msra.mxu0 %v1738
    %2187 = vmatprep.subr.mxu0 0.0
    %2188 = vmatpush2.msra.mxu0 0.0
    %2189 = vmatprep.subr.mxu0 0.0
    %2190 = vmatpush2.msra.mxu0 0.0
    %2191 = vmatprep.subr.mxu0 0.0
    %2192 = vmatpush2.msra.mxu0 0.0
    %2193 = vmatprep.subr.mxu0 0.0
    %2194 = vmatpush2.msra.mxu0 0.0
    %2195 = vmatprep.subr.mxu0 0.0
    %2196 = vmatpush2.msra.mxu0 0.0
    %2197 = vmatprep.subr.mxu0 0.0
    %2198 = vmatpush2.msra.mxu0 0.0
    %2199 = vmatprep.subr.mxu0 0.0
    %2200 = vmatpush2.msra.mxu0 0.0
    %2201 = vmatprep.subr.mxu0 0.0
    %2202 = vmatpush2.msra.mxu0 0.0
    %2203 = vmatprep.subr.mxu0 0.0
    %2204 = vmatpush2.msra.mxu0 0.0
    %2205 = vmatprep.subr.mxu0 0.0
    %2206 = vmatpush2.msra.mxu0 0.0
    %2207 = vmatprep.subr.mxu0 0.0
    %2208 = vmatpush2.msra.mxu0 0.0
    %2209 = vmatprep.subr.mxu0 0.0
    %2210 = vmatpush2.msra.mxu0 0.0
    %2211 = vmatprep.subr.mxu0 0.0
    %2212 = vmatpush2.msra.mxu0 0.0
    %2213 = vmatprep.subr.mxu0 0.0
    %2214 = vmatpush2.msra.mxu0 0.0
    %2215 = vmatprep.subr.mxu0 0.0
    %2216 = vmatpush2.msra.mxu0 0.0
    %2217 = vmatprep.subr.mxu0 0.0
    %2218 = vmatpush2.msra.mxu0 0.0
    %2219 = vmatprep.mubr.f32.mxu0 0.0
    %2220 = vmatmul.mubr.f32.gmra.mxu0 %v2153
    %v2221 = vpop.f32.mrf.mxu0
    %v2222 = vadd.f32 0.0, %v2221
    %v2223 = vpop.f32.mrf.mxu0
    %2224 = vdwg.mxu0
    %v2225 = vadd.f32 %v2061, %v2222
    %v2226 = vld [vmem:[#allocation3 + $0x30] sm:$0xff]
    %v2227 = vsel %vm238, %v2226, -inf
    %2228 = vmax.xlane.f32.xlu0 %v2227
    %v2229 = vpop.xlane.xlu0 %2228
    %v2230 = vsub.f32 %v2226, %v2229
    %v2231 = vmul.f32 %v2230, 1.442695
    %v2232 = vpow.pop %v2231
    %v2233 = vsel %vm238, %v2232, 0.0
    %2234 = vadd.xlane.f32.xlu0 %v2233
    %v2235 = vpop.xlane.xlu0 %2234
    %v2236 = vrcp.pop %v2235
    %v2237 = vmul.f32 %v2232, %v2236
    %2238 = vrot.lane.b32.xlu0 %v151, 16
    %v2239 = vpop.permute.xlu0 %2238
    %v2242 = vsel %vm238, %v2237, 0
    %2244 = vmatprep.subr.mxu0 0.0
    %2245 = vmatpush1.msra.mxu0 0.0
    %2246 = vmatprep.subr.mxu0 0.0
    %2247 = vmatpush1.msra.mxu0 0.0
    %2248 = vmatprep.subr.mxu0 0.0
    %2249 = vmatpush1.msra.mxu0 0.0
    %2250 = vmatprep.subr.mxu0 0.0
    %2251 = vmatpush1.msra.mxu0 0.0
    %2252 = vmatprep.subr.mxu0 0.0
    %2253 = vmatpush1.msra.mxu0 0.0
    %2254 = vmatprep.subr.mxu0 0.0
    %2255 = vmatpush1.msra.mxu0 0.0
    %2256 = vmatprep.subr.mxu0 0.0
    %2257 = vmatpush1.msra.mxu0 0.0
    %2258 = vmatprep.subr.mxu0 0.0
    %2259 = vmatpush1.msra.mxu0 0.0
    %2260 = vmatprep.subr.mxu0 0.0
    %2261 = vmatpush1.msra.mxu0 0.0
    %2262 = vmatprep.subr.mxu0 0.0
    %2263 = vmatpush1.msra.mxu0 0.0
    %2264 = vmatprep.subr.mxu0 0.0
    %2265 = vmatpush1.msra.mxu0 0.0
    %2266 = vmatprep.subr.mxu0 0.0
    %2267 = vmatpush1.msra.mxu0 0.0
    %2268 = vmatprep.subr.mxu0 0.0
    %2269 = vmatpush1.msra.mxu0 0.0
    %2270 = vmatprep.subr.mxu0 0.0
    %2271 = vmatpush1.msra.mxu0 0.0
    %2272 = vmatprep.subr.mxu0 0.0
    %2273 = vmatpush1.msra.mxu0 0.0
    %2274 = vmatprep.subr.mxu0 0.0
    %2275 = vmatpush1.msra.mxu0 %v2239
    %2276 = vmatprep.subr.mxu0 0.0
    %2277 = vmatpush2.msra.mxu0 0.0
    %2278 = vmatprep.subr.mxu0 0.0
    %2279 = vmatpush2.msra.mxu0 0.0
    %2280 = vmatprep.subr.mxu0 0.0
    %2281 = vmatpush2.msra.mxu0 0.0
    %2282 = vmatprep.subr.mxu0 0.0
    %2283 = vmatpush2.msra.mxu0 0.0
    %2284 = vmatprep.subr.mxu0 0.0
    %2285 = vmatpush2.msra.mxu0 0.0
    %2286 = vmatprep.subr.mxu0 0.0
    %2287 = vmatpush2.msra.mxu0 0.0
    %2288 = vmatprep.subr.mxu0 0.0
    %2289 = vmatpush2.msra.mxu0 0.0
    %2290 = vmatprep.subr.mxu0 0.0
    %2291 = vmatpush2.msra.mxu0 0.0
    %2292 = vmatprep.subr.mxu0 0.0
    %2293 = vmatpush2.msra.mxu0 0.0
    %2294 = vmatprep.subr.mxu0 0.0
    %2295 = vmatpush2.msra.mxu0 0.0
    %2296 = vmatprep.subr.mxu0 0.0
    %2297 = vmatpush2.msra.mxu0 0.0
    %2298 = vmatprep.subr.mxu0 0.0
    %2299 = vmatpush2.msra.mxu0 0.0
    %2300 = vmatprep.subr.mxu0 0.0
    %2301 = vmatpush2.msra.mxu0 0.0
    %2302 = vmatprep.subr.mxu0 0.0
    %2303 = vmatpush2.msra.mxu0 0.0
    %2304 = vmatprep.subr.mxu0 0.0
    %2305 = vmatpush2.msra.mxu0 0.0
    %2306 = vmatprep.subr.mxu0 0.0
    %2307 = vmatpush2.msra.mxu0 0.0
    %2308 = vmatprep.mubr.f32.mxu0 0.0
    %2309 = vmatmul.mubr.f32.gmra.mxu0 %v2242
    %v2310 = vpop.f32.mrf.mxu0
    %v2311 = vadd.f32 0.0, %v2310
    %v2312 = vpop.f32.mrf.mxu0
    %2313 = vdwg.mxu0
    %v2315 = vsel %vm162, %v2311, 0
    %2317 = vmatprep.subr.mxu0 0.0
    %2318 = vmatpush1.msra.mxu0 0.0
    %2319 = vmatprep.subr.mxu0 0.0
    %2320 = vmatpush1.msra.mxu0 0.0
    %2321 = vmatprep.subr.mxu0 0.0
    %2322 = vmatpush1.msra.mxu0 0.0
    %2323 = vmatprep.subr.mxu0 0.0
    %2324 = vmatpush1.msra.mxu0 0.0
    %2325 = vmatprep.subr.mxu0 0.0
    %2326 = vmatpush1.msra.mxu0 0.0
    %2327 = vmatprep.subr.mxu0 0.0
    %2328 = vmatpush1.msra.mxu0 0.0
    %2329 = vmatprep.subr.mxu0 0.0
    %2330 = vmatpush1.msra.mxu0 0.0
    %2331 = vmatprep.subr.mxu0 0.0
    %2332 = vmatpush1.msra.mxu0 0.0
    %2333 = vmatprep.subr.mxu0 0.0
    %2334 = vmatpush1.msra.mxu0 0.0
    %2335 = vmatprep.subr.mxu0 0.0
    %2336 = vmatpush1.msra.mxu0 0.0
    %2337 = vmatprep.subr.mxu0 0.0
    %2338 = vmatpush1.msra.mxu0 0.0
    %2339 = vmatprep.subr.mxu0 0.0
    %2340 = vmatpush1.msra.mxu0 0.0
    %2341 = vmatprep.subr.mxu0 0.0
    %2342 = vmatpush1.msra.mxu0 0.0
    %2343 = vmatprep.subr.mxu0 0.0
    %2344 = vmatpush1.msra.mxu0 0.0
    %2345 = vmatprep.subr.mxu0 0.0
    %2346 = vmatpush1.msra.mxu0 %v1741
    %2347 = vmatprep.subr.mxu0 0.0
    %2348 = vmatpush1.msra.mxu0 %v1740
    %2349 = vmatprep.subr.mxu0 0.0
    %2350 = vmatpush2.msra.mxu0 0.0
    %2351 = vmatprep.subr.mxu0 0.0
    %2352 = vmatpush2.msra.mxu0 0.0
    %2353 = vmatprep.subr.mxu0 0.0
    %2354 = vmatpush2.msra.mxu0 0.0
    %2355 = vmatprep.subr.mxu0 0.0
    %2356 = vmatpush2.msra.mxu0 0.0
    %2357 = vmatprep.subr.mxu0 0.0
    %2358 = vmatpush2.msra.mxu0 0.0
    %2359 = vmatprep.subr.mxu0 0.0
    %2360 = vmatpush2.msra.mxu0 0.0
    %2361 = vmatprep.subr.mxu0 0.0
    %2362 = vmatpush2.msra.mxu0 0.0
    %2363 = vmatprep.subr.mxu0 0.0
    %2364 = vmatpush2.msra.mxu0 0.0
    %2365 = vmatprep.subr.mxu0 0.0
    %2366 = vmatpush2.msra.mxu0 0.0
    %2367 = vmatprep.subr.mxu0 0.0
    %2368 = vmatpush2.msra.mxu0 0.0
    %2369 = vmatprep.subr.mxu0 0.0
    %2370 = vmatpush2.msra.mxu0 0.0
    %2371 = vmatprep.subr.mxu0 0.0
    %2372 = vmatpush2.msra.mxu0 0.0
    %2373 = vmatprep.subr.mxu0 0.0
    %2374 = vmatpush2.msra.mxu0 0.0
    %2375 = vmatprep.subr.mxu0 0.0
    %2376 = vmatpush2.msra.mxu0 0.0
    %2377 = vmatprep.subr.mxu0 0.0
    %2378 = vmatpush2.msra.mxu0 0.0
    %2379 = vmatprep.subr.mxu0 0.0
    %2380 = vmatpush2.msra.mxu0 0.0
    %2381 = vmatprep.mubr.f32.mxu0 0.0
    %2382 = vmatmul.mubr.f32.gmra.mxu0 %v2315
    %v2383 = vpop.f32.mrf.mxu0
    %v2384 = vadd.f32 0.0, %v2383
    %v2385 = vpop.f32.mrf.mxu0
    %2386 = vdwg.mxu0
    %v2387 = vadd.f32 %v2225, %v2384
    %v2388 = vld [vmem:[%s0] sm:$0xff]
    %v2389 = vadd.f32 %v2387, %v2388
    %v2390 = vsel %vm77, %v2389, 0.0
    %2391 = vadd.xlane.f32.xlu0 %v2390
    %v2392 = vpop.xlane.xlu0 %2391
    %v2393 = vrot.slane %v2392, 4
    %v2394 = vadd.f32 %v2392, %v2393
    %v2395 = vrot.slane %v2394, 2
    %v2396 = vadd.f32 %v2394, %v2395
    %v2397 = vrot.slane %v2396, 1
    %v2398 = vadd.f32 %v2396, %v2397
    %s2399 = vtos %v2398
    %v2400 = vrcp.pop 256.0
    %s2401 = vtos %v2400
    %s2402 = smul.f32 %s2399, %s2401
    %v2403 = vstv %s2402
    %v2404 = vsub.f32 %v2389, %v2403
    %v2405 = vmul.f32 %v2404, %v2404
    %v2406 = vsel %vm77, %v2405, 0.0
    %2407 = vadd.xlane.f32.xlu0 %v2406
    %v2408 = vpop.xlane.xlu0 %2407
    %v2409 = vrot.slane %v2408, 4
    %v2410 = vadd.f32 %v2408, %v2409
    %v2411 = vrot.slane %v2410, 2
    %v2412 = vadd.f32 %v2410, %v2411
    %v2413 = vrot.slane %v2412, 1
    %v2414 = vadd.f32 %v2412, %v2413
    %s2415 = vtos %v2414
    %v2416 = vrcp.pop 255.0
    %s2417 = vtos %v2416
    %s2418 = smul.f32 %s2415, %s2417
    %s2419 = sadd.f32 %s2418, 1e-05
    %v2420 = vstv %s2419
    %v2421 = vrsqrt.pop %v2420
    %s2422 = vtos %v2421
    %v2423 = vstv %s2422
    %v2424 = vmul.f32 %v2404, %v2423
    %2425 = vst.msk [vmem:[#allocation11] sm:$0xff] %vm77, %v2424
    %v2426 = vld [vmem:[#allocation3 + $0x8] sm:$0xff]
    %v2427 = vsel %vm238, %v2426, -inf
    %2428 = vmax.xlane.f32.xlu0 %v2427
    %v2429 = vpop.xlane.xlu0 %2428
    %v2430 = vsub.f32 %v2426, %v2429
    %v2431 = vmul.f32 %v2430, 1.442695
    %v2432 = vpow.pop %v2431
    %v2433 = vsel %vm238, %v2432, 0.0
    %2434 = vadd.xlane.f32.xlu0 %v2433
    %v2435 = vpop.xlane.xlu0 %2434
    %v2436 = vrcp.pop %v2435
    %v2437 = vmul.f32 %v2432, %v2436
    %2438 = vrot.lane.b32.xlu0 %v156, 64
    %v2439 = vpop.permute.xlu0 %2438
    %v2442 = vsel %vm238, %v2437, 0
    %2444 = vmatprep.subr.mxu0 0.0
    %2445 = vmatpush1.msra.mxu0 0.0
    %2446 = vmatprep.subr.mxu0 0.0
    %2447 = vmatpush1.msra.mxu0 0.0
    %2448 = vmatprep.subr.mxu0 0.0
    %2449 = vmatpush1.msra.mxu0 0.0
    %2450 = vmatprep.subr.mxu0 0.0
    %2451 = vmatpush1.msra.mxu0 0.0
    %2452 = vmatprep.subr.mxu0 0.0
    %2453 = vmatpush1.msra.mxu0 0.0
    %2454 = vmatprep.subr.mxu0 0.0
    %2455 = vmatpush1.msra.mxu0 0.0
    %2456 = vmatprep.subr.mxu0 0.0
    %2457 = vmatpush1.msra.mxu0 0.0
    %2458 = vmatprep.subr.mxu0 0.0
    %2459 = vmatpush1.msra.mxu0 0.0
    %2460 = vmatprep.subr.mxu0 0.0
    %2461 = vmatpush1.msra.mxu0 0.0
    %2462 = vmatprep.subr.mxu0 0.0
    %2463 = vmatpush1.msra.mxu0 0.0
    %2464 = vmatprep.subr.mxu0 0.0
    %2465 = vmatpush1.msra.mxu0 0.0
    %2466 = vmatprep.subr.mxu0 0.0
    %2467 = vmatpush1.msra.mxu0 0.0
    %2468 = vmatprep.subr.mxu0 0.0
    %2469 = vmatpush1.msra.mxu0 0.0
    %2470 = vmatprep.subr.mxu0 0.0
    %2471 = vmatpush1.msra.mxu0 0.0
    %2472 = vmatprep.subr.mxu0 0.0
    %2473 = vmatpush1.msra.mxu0 0.0
    %2474 = vmatprep.subr.mxu0 0.0
    %2475 = vmatpush1.msra.mxu0 %v2439
    %2476 = vmatprep.subr.mxu0 0.0
    %2477 = vmatpush2.msra.mxu0 0.0
    %2478 = vmatprep.subr.mxu0 0.0
    %2479 = vmatpush2.msra.mxu0 0.0
    %2480 = vmatprep.subr.mxu0 0.0
    %2481 = vmatpush2.msra.mxu0 0.0
    %2482 = vmatprep.subr.mxu0 0.0
    %2483 = vmatpush2.msra.mxu0 0.0
    %2484 = vmatprep.subr.mxu0 0.0
    %2485 = vmatpush2.msra.mxu0 0.0
    %2486 = vmatprep.subr.mxu0 0.0
    %2487 = vmatpush2.msra.mxu0 0.0
    %2488 = vmatprep.subr.mxu0 0.0
    %2489 = vmatpush2.msra.mxu0 0.0
    %2490 = vmatprep.subr.mxu0 0.0
    %2491 = vmatpush2.msra.mxu0 0.0
    %2492 = vmatprep.subr.mxu0 0.0
    %2493 = vmatpush2.msra.mxu0 0.0
    %2494 = vmatprep.subr.mxu0 0.0
    %2495 = vmatpush2.msra.mxu0 0.0
    %2496 = vmatprep.subr.mxu0 0.0
    %2497 = vmatpush2.msra.mxu0 0.0
    %2498 = vmatprep.subr.mxu0 0.0
    %2499 = vmatpush2.msra.mxu0 0.0
    %2500 = vmatprep.subr.mxu0 0.0
    %2501 = vmatpush2.msra.mxu0 0.0
    %2502 = vmatprep.subr.mxu0 0.0
    %2503 = vmatpush2.msra.mxu0 0.0
    %2504 = vmatprep.subr.mxu0 0.0
    %2505 = vmatpush2.msra.mxu0 0.0
    %2506 = vmatprep.subr.mxu0 0.0
    %2507 = vmatpush2.msra.mxu0 0.0
    %2508 = vmatprep.mubr.f32.mxu0 0.0
    %2509 = vmatmul.mubr.f32.gmra.mxu0 %v2442
    %v2510 = vpop.f32.mrf.mxu0
    %v2511 = vadd.f32 0.0, %v2510
    %v2512 = vpop.f32.mrf.mxu0
    %2513 = vdwg.mxu0
    %v2514 = vld [vmem:[#allocation3 + $0x18] sm:$0xff]
    %v2515 = vsel %vm238, %v2514, -inf
    %2516 = vmax.xlane.f32.xlu0 %v2515
    %v2517 = vpop.xlane.xlu0 %2516
    %v2518 = vsub.f32 %v2514, %v2517
    %v2519 = vmul.f32 %v2518, 1.442695
    %v2520 = vpow.pop %v2519
    %v2521 = vsel %vm238, %v2520, 0.0
    %2522 = vadd.xlane.f32.xlu0 %v2521
    %v2523 = vpop.xlane.xlu0 %2522
    %v2524 = vrcp.pop %v2523
    %v2525 = vmul.f32 %v2520, %v2524
    %2526 = vrot.lane.b32.xlu0 %v156, 48
    %v2527 = vpop.permute.xlu0 %2526
    %v2530 = vsel %vm238, %v2525, 0
    %2532 = vmatprep.subr.mxu0 0.0
    %2533 = vmatpush1.msra.mxu0 0.0
    %2534 = vmatprep.subr.mxu0 0.0
    %2535 = vmatpush1.msra.mxu0 0.0
    %2536 = vmatprep.subr.mxu0 0.0
    %2537 = vmatpush1.msra.mxu0 0.0
    %2538 = vmatprep.subr.mxu0 0.0
    %2539 = vmatpush1.msra.mxu0 0.0
    %2540 = vmatprep.subr.mxu0 0.0
    %2541 = vmatpush1.msra.mxu0 0.0
    %2542 = vmatprep.subr.mxu0 0.0
    %2543 = vmatpush1.msra.mxu0 0.0
    %2544 = vmatprep.subr.mxu0 0.0
    %2545 = vmatpush1.msra.mxu0 0.0
    %2546 = vmatprep.subr.mxu0 0.0
    %2547 = vmatpush1.msra.mxu0 0.0
    %2548 = vmatprep.subr.mxu0 0.0
    %2549 = vmatpush1.msra.mxu0 0.0
    %2550 = vmatprep.subr.mxu0 0.0
    %2551 = vmatpush1.msra.mxu0 0.0
    %2552 = vmatprep.subr.mxu0 0.0
    %2553 = vmatpush1.msra.mxu0 0.0
    %2554 = vmatprep.subr.mxu0 0.0
    %2555 = vmatpush1.msra.mxu0 0.0
    %2556 = vmatprep.subr.mxu0 0.0
    %2557 = vmatpush1.msra.mxu0 0.0
    %2558 = vmatprep.subr.mxu0 0.0
    %2559 = vmatpush1.msra.mxu0 0.0
    %2560 = vmatprep.subr.mxu0 0.0
    %2561 = vmatpush1.msra.mxu0 0.0
    %2562 = vmatprep.subr.mxu0 0.0
    %2563 = vmatpush1.msra.mxu0 %v2527
    %2564 = vmatprep.subr.mxu0 0.0
    %2565 = vmatpush2.msra.mxu0 0.0
    %2566 = vmatprep.subr.mxu0 0.0
    %2567 = vmatpush2.msra.mxu0 0.0
    %2568 = vmatprep.subr.mxu0 0.0
    %2569 = vmatpush2.msra.mxu0 0.0
    %2570 = vmatprep.subr.mxu0 0.0
    %2571 = vmatpush2.msra.mxu0 0.0
    %2572 = vmatprep.subr.mxu0 0.0
    %2573 = vmatpush2.msra.mxu0 0.0
    %2574 = vmatprep.subr.mxu0 0.0
    %2575 = vmatpush2.msra.mxu0 0.0
    %2576 = vmatprep.subr.mxu0 0.0
    %2577 = vmatpush2.msra.mxu0 0.0
    %2578 = vmatprep.subr.mxu0 0.0
    %2579 = vmatpush2.msra.mxu0 0.0
    %2580 = vmatprep.subr.mxu0 0.0
    %2581 = vmatpush2.msra.mxu0 0.0
    %2582 = vmatprep.subr.mxu0 0.0
    %2583 = vmatpush2.msra.mxu0 0.0
    %2584 = vmatprep.subr.mxu0 0.0
    %2585 = vmatpush2.msra.mxu0 0.0
    %2586 = vmatprep.subr.mxu0 0.0
    %2587 = vmatpush2.msra.mxu0 0.0
    %2588 = vmatprep.subr.mxu0 0.0
    %2589 = vmatpush2.msra.mxu0 0.0
    %2590 = vmatprep.subr.mxu0 0.0
    %2591 = vmatpush2.msra.mxu0 0.0
    %2592 = vmatprep.subr.mxu0 0.0
    %2593 = vmatpush2.msra.mxu0 0.0
    %2594 = vmatprep.subr.mxu0 0.0
    %2595 = vmatpush2.msra.mxu0 0.0
    %2596 = vmatprep.mubr.f32.mxu0 0.0
    %2597 = vmatmul.mubr.f32.gmra.mxu0 %v2530
    %v2598 = vpop.f32.mrf.mxu0
    %v2599 = vadd.f32 0.0, %v2598
    %v2600 = vpop.f32.mrf.mxu0
    %2601 = vdwg.mxu0
    %v2603 = vsel %vm162, %v2599, 0
    %2605 = vmatprep.subr.mxu0 0.0
    %2606 = vmatpush1.msra.mxu0 0.0
    %2607 = vmatprep.subr.mxu0 0.0
    %2608 = vmatpush1.msra.mxu0 0.0
    %2609 = vmatprep.subr.mxu0 0.0
    %2610 = vmatpush1.msra.mxu0 0.0
    %2611 = vmatprep.subr.mxu0 0.0
    %2612 = vmatpush1.msra.mxu0 0.0
    %2613 = vmatprep.subr.mxu0 0.0
    %2614 = vmatpush1.msra.mxu0 0.0
    %2615 = vmatprep.subr.mxu0 0.0
    %2616 = vmatpush1.msra.mxu0 0.0
    %2617 = vmatprep.subr.mxu0 0.0
    %2618 = vmatpush1.msra.mxu0 0.0
    %2619 = vmatprep.subr.mxu0 0.0
    %2620 = vmatpush1.msra.mxu0 0.0
    %2621 = vmatprep.subr.mxu0 0.0
    %2622 = vmatpush1.msra.mxu0 0.0
    %2623 = vmatprep.subr.mxu0 0.0
    %2624 = vmatpush1.msra.mxu0 0.0
    %2625 = vmatprep.subr.mxu0 0.0
    %2626 = vmatpush1.msra.mxu0 0.0
    %2627 = vmatprep.subr.mxu0 0.0
    %2628 = vmatpush1.msra.mxu0 0.0
    %2629 = vmatprep.subr.mxu0 0.0
    %2630 = vmatpush1.msra.mxu0 0.0
    %2631 = vmatprep.subr.mxu0 0.0
    %2632 = vmatpush1.msra.mxu0 0.0
    %2633 = vmatprep.subr.mxu0 0.0
    %2634 = vmatpush1.msra.mxu0 %v1737
    %2635 = vmatprep.subr.mxu0 0.0
    %2636 = vmatpush1.msra.mxu0 %v1736
    %2637 = vmatprep.subr.mxu0 0.0
    %2638 = vmatpush2.msra.mxu0 0.0
    %2639 = vmatprep.subr.mxu0 0.0
    %2640 = vmatpush2.msra.mxu0 0.0
    %2641 = vmatprep.subr.mxu0 0.0
    %2642 = vmatpush2.msra.mxu0 0.0
    %2643 = vmatprep.subr.mxu0 0.0
    %2644 = vmatpush2.msra.mxu0 0.0
    %2645 = vmatprep.subr.mxu0 0.0
    %2646 = vmatpush2.msra.mxu0 0.0
    %2647 = vmatprep.subr.mxu0 0.0
    %2648 = vmatpush2.msra.mxu0 0.0
    %2649 = vmatprep.subr.mxu0 0.0
    %2650 = vmatpush2.msra.mxu0 0.0
    %2651 = vmatprep.subr.mxu0 0.0
    %2652 = vmatpush2.msra.mxu0 0.0
    %2653 = vmatprep.subr.mxu0 0.0
    %2654 = vmatpush2.msra.mxu0 0.0
    %2655 = vmatprep.subr.mxu0 0.0
    %2656 = vmatpush2.msra.mxu0 0.0
    %2657 = vmatprep.subr.mxu0 0.0
    %2658 = vmatpush2.msra.mxu0 0.0
    %2659 = vmatprep.subr.mxu0 0.0
    %2660 = vmatpush2.msra.mxu0 0.0
    %2661 = vmatprep.subr.mxu0 0.0
    %2662 = vmatpush2.msra.mxu0 0.0
    %2663 = vmatprep.subr.mxu0 0.0
    %2664 = vmatpush2.msra.mxu0 0.0
    %2665 = vmatprep.subr.mxu0 0.0
    %2666 = vmatpush2.msra.mxu0 0.0
    %2667 = vmatprep.subr.mxu0 0.0
    %2668 = vmatpush2.msra.mxu0 0.0
    %2669 = vmatprep.mubr.f32.mxu0 0.0
    %2670 = vmatmul.mubr.f32.gmra.mxu0 %v2603
    %v2671 = vpop.f32.mrf.mxu0
    %v2672 = vadd.f32 0.0, %v2671
    %v2673 = vpop.f32.mrf.mxu0
    %2674 = vdwg.mxu0
    %v2676 = vsel %vm162, %v2511, 0
    %2678 = vmatprep.subr.mxu0 0.0
    %2679 = vmatpush1.msra.mxu0 0.0
    %2680 = vmatprep.subr.mxu0 0.0
    %2681 = vmatpush1.msra.mxu0 0.0
    %2682 = vmatprep.subr.mxu0 0.0
    %2683 = vmatpush1.msra.mxu0 0.0
    %2684 = vmatprep.subr.mxu0 0.0
    %2685 = vmatpush1.msra.mxu0 0.0
    %2686 = vmatprep.subr.mxu0 0.0
    %2687 = vmatpush1.msra.mxu0 0.0
    %2688 = vmatprep.subr.mxu0 0.0
    %2689 = vmatpush1.msra.mxu0 0.0
    %2690 = vmatprep.subr.mxu0 0.0
    %2691 = vmatpush1.msra.mxu0 0.0
    %2692 = vmatprep.subr.mxu0 0.0
    %2693 = vmatpush1.msra.mxu0 0.0
    %2694 = vmatprep.subr.mxu0 0.0
    %2695 = vmatpush1.msra.mxu0 0.0
    %2696 = vmatprep.subr.mxu0 0.0
    %2697 = vmatpush1.msra.mxu0 0.0
    %2698 = vmatprep.subr.mxu0 0.0
    %2699 = vmatpush1.msra.mxu0 0.0
    %2700 = vmatprep.subr.mxu0 0.0
    %2701 = vmatpush1.msra.mxu0 0.0
    %2702 = vmatprep.subr.mxu0 0.0
    %2703 = vmatpush1.msra.mxu0 0.0
    %2704 = vmatprep.subr.mxu0 0.0
    %2705 = vmatpush1.msra.mxu0 0.0
    %2706 = vmatprep.subr.mxu0 0.0
    %2707 = vmatpush1.msra.mxu0 %v1735
    %2708 = vmatprep.subr.mxu0 0.0
    %2709 = vmatpush1.msra.mxu0 %v1734
    %2710 = vmatprep.subr.mxu0 0.0
    %2711 = vmatpush2.msra.mxu0 0.0
    %2712 = vmatprep.subr.mxu0 0.0
    %2713 = vmatpush2.msra.mxu0 0.0
    %2714 = vmatprep.subr.mxu0 0.0
    %2715 = vmatpush2.msra.mxu0 0.0
    %2716 = vmatprep.subr.mxu0 0.0
    %2717 = vmatpush2.msra.mxu0 0.0
    %2718 = vmatprep.subr.mxu0 0.0
    %2719 = vmatpush2.msra.mxu0 0.0
    %2720 = vmatprep.subr.mxu0 0.0
    %2721 = vmatpush2.msra.mxu0 0.0
    %2722 = vmatprep.subr.mxu0 0.0
    %2723 = vmatpush2.msra.mxu0 0.0
    %2724 = vmatprep.subr.mxu0 0.0
    %2725 = vmatpush2.msra.mxu0 0.0
    %2726 = vmatprep.subr.mxu0 0.0
    %2727 = vmatpush2.msra.mxu0 0.0
    %2728 = vmatprep.subr.mxu0 0.0
    %2729 = vmatpush2.msra.mxu0 0.0
    %2730 = vmatprep.subr.mxu0 0.0
    %2731 = vmatpush2.msra.mxu0 0.0
    %2732 = vmatprep.subr.mxu0 0.0
    %2733 = vmatpush2.msra.mxu0 0.0
    %2734 = vmatprep.subr.mxu0 0.0
    %2735 = vmatpush2.msra.mxu0 0.0
    %2736 = vmatprep.subr.mxu0 0.0
    %2737 = vmatpush2.msra.mxu0 0.0
    %2738 = vmatprep.subr.mxu0 0.0
    %2739 = vmatpush2.msra.mxu0 0.0
    %2740 = vmatprep.subr.mxu0 0.0
    %2741 = vmatpush2.msra.mxu0 0.0
    %2742 = vmatprep.mubr.f32.mxu0 0.0
    %2743 = vmatmul.mubr.f32.gmra.mxu0 %v2676
    %v2744 = vpop.f32.mrf.mxu0
    %v2745 = vadd.f32 %v2672, %v2744
    %v2746 = vpop.f32.mrf.mxu0
    %2747 = vdwg.mxu0
    %v2748 = vld [vmem:[#allocation3 + $0x28] sm:$0xff]
    %v2749 = vsel %vm238, %v2748, -inf
    %2750 = vmax.xlane.f32.xlu0 %v2749
    %v2751 = vpop.xlane.xlu0 %2750
    %v2752 = vsub.f32 %v2748, %v2751
    %v2753 = vmul.f32 %v2752, 1.442695
    %v2754 = vpow.pop %v2753
    %v2755 = vsel %vm238, %v2754, 0.0
    %2756 = vadd.xlane.f32.xlu0 %v2755
    %v2757 = vpop.xlane.xlu0 %2756
    %v2758 = vrcp.pop %v2757
    %v2759 = vmul.f32 %v2754, %v2758
    %2760 = vrot.lane.b32.xlu0 %v156, 32
    %v2761 = vpop.permute.xlu0 %2760
    %v2764 = vsel %vm238, %v2759, 0
    %2766 = vmatprep.subr.mxu0 0.0
    %2767 = vmatpush1.msra.mxu0 0.0
    %2768 = vmatprep.subr.mxu0 0.0
    %2769 = vmatpush1.msra.mxu0 0.0
    %2770 = vmatprep.subr.mxu0 0.0
    %2771 = vmatpush1.msra.mxu0 0.0
    %2772 = vmatprep.subr.mxu0 0.0
    %2773 = vmatpush1.msra.mxu0 0.0
    %2774 = vmatprep.subr.mxu0 0.0
    %2775 = vmatpush1.msra.mxu0 0.0
    %2776 = vmatprep.subr.mxu0 0.0
    %2777 = vmatpush1.msra.mxu0 0.0
    %2778 = vmatprep.subr.mxu0 0.0
    %2779 = vmatpush1.msra.mxu0 0.0
    %2780 = vmatprep.subr.mxu0 0.0
    %2781 = vmatpush1.msra.mxu0 0.0
    %2782 = vmatprep.subr.mxu0 0.0
    %2783 = vmatpush1.msra.mxu0 0.0
    %2784 = vmatprep.subr.mxu0 0.0
    %2785 = vmatpush1.msra.mxu0 0.0
    %2786 = vmatprep.subr.mxu0 0.0
    %2787 = vmatpush1.msra.mxu0 0.0
    %2788 = vmatprep.subr.mxu0 0.0
    %2789 = vmatpush1.msra.mxu0 0.0
    %2790 = vmatprep.subr.mxu0 0.0
    %2791 = vmatpush1.msra.mxu0 0.0
    %2792 = vmatprep.subr.mxu0 0.0
    %2793 = vmatpush1.msra.mxu0 0.0
    %2794 = vmatprep.subr.mxu0 0.0
    %2795 = vmatpush1.msra.mxu0 0.0
    %2796 = vmatprep.subr.mxu0 0.0
    %2797 = vmatpush1.msra.mxu0 %v2761
    %2798 = vmatprep.subr.mxu0 0.0
    %2799 = vmatpush2.msra.mxu0 0.0
    %2800 = vmatprep.subr.mxu0 0.0
    %2801 = vmatpush2.msra.mxu0 0.0
    %2802 = vmatprep.subr.mxu0 0.0
    %2803 = vmatpush2.msra.mxu0 0.0
    %2804 = vmatprep.subr.mxu0 0.0
    %2805 = vmatpush2.msra.mxu0 0.0
    %2806 = vmatprep.subr.mxu0 0.0
    %2807 = vmatpush2.msra.mxu0 0.0
    %2808 = vmatprep.subr.mxu0 0.0
    %2809 = vmatpush2.msra.mxu0 0.0
    %2810 = vmatprep.subr.mxu0 0.0
    %2811 = vmatpush2.msra.mxu0 0.0
    %2812 = vmatprep.subr.mxu0 0.0
    %2813 = vmatpush2.msra.mxu0 0.0
    %2814 = vmatprep.subr.mxu0 0.0
    %2815 = vmatpush2.msra.mxu0 0.0
    %2816 = vmatprep.subr.mxu0 0.0
    %2817 = vmatpush2.msra.mxu0 0.0
    %2818 = vmatprep.subr.mxu0 0.0
    %2819 = vmatpush2.msra.mxu0 0.0
    %2820 = vmatprep.subr.mxu0 0.0
    %2821 = vmatpush2.msra.mxu0 0.0
    %2822 = vmatprep.subr.mxu0 0.0
    %2823 = vmatpush2.msra.mxu0 0.0
    %2824 = vmatprep.subr.mxu0 0.0
    %2825 = vmatpush2.msra.mxu0 0.0
    %2826 = vmatprep.subr.mxu0 0.0
    %2827 = vmatpush2.msra.mxu0 0.0
    %2828 = vmatprep.subr.mxu0 0.0
    %2829 = vmatpush2.msra.mxu0 0.0
    %2830 = vmatprep.mubr.f32.mxu0 0.0
    %2831 = vmatmul.mubr.f32.gmra.mxu0 %v2764
    %v2832 = vpop.f32.mrf.mxu0
    %v2833 = vadd.f32 0.0, %v2832
    %v2834 = vpop.f32.mrf.mxu0
    %2835 = vdwg.mxu0
    %v2837 = vsel %vm162, %v2833, 0
    %2839 = vmatprep.subr.mxu0 0.0
    %2840 = vmatpush1.msra.mxu0 0.0
    %2841 = vmatprep.subr.mxu0 0.0
    %2842 = vmatpush1.msra.mxu0 0.0
    %2843 = vmatprep.subr.mxu0 0.0
    %2844 = vmatpush1.msra.mxu0 0.0
    %2845 = vmatprep.subr.mxu0 0.0
    %2846 = vmatpush1.msra.mxu0 0.0
    %2847 = vmatprep.subr.mxu0 0.0
    %2848 = vmatpush1.msra.mxu0 0.0
    %2849 = vmatprep.subr.mxu0 0.0
    %2850 = vmatpush1.msra.mxu0 0.0
    %2851 = vmatprep.subr.mxu0 0.0
    %2852 = vmatpush1.msra.mxu0 0.0
    %2853 = vmatprep.subr.mxu0 0.0
    %2854 = vmatpush1.msra.mxu0 0.0
    %2855 = vmatprep.subr.mxu0 0.0
    %2856 = vmatpush1.msra.mxu0 0.0
    %2857 = vmatprep.subr.mxu0 0.0
    %2858 = vmatpush1.msra.mxu0 0.0
    %2859 = vmatprep.subr.mxu0 0.0
    %2860 = vmatpush1.msra.mxu0 0.0
    %2861 = vmatprep.subr.mxu0 0.0
    %2862 = vmatpush1.msra.mxu0 0.0
    %2863 = vmatprep.subr.mxu0 0.0
    %2864 = vmatpush1.msra.mxu0 0.0
    %2865 = vmatprep.subr.mxu0 0.0
    %2866 = vmatpush1.msra.mxu0 0.0
    %2867 = vmatprep.subr.mxu0 0.0
    %2868 = vmatpush1.msra.mxu0 %v1739
    %2869 = vmatprep.subr.mxu0 0.0
    %2870 = vmatpush1.msra.mxu0 %v1738
    %2871 = vmatprep.subr.mxu0 0.0
    %2872 = vmatpush2.msra.mxu0 0.0
    %2873 = vmatprep.subr.mxu0 0.0
    %2874 = vmatpush2.msra.mxu0 0.0
    %2875 = vmatprep.subr.mxu0 0.0
    %2876 = vmatpush2.msra.mxu0 0.0
    %2877 = vmatprep.subr.mxu0 0.0
    %2878 = vmatpush2.msra.mxu0 0.0
    %2879 = vmatprep.subr.mxu0 0.0
    %2880 = vmatpush2.msra.mxu0 0.0
    %2881 = vmatprep.subr.mxu0 0.0
    %2882 = vmatpush2.msra.mxu0 0.0
    %2883 = vmatprep.subr.mxu0 0.0
    %2884 = vmatpush2.msra.mxu0 0.0
    %2885 = vmatprep.subr.mxu0 0.0
    %2886 = vmatpush2.msra.mxu0 0.0
    %2887 = vmatprep.subr.mxu0 0.0
    %2888 = vmatpush2.msra.mxu0 0.0
    %2889 = vmatprep.subr.mxu0 0.0
    %2890 = vmatpush2.msra.mxu0 0.0
    %2891 = vmatprep.subr.mxu0 0.0
    %2892 = vmatpush2.msra.mxu0 0.0
    %2893 = vmatprep.subr.mxu0 0.0
    %2894 = vmatpush2.msra.mxu0 0.0
    %2895 = vmatprep.subr.mxu0 0.0
    %2896 = vmatpush2.msra.mxu0 0.0
    %2897 = vmatprep.subr.mxu0 0.0
    %2898 = vmatpush2.msra.mxu0 0.0
    %2899 = vmatprep.subr.mxu0 0.0
    %2900 = vmatpush2.msra.mxu0 0.0
    %2901 = vmatprep.subr.mxu0 0.0
    %2902 = vmatpush2.msra.mxu0 0.0
    %2903 = vmatprep.mubr.f32.mxu0 0.0
    %2904 = vmatmul.mubr.f32.gmra.mxu0 %v2837
    %v2905 = vpop.f32.mrf.mxu0
    %v2906 = vadd.f32 0.0, %v2905
    %v2907 = vpop.f32.mrf.mxu0
    %2908 = vdwg.mxu0
    %v2909 = vadd.f32 %v2745, %v2906
    %v2910 = vld [vmem:[#allocation3 + $0x38] sm:$0xff]
    %v2911 = vsel %vm238, %v2910, -inf
    %2912 = vmax.xlane.f32.xlu0 %v2911
    %v2913 = vpop.xlane.xlu0 %2912
    %v2914 = vsub.f32 %v2910, %v2913
    %v2915 = vmul.f32 %v2914, 1.442695
    %v2916 = vpow.pop %v2915
    %v2917 = vsel %vm238, %v2916, 0.0
    %2918 = vadd.xlane.f32.xlu0 %v2917
    %v2919 = vpop.xlane.xlu0 %2918
    %v2920 = vrcp.pop %v2919
    %v2921 = vmul.f32 %v2916, %v2920
    %2922 = vrot.lane.b32.xlu0 %v156, 16
    %v2923 = vpop.permute.xlu0 %2922
    %v2926 = vsel %vm238, %v2921, 0
    %2928 = vmatprep.subr.mxu0 0.0
    %2929 = vmatpush1.msra.mxu0 0.0
    %2930 = vmatprep.subr.mxu0 0.0
    %2931 = vmatpush1.msra.mxu0 0.0
    %2932 = vmatprep.subr.mxu0 0.0
    %2933 = vmatpush1.msra.mxu0 0.0
    %2934 = vmatprep.subr.mxu0 0.0
    %2935 = vmatpush1.msra.mxu0 0.0
    %2936 = vmatprep.subr.mxu0 0.0
    %2937 = vmatpush1.msra.mxu0 0.0
    %2938 = vmatprep.subr.mxu0 0.0
    %2939 = vmatpush1.msra.mxu0 0.0
    %2940 = vmatprep.subr.mxu0 0.0
    %2941 = vmatpush1.msra.mxu0 0.0
    %2942 = vmatprep.subr.mxu0 0.0
    %2943 = vmatpush1.msra.mxu0 0.0
    %2944 = vmatprep.subr.mxu0 0.0
    %2945 = vmatpush1.msra.mxu0 0.0
    %2946 = vmatprep.subr.mxu0 0.0
    %2947 = vmatpush1.msra.mxu0 0.0
    %2948 = vmatprep.subr.mxu0 0.0
    %2949 = vmatpush1.msra.mxu0 0.0
    %2950 = vmatprep.subr.mxu0 0.0
    %2951 = vmatpush1.msra.mxu0 0.0
    %2952 = vmatprep.subr.mxu0 0.0
    %2953 = vmatpush1.msra.mxu0 0.0
    %2954 = vmatprep.subr.mxu0 0.0
    %2955 = vmatpush1.msra.mxu0 0.0
    %2956 = vmatprep.subr.mxu0 0.0
    %2957 = vmatpush1.msra.mxu0 0.0
    %2958 = vmatprep.subr.mxu0 0.0
    %2959 = vmatpush1.msra.mxu0 %v2923
    %2960 = vmatprep.subr.mxu0 0.0
    %2961 = vmatpush2.msra.mxu0 0.0
    %2962 = vmatprep.subr.mxu0 0.0
    %2963 = vmatpush2.msra.mxu0 0.0
    %2964 = vmatprep.subr.mxu0 0.0
    %2965 = vmatpush2.msra.mxu0 0.0
    %2966 = vmatprep.subr.mxu0 0.0
    %2967 = vmatpush2.msra.mxu0 0.0
    %2968 = vmatprep.subr.mxu0 0.0
    %2969 = vmatpush2.msra.mxu0 0.0
    %2970 = vmatprep.subr.mxu0 0.0
    %2971 = vmatpush2.msra.mxu0 0.0
    %2972 = vmatprep.subr.mxu0 0.0
    %2973 = vmatpush2.msra.mxu0 0.0
    %2974 = vmatprep.subr.mxu0 0.0
    %2975 = vmatpush2.msra.mxu0 0.0
    %2976 = vmatprep.subr.mxu0 0.0
    %2977 = vmatpush2.msra.mxu0 0.0
    %2978 = vmatprep.subr.mxu0 0.0
    %2979 = vmatpush2.msra.mxu0 0.0
    %2980 = vmatprep.subr.mxu0 0.0
    %2981 = vmatpush2.msra.mxu0 0.0
    %2982 = vmatprep.subr.mxu0 0.0
    %2983 = vmatpush2.msra.mxu0 0.0
    %2984 = vmatprep.subr.mxu0 0.0
    %2985 = vmatpush2.msra.mxu0 0.0
    %2986 = vmatprep.subr.mxu0 0.0
    %2987 = vmatpush2.msra.mxu0 0.0
    %2988 = vmatprep.subr.mxu0 0.0
    %2989 = vmatpush2.msra.mxu0 0.0
    %2990 = vmatprep.subr.mxu0 0.0
    %2991 = vmatpush2.msra.mxu0 0.0
    %2992 = vmatprep.mubr.f32.mxu0 0.0
    %2993 = vmatmul.mubr.f32.gmra.mxu0 %v2926
    %v2994 = vpop.f32.mrf.mxu0
    %v2995 = vadd.f32 0.0, %v2994
    %v2996 = vpop.f32.mrf.mxu0
    %2997 = vdwg.mxu0
    %v2999 = vsel %vm162, %v2995, 0
    %3001 = vmatprep.subr.mxu0 0.0
    %3002 = vmatpush1.msra.mxu0 0.0
    %3003 = vmatprep.subr.mxu0 0.0
    %3004 = vmatpush1.msra.mxu0 0.0
    %3005 = vmatprep.subr.mxu0 0.0
    %3006 = vmatpush1.msra.mxu0 0.0
    %3007 = vmatprep.subr.mxu0 0.0
    %3008 = vmatpush1.msra.mxu0 0.0
    %3009 = vmatprep.subr.mxu0 0.0
    %3010 = vmatpush1.msra.mxu0 0.0
    %3011 = vmatprep.subr.mxu0 0.0
    %3012 = vmatpush1.msra.mxu0 0.0
    %3013 = vmatprep.subr.mxu0 0.0
    %3014 = vmatpush1.msra.mxu0 0.0
    %3015 = vmatprep.subr.mxu0 0.0
    %3016 = vmatpush1.msra.mxu0 0.0
    %3017 = vmatprep.subr.mxu0 0.0
    %3018 = vmatpush1.msra.mxu0 0.0
    %3019 = vmatprep.subr.mxu0 0.0
    %3020 = vmatpush1.msra.mxu0 0.0
    %3021 = vmatprep.subr.mxu0 0.0
    %3022 = vmatpush1.msra.mxu0 0.0
    %3023 = vmatprep.subr.mxu0 0.0
    %3024 = vmatpush1.msra.mxu0 0.0
    %3025 = vmatprep.subr.mxu0 0.0
    %3026 = vmatpush1.msra.mxu0 0.0
    %3027 = vmatprep.subr.mxu0 0.0
    %3028 = vmatpush1.msra.mxu0 0.0
    %3029 = vmatprep.subr.mxu0 0.0
    %3030 = vmatpush1.msra.mxu0 %v1741
    %3031 = vmatprep.subr.mxu0 0.0
    %3032 = vmatpush1.msra.mxu0 %v1740
    %3033 = vmatprep.subr.mxu0 0.0
    %3034 = vmatpush2.msra.mxu0 0.0
    %3035 = vmatprep.subr.mxu0 0.0
    %3036 = vmatpush2.msra.mxu0 0.0
    %3037 = vmatprep.subr.mxu0 0.0
    %3038 = vmatpush2.msra.mxu0 0.0
    %3039 = vmatprep.subr.mxu0 0.0
    %3040 = vmatpush2.msra.mxu0 0.0
    %3041 = vmatprep.subr.mxu0 0.0
    %3042 = vmatpush2.msra.mxu0 0.0
    %3043 = vmatprep.subr.mxu0 0.0
    %3044 = vmatpush2.msra.mxu0 0.0
    %3045 = vmatprep.subr.mxu0 0.0
    %3046 = vmatpush2.msra.mxu0 0.0
    %3047 = vmatprep.subr.mxu0 0.0
    %3048 = vmatpush2.msra.mxu0 0.0
    %3049 = vmatprep.subr.mxu0 0.0
    %3050 = vmatpush2.msra.mxu0 0.0
    %3051 = vmatprep.subr.mxu0 0.0
    %3052 = vmatpush2.msra.mxu0 0.0
    %3053 = vmatprep.subr.mxu0 0.0
    %3054 = vmatpush2.msra.mxu0 0.0
    %3055 = vmatprep.subr.mxu0 0.0
    %3056 = vmatpush2.msra.mxu0 0.0
    %3057 = vmatprep.subr.mxu0 0.0
    %3058 = vmatpush2.msra.mxu0 0.0
    %3059 = vmatprep.subr.mxu0 0.0
    %3060 = vmatpush2.msra.mxu0 0.0
    %3061 = vmatprep.subr.mxu0 0.0
    %3062 = vmatpush2.msra.mxu0 0.0
    %3063 = vmatprep.subr.mxu0 0.0
    %3064 = vmatpush2.msra.mxu0 0.0
    %3065 = vmatprep.mubr.f32.mxu0 0.0
    %3066 = vmatmul.mubr.f32.gmra.mxu0 %v2999
    %v3067 = vpop.f32.mrf.mxu0
    %v3068 = vadd.f32 0.0, %v3067
    %v3069 = vpop.f32.mrf.mxu0
    %3070 = vdwg.mxu0
    %v3071 = vadd.f32 %v2909, %v3068
    %v3072 = vld [vmem:[%s0 + $0x8] sm:$0xff]
    %v3073 = vadd.f32 %v3071, %v3072
    %v3074 = vsel %vm77, %v3073, 0.0
    %3075 = vadd.xlane.f32.xlu0 %v3074
    %v3076 = vpop.xlane.xlu0 %3075
    %v3077 = vrot.slane %v3076, 4
    %v3078 = vadd.f32 %v3076, %v3077
    %v3079 = vrot.slane %v3078, 2
    %v3080 = vadd.f32 %v3078, %v3079
    %v3081 = vrot.slane %v3080, 1
    %v3082 = vadd.f32 %v3080, %v3081
    %s3083 = vtos %v3082
    %v3084 = vrcp.pop 256.0
    %s3085 = vtos %v3084
    %s3086 = smul.f32 %s3083, %s3085
    %v3087 = vstv %s3086
    %v3088 = vsub.f32 %v3073, %v3087
    %v3089 = vmul.f32 %v3088, %v3088
    %v3090 = vsel %vm77, %v3089, 0.0
    %3091 = vadd.xlane.f32.xlu0 %v3090
    %v3092 = vpop.xlane.xlu0 %3091
    %v3093 = vrot.slane %v3092, 4
    %v3094 = vadd.f32 %v3092, %v3093
    %v3095 = vrot.slane %v3094, 2
    %v3096 = vadd.f32 %v3094, %v3095
    %v3097 = vrot.slane %v3096, 1
    %v3098 = vadd.f32 %v3096, %v3097
    %s3099 = vtos %v3098
    %v3100 = vrcp.pop 255.0
    %s3101 = vtos %v3100
    %s3102 = smul.f32 %s3099, %s3101
    %s3103 = sadd.f32 %s3102, 1e-05
    %v3104 = vstv %s3103
    %v3105 = vrsqrt.pop %v3104
    %s3106 = vtos %v3105
    %v3107 = vstv %s3106
    %v3108 = vmul.f32 %v3088, %v3107
    %s3109 = scalar_lea.vmem [#allocation11], 8
    %3110 = vst.msk [vmem:[%s3109] sm:$0xff] %vm77, %v3108
    // Predicated region
    $region65: #{mha_lstm_sublayer_forward.1} parent=1 // pred_check
      _
    $region66: #{mha_lstm_sublayer_forward.1} parent=1 // pred_check_branch
      %3112 = sbr.rel (0) target = $region68
    $region67: #{mha_lstm_sublayer_forward.1} parent=1 // pred_region
      %s3114 = ssub.s32 256, 256
      %3115 = vsyncadd [#allocation7], %s3114
      %s3116 = sshll.u32 [#allocation11], 4
      %s3117 = int_to_ptr.vmem [resolvable:$true] %s3116
      %3122 = dma.vmem_to_hbm [thread:$0]  %s3117, 256, %s12, [#allocation7], 128, 128, 8
    $region68: #{mha_lstm_sublayer_forward.1} parent=1 // pred_fallthru
      _
    // Predicated region
    $region69: #{mha_lstm_sublayer_forward.1} parent=1 // pred_check
      _
    $region70: #{mha_lstm_sublayer_forward.1} parent=1 // pred_check_branch
      %3124 = sbr.rel (0) target = $region72
    $region71: #{mha_lstm_sublayer_forward.1} parent=1 // pred_region
      %s3126 = ssub.s32 32, 32
      %3127 = vsyncadd [#allocation13], %s3126
      %s3129 = sshll.u32 [#allocation12], 4
      %s3130 = int_to_ptr.vmem [resolvable:$true] %s3129
      %3132 = dma.vmem_to_hbm [thread:$0]  %s3130, 32, %s13, [#allocation13]
    $region72: #{mha_lstm_sublayer_forward.1} parent=1 // pred_fallthru
      _
    // Predicated region
    $region73: #{mha_lstm_sublayer_forward.1} parent=1 // pred_check
      _
    $region74: #{mha_lstm_sublayer_forward.1} parent=1 // pred_check_branch
      %3134 = sbr.rel (0) target = $region76
    $region75: #{mha_lstm_sublayer_forward.1} parent=1 // pred_region
      %s3136 = ssub.s32 32, 32
      %3137 = vsyncadd [#allocation13], %s3136
      %s3139 = sshll.u32 [#allocation14], 4
      %s3140 = int_to_ptr.vmem [resolvable:$true] %s3139
      %3142 = dma.vmem_to_hbm [thread:$0]  %s3140, 32, %s14, [#allocation13]
    $region76: #{mha_lstm_sublayer_forward.1} parent=1 // pred_fallthru
      _
    // Predicated region
    $region77: #{mha_lstm_sublayer_forward.1} parent=1 // pred_check
      _
    $region78: #{mha_lstm_sublayer_forward.1} parent=1 // pred_check_branch
      %3144 = sbr.rel (0) target = $region80
    $region79: #{mha_lstm_sublayer_forward.1} parent=1 // pred_region
      %3145 = dma.done [#allocation7], 256
    $region80: #{mha_lstm_sublayer_forward.1} parent=1 // pred_fallthru
      _
    // Predicated region
    $region81: #{mha_lstm_sublayer_forward.1} parent=1 // pred_check
      _
    $region82: #{mha_lstm_sublayer_forward.1} parent=1 // pred_check_branch
      %3147 = sbr.rel (0) target = $region84
    $region83: #{mha_lstm_sublayer_forward.1} parent=1 // pred_region
      %3148 = dma.done [#allocation13], 32
    $region84: #{mha_lstm_sublayer_forward.1} parent=1 // pred_fallthru
      _
    // Predicated region
    $region85: #{mha_lstm_sublayer_forward.1} parent=1 // pred_check
      _
    $region86: #{mha_lstm_sublayer_forward.1} parent=1 // pred_check_branch
      %3150 = sbr.rel (0) target = $region88
    $region87: #{mha_lstm_sublayer_forward.1} parent=1 // pred_region
      %3151 = dma.done [#allocation13], 32
    $region88: #{mha_lstm_sublayer_forward.1} parent=1 // pred_fallthru
      _
    %3152 = vsyncpa [#allocation7], 1
    %3153 = vsyncpa [#allocation13], 1
    %3154 = vsyncpa [#allocation8], 1
    %3155 = vsyncpa [#allocation10], 1

</llo_original>
